<compile_context>
chip_gen: v7x
topology: tpu7x:2x2x1
jax: 0.10.0
libtpu: 0.0.40
codegen_flags: <defaults>
</compile_context>

<pallas_src>
import jax
import jax.numpy as jnp
from jax import lax
from jax.experimental import pallas as pl
from jax.experimental.pallas import tpu as pltpu


def basic_block_kernel(xp_ref, w1_ref, b1_ref, w2_ref, b2_ref, out_ref):
    # xp_ref : (1, H+4, W+2, Cp) bf16  whole padded image, resident across row tiles
    # w*_ref : (9*Cp, Cp)        bf16  BN scale folded in; K index = (kh*3+kw)*Cp + cin
    # b*_ref : (1, Cp)           f32
    # out_ref: (1, TH, W, Cp)    f32
    _, TH, W, Cp = out_ref.shape
    THp2 = TH + 2

    rt = pl.program_id(1)
    r0 = pl.multiple_of(rt * TH, TH)                 # first padded-input row of the tile

    # One window load per step (covers conv1's 1-row halo on each side), already bf16.
    win = xp_ref[0, pl.ds(r0, TH + 4)]               # (TH+4, W+2, Cp) bf16

    def conv3x3(window, w_ref, n_rows):
        # window: (n_rows+2, W+2, Cp) bf16 value; fused K = 9*Cp single MXU matmul.
        taps = [window[dy:dy + n_rows, dx:dx + W, :]
                for dy in range(3) for dx in range(3)]
        k = jnp.concatenate(taps, axis=-1)           # (n_rows, W, 9*Cp) bf16
        return jnp.dot(k.reshape(n_rows * W, 9 * Cp), w_ref[...],
                       preferred_element_type=jnp.float32)

    # ---- conv1 (+folded BN) + ReLU over TH+2 intermediate rows (1-row halo) ----
    acc1 = conv3x3(win, w1_ref, THp2)                # (THp2*W, Cp) f32
    mid = jnp.maximum(acc1 + b1_ref[...], 0.0).reshape(THp2, W, Cp)

    # Image-border halo rows are conv2's zero padding: zero them with a masked select
    # (no scratch stores), then cast the intermediate once to bf16 for conv2.
    row_ids = lax.broadcasted_iota(jnp.int32, (THp2, 1, 1), 0)
    keep = jnp.logical_and(
        jnp.logical_or(rt > 0, row_ids > 0),
        jnp.logical_or(rt < pl.num_programs(1) - 1, row_ids < THp2 - 1))
    mid = jnp.where(keep, mid, 0.0).astype(jnp.bfloat16)

    # conv2's W zero-padding built in-register (aligned; no +1-column scratch store).
    zcol = jnp.zeros((THp2, 1, Cp), jnp.bfloat16)
    midp = jnp.concatenate([zcol, mid, zcol], axis=1)    # (THp2, W+2, Cp) bf16

    # ---- conv2 (+folded BN) ----
    acc2 = conv3x3(midp, w2_ref, TH) + b2_ref[...]       # (TH*W, Cp) f32

    # ---- residual add (bf16 input rows upcast to f32; small precision loss, within
    # the bf16-MXU tolerance) + ReLU ----
    res = win[2:2 + TH, 1:W + 1, :].astype(jnp.float32).reshape(TH * W, Cp)
    out_ref[0] = jnp.maximum(acc2 + res, 0.0).reshape(TH, W, Cp)


def _largest_divisor_leq(n, cap):
    cap = max(1, min(cap, n))
    for d in range(cap, 0, -1):
        if n % d == 0:
            return d
    return n


def basic_block_forward(x_nchw, w1, g1, be1, m1, v1, w2, g2, be2, m2, v2,
                        eps=1e-5, row_tile=32):
    """BasicBlock forward, stride=1, downsample=None (identity residual)."""
    x = jnp.transpose(x_nchw, (0, 2, 3, 1)).astype(jnp.float32)     # NHWC
    N, H, W, C = x.shape
    assert w1.shape[0] == C and w1.shape[1] == C, (
        "identity residual requires inplanes == planes")

    Cp = ((C + 127) // 128) * 128                                   # lane-dense channels
    # Row tile: largest divisor of H <= target, target sized so M = TH*W >= ~512.
    target = max(row_tile, -(-512 // W))
    TH = _largest_divisor_leq(H, target)
    RT = H // TH

    # Pad channels to Cp; H by 2 rows each side (1 conv pad + 1 halo-recompute row),
    # W by 1 column each side (conv pad). Stored bf16 (resident image, MXU operand).
    xpad = jnp.pad(x, ((0, 0), (2, 2), (1, 1), (0, Cp - C))).astype(jnp.bfloat16)

    def fold(w, g, b, m, v):
        # Fold BN (inference) scale into the conv weights; keep only a bias.
        # NOTE: fold happens before the bf16 cast; large gamma/sqrt(var) ratios would
        # grow the bf16 rounding error (acceptable at 5e-2 tolerance).
        inv = g / jnp.sqrt(v + eps)
        w = w * inv[:, None, None, None]                            # OIHW, scale on O
        bias = b - m * inv
        wt = jnp.transpose(w, (2, 3, 1, 0))                         # (kh, kw, Cin, Cout)
        wt = jnp.pad(wt, ((0, 0), (0, 0), (0, Cp - C), (0, Cp - C)))
        wt = wt.reshape(9 * Cp, Cp).astype(jnp.bfloat16)            # K = (kh*3+kw)*Cp+cin
        bias = jnp.pad(bias, (0, Cp - C)).reshape(1, Cp).astype(jnp.float32)
        return wt, bias

    w1_t, b1 = fold(w1, g1, be1, m1, v1)
    w2_t, b2 = fold(w2, g2, be2, m2, v2)

    out_nhwc = pl.pallas_call(
        basic_block_kernel,
        out_shape=jax.ShapeDtypeStruct((N, H, W, Cp), jnp.float32),
        grid_spec=pltpu.PrefetchScalarGridSpec(
            num_scalar_prefetch=0,
            grid=(N, RT),
            in_specs=[
                # whole padded image; block index constant along rt -> DMA'd once per n
                pl.BlockSpec((1, H + 4, W + 2, Cp), lambda n, r: (n, 0, 0, 0)),
                pl.BlockSpec((9 * Cp, Cp), lambda n, r: (0, 0)),
                pl.BlockSpec((1, Cp), lambda n, r: (0, 0)),
                pl.BlockSpec((9 * Cp, Cp), lambda n, r: (0, 0)),
                pl.BlockSpec((1, Cp), lambda n, r: (0, 0)),
            ],
            out_specs=pl.BlockSpec((1, TH, W, Cp), lambda n, r: (n, r, 0, 0)),
        ),
        compiler_params=pltpu.CompilerParams(
            dimension_semantics=("parallel", "parallel"),
            vmem_limit_bytes=64 * 1024 * 1024),
    )(xpad, w1_t, b1, w2_t, b2)

    # drop channel padding, back to NCHW
    return jnp.transpose(out_nhwc[..., :C], (0, 3, 1, 2))


def _reference(x, w1, g1, be1, m1, v1, w2, g2, be2, m2, v2, eps=1e-5):
    def conv(h, w):
        return lax.conv_general_dilated(
            h, w, (1, 1), ((1, 1), (1, 1)),
            dimension_numbers=("NCHW", "OIHW", "NCHW"))

    def bn(h, g, b, m, v):
        g, b, m, v = (t.reshape(1, -1, 1, 1) for t in (g, b, m, v))
        return (h - m) / jnp.sqrt(v + eps) * g + b

    out = jax.nn.relu(bn(conv(x, w1), g1, be1, m1, v1))
    out = bn(conv(out, w2), g2, be2, m2, v2)
    return jax.nn.relu(out + x)


if __name__ == "__main__":
    N, C, H, W = 2, 4, 16, 16  # inplanes == planes, stride=1, downsample=None

    key = jax.random.PRNGKey(0)
    ks = jax.random.split(key, 11)
    x = jax.random.normal(ks[0], (N, C, H, W), jnp.float32)

    w1 = jax.random.normal(ks[1], (C, C, 3, 3), jnp.float32) * 0.1
    g1 = jax.random.uniform(ks[2], (C,), jnp.float32, 0.5, 1.5)
    be1 = jax.random.normal(ks[3], (C,), jnp.float32) * 0.1
    m1 = jax.random.normal(ks[4], (C,), jnp.float32) * 0.1
    v1 = jax.random.uniform(ks[5], (C,), jnp.float32, 0.5, 1.5)

    w2 = jax.random.normal(ks[6], (C, C, 3, 3), jnp.float32) * 0.1
    g2 = jax.random.uniform(ks[7], (C,), jnp.float32, 0.5, 1.5)
    be2 = jax.random.normal(ks[8], (C,), jnp.float32) * 0.1
    m2 = jax.random.normal(ks[9], (C,), jnp.float32) * 0.1
    v2 = jax.random.uniform(ks[10], (C,), jnp.float32, 0.5, 1.5)

    out = jax.jit(basic_block_forward)(x, w1, g1, be1, m1, v1,
                                       w2, g2, be2, m2, v2)
    out = jax.block_until_ready(out)

    ref = _reference(x, w1, g1, be1, m1, v1, w2, g2, be2, m2, v2)
    assert out.shape == (N, C, H, W)
    # bf16 input / weights / intermediate on the MXU -> loosened tolerance vs f32 ref.
    err = float(jnp.max(jnp.abs(out - ref)))
    assert jnp.allclose(out, ref, atol=5e-2, rtol=5e-2), err
    print("KERNEL_OK")
</pallas_src>

<mosaic_0001>
module attributes {stable_mosaic.version = 11 : i64} {
  func.func @basic_block_kernel(%arg0: i32, %arg1: i32, %arg2: memref<1x20x18x128xbf16, #tpu.memory_space<vmem>>, %arg3: memref<1152x128xbf16, #tpu.memory_space<vmem>>, %arg4: memref<1x128xf32, #tpu.memory_space<vmem>>, %arg5: memref<1152x128xbf16, #tpu.memory_space<vmem>>, %arg6: memref<1x128xf32, #tpu.memory_space<vmem>>, %arg7: memref<1x16x16x128xf32, #tpu.memory_space<vmem>>) attributes {dimension_semantics = [#tpu.dimension_semantics<parallel>, #tpu.dimension_semantics<parallel>], iteration_bounds = array<i64: 2, 1>, scalar_prefetch = 0 : i64, scratch_operands = 0 : i64, tpu.core_type = #tpu.core_type<tc>, window_params = [{transform_indices = @transform_0, window_bounds = array<i64: 1, 20, 18, 128>}, {pipeline_mode = #tpu.pipeline_mode<synchronous>, transform_indices = @transform_1, window_bounds = array<i64: 1152, 128>}, {pipeline_mode = #tpu.pipeline_mode<synchronous>, transform_indices = @transform_2, window_bounds = array<i64: 1, 128>}, {pipeline_mode = #tpu.pipeline_mode<synchronous>, transform_indices = @transform_3, window_bounds = array<i64: 1152, 128>}, {pipeline_mode = #tpu.pipeline_mode<synchronous>, transform_indices = @transform_4, window_bounds = array<i64: 1, 128>}, {transform_indices = @transform_5, window_bounds = array<i64: 1, 16, 16, 128>}]} {
    %c16_i32 = arith.constant 16 : i32
    %0 = arith.muli %arg1, %c16_i32 : i32
    %1 = tpu.assume_multiple %0, 16 : i32
    %c0 = arith.constant 0 : index
    %2 = arith.index_cast %1 : i32 to index
    %c0_0 = arith.constant 0 : index
    %c0_1 = arith.constant 0 : index
    %3 = vector.load %arg2[%c0, %2, %c0_0, %c0_1] : memref<1x20x18x128xbf16, #tpu.memory_space<vmem>>, vector<1x20x18x128xbf16>
    %4 = vector.shape_cast %3 : vector<1x20x18x128xbf16> to vector<20x18x128xbf16>
    %5 = vector.extract_strided_slice %4 {offsets = [0, 0, 0], sizes = [18, 16, 128], strides = [1, 1, 1]} : vector<20x18x128xbf16> to vector<18x16x128xbf16>
    %6 = vector.extract_strided_slice %4 {offsets = [0, 1, 0], sizes = [18, 16, 128], strides = [1, 1, 1]} : vector<20x18x128xbf16> to vector<18x16x128xbf16>
    %7 = vector.extract_strided_slice %4 {offsets = [0, 2, 0], sizes = [18, 16, 128], strides = [1, 1, 1]} : vector<20x18x128xbf16> to vector<18x16x128xbf16>
    %8 = vector.extract_strided_slice %4 {offsets = [1, 0, 0], sizes = [18, 16, 128], strides = [1, 1, 1]} : vector<20x18x128xbf16> to vector<18x16x128xbf16>
    %9 = vector.extract_strided_slice %4 {offsets = [1, 1, 0], sizes = [18, 16, 128], strides = [1, 1, 1]} : vector<20x18x128xbf16> to vector<18x16x128xbf16>
    %10 = vector.extract_strided_slice %4 {offsets = [1, 2, 0], sizes = [18, 16, 128], strides = [1, 1, 1]} : vector<20x18x128xbf16> to vector<18x16x128xbf16>
    %11 = vector.extract_strided_slice %4 {offsets = [2, 0, 0], sizes = [18, 16, 128], strides = [1, 1, 1]} : vector<20x18x128xbf16> to vector<18x16x128xbf16>
    %12 = vector.extract_strided_slice %4 {offsets = [2, 1, 0], sizes = [18, 16, 128], strides = [1, 1, 1]} : vector<20x18x128xbf16> to vector<18x16x128xbf16>
    %13 = vector.extract_strided_slice %4 {offsets = [2, 2, 0], sizes = [18, 16, 128], strides = [1, 1, 1]} : vector<20x18x128xbf16> to vector<18x16x128xbf16>
    %14 = tpu.concatenate %5, %6, %7, %8, %9, %10, %11, %12, %13 in 2 : vector<18x16x128xbf16>, vector<18x16x128xbf16>, vector<18x16x128xbf16>, vector<18x16x128xbf16>, vector<18x16x128xbf16>, vector<18x16x128xbf16>, vector<18x16x128xbf16>, vector<18x16x128xbf16>, vector<18x16x128xbf16> -> vector<18x16x1152xbf16>
    %15 = vector.shape_cast %14 : vector<18x16x1152xbf16> to vector<288x1152xbf16>
    %c0_2 = arith.constant 0 : index
    %c0_3 = arith.constant 0 : index
    %16 = vector.load %arg3[%c0_2, %c0_3] : memref<1152x128xbf16, #tpu.memory_space<vmem>>, vector<1152x128xbf16>
    %cst = arith.constant dense<0.000000e+00> : vector<288x128xf32>
    %17 = tpu.matmul %15, %16, %cst {dimension_numbers = #tpu.dot_dimension_numbers<[1], [0], [0], [1], [0, 0, 1, 1], [], []>} : vector<288x1152xbf16>, vector<1152x128xbf16>, vector<288x128xf32> -> vector<288x128xf32>
    %c0_4 = arith.constant 0 : index
    %c0_5 = arith.constant 0 : index
    %18 = vector.load %arg4[%c0_4, %c0_5] : memref<1x128xf32, #tpu.memory_space<vmem>>, vector<1x128xf32>
    %19 = vector.broadcast %18 : vector<1x128xf32> to vector<288x128xf32>
    %20 = arith.addf %17, %19 : vector<288x128xf32>
    %cst_6 = arith.constant 0.000000e+00 : f32
    %21 = vector.broadcast %cst_6 : f32 to vector<288x128xf32>
    %22 = arith.maximumf %20, %21 : vector<288x128xf32>
    %23 = vector.shape_cast %22 : vector<288x128xf32> to vector<18x16x128xf32>
    %24 = tpu.iota {dimensions = array<i32: 0>} : vector<18x1x1xi32>
    %c0_i32 = arith.constant 0 : i32
    %25 = arith.cmpi sgt, %arg1, %c0_i32 : i32
    %c0_i32_7 = arith.constant 0 : i32
    %26 = vector.broadcast %c0_i32_7 : i32 to vector<18x1x1xi32>
    %27 = arith.cmpi sgt, %24, %26 : vector<18x1x1xi32>
    %28 = vector.broadcast %25 : i1 to vector<18x1x1xi1>
    %29 = arith.ori %28, %27 : vector<18x1x1xi1>
    %c0_i32_8 = arith.constant 0 : i32
    %30 = arith.cmpi slt, %arg1, %c0_i32_8 : i32
    %c17_i32 = arith.constant 17 : i32
    %31 = vector.broadcast %c17_i32 : i32 to vector<18x1x1xi32>
    %32 = arith.cmpi slt, %24, %31 : vector<18x1x1xi32>
    %33 = vector.broadcast %30 : i1 to vector<18x1x1xi1>
    %34 = arith.ori %33, %32 : vector<18x1x1xi1>
    %35 = arith.andi %29, %34 : vector<18x1x1xi1>
    %cst_9 = arith.constant 0.000000e+00 : f32
    %36 = vector.shape_cast %35 : vector<18x1x1xi1> to vector<18x1x1xi1>
    %37 = vector.broadcast %36 : vector<18x1x1xi1> to vector<18x16x128xi1>
    %38 = vector.broadcast %cst_9 : f32 to vector<18x16x128xf32>
    %39 = arith.select %37, %23, %38 : vector<18x16x128xi1>, vector<18x16x128xf32>
    %40 = arith.truncf %39 : vector<18x16x128xf32> to vector<18x16x128xbf16>
    %cst_10 = arith.constant 0.000000e+00 : bf16
    %41 = vector.broadcast %cst_10 : bf16 to vector<18x1x128xbf16>
    %42 = tpu.concatenate %41, %40, %41 in 1 : vector<18x1x128xbf16>, vector<18x16x128xbf16>, vector<18x1x128xbf16> -> vector<18x18x128xbf16>
    %43 = vector.extract_strided_slice %42 {offsets = [0, 0, 0], sizes = [16, 16, 128], strides = [1, 1, 1]} : vector<18x18x128xbf16> to vector<16x16x128xbf16>
    %44 = vector.extract_strided_slice %42 {offsets = [0, 1, 0], sizes = [16, 16, 128], strides = [1, 1, 1]} : vector<18x18x128xbf16> to vector<16x16x128xbf16>
    %45 = vector.extract_strided_slice %42 {offsets = [0, 2, 0], sizes = [16, 16, 128], strides = [1, 1, 1]} : vector<18x18x128xbf16> to vector<16x16x128xbf16>
    %46 = vector.extract_strided_slice %42 {offsets = [1, 0, 0], sizes = [16, 16, 128], strides = [1, 1, 1]} : vector<18x18x128xbf16> to vector<16x16x128xbf16>
    %47 = vector.extract_strided_slice %42 {offsets = [1, 1, 0], sizes = [16, 16, 128], strides = [1, 1, 1]} : vector<18x18x128xbf16> to vector<16x16x128xbf16>
    %48 = vector.extract_strided_slice %42 {offsets = [1, 2, 0], sizes = [16, 16, 128], strides = [1, 1, 1]} : vector<18x18x128xbf16> to vector<16x16x128xbf16>
    %49 = vector.extract_strided_slice %42 {offsets = [2, 0, 0], sizes = [16, 16, 128], strides = [1, 1, 1]} : vector<18x18x128xbf16> to vector<16x16x128xbf16>
    %50 = vector.extract_strided_slice %42 {offsets = [2, 1, 0], sizes = [16, 16, 128], strides = [1, 1, 1]} : vector<18x18x128xbf16> to vector<16x16x128xbf16>
    %51 = vector.extract_strided_slice %42 {offsets = [2, 2, 0], sizes = [16, 16, 128], strides = [1, 1, 1]} : vector<18x18x128xbf16> to vector<16x16x128xbf16>
    %52 = tpu.concatenate %43, %44, %45, %46, %47, %48, %49, %50, %51 in 2 : vector<16x16x128xbf16>, vector<16x16x128xbf16>, vector<16x16x128xbf16>, vector<16x16x128xbf16>, vector<16x16x128xbf16>, vector<16x16x128xbf16>, vector<16x16x128xbf16>, vector<16x16x128xbf16>, vector<16x16x128xbf16> -> vector<16x16x1152xbf16>
    %53 = vector.shape_cast %52 : vector<16x16x1152xbf16> to vector<256x1152xbf16>
    %c0_11 = arith.constant 0 : index
    %c0_12 = arith.constant 0 : index
    %54 = vector.load %arg5[%c0_11, %c0_12] : memref<1152x128xbf16, #tpu.memory_space<vmem>>, vector<1152x128xbf16>
    %cst_13 = arith.constant dense<0.000000e+00> : vector<256x128xf32>
    %55 = tpu.matmul %53, %54, %cst_13 {dimension_numbers = #tpu.dot_dimension_numbers<[1], [0], [0], [1], [0, 0, 1, 1], [], []>} : vector<256x1152xbf16>, vector<1152x128xbf16>, vector<256x128xf32> -> vector<256x128xf32>
    %c0_14 = arith.constant 0 : index
    %c0_15 = arith.constant 0 : index
    %56 = vector.load %arg6[%c0_14, %c0_15] : memref<1x128xf32, #tpu.memory_space<vmem>>, vector<1x128xf32>
    %57 = vector.broadcast %56 : vector<1x128xf32> to vector<256x128xf32>
    %58 = arith.addf %55, %57 : vector<256x128xf32>
    %59 = vector.extract_strided_slice %4 {offsets = [2, 1, 0], sizes = [16, 16, 128], strides = [1, 1, 1]} : vector<20x18x128xbf16> to vector<16x16x128xbf16>
    %60 = arith.extf %59 : vector<16x16x128xbf16> to vector<16x16x128xf32>
    %61 = vector.shape_cast %60 : vector<16x16x128xf32> to vector<256x128xf32>
    %62 = arith.addf %58, %61 : vector<256x128xf32>
    %cst_16 = arith.constant 0.000000e+00 : f32
    %63 = vector.broadcast %cst_16 : f32 to vector<256x128xf32>
    %64 = arith.maximumf %62, %63 : vector<256x128xf32>
    %65 = vector.shape_cast %64 : vector<256x128xf32> to vector<16x16x128xf32>
    %c0_17 = arith.constant 0 : index
    %c0_18 = arith.constant 0 : index
    %c0_19 = arith.constant 0 : index
    %c0_20 = arith.constant 0 : index
    %66 = vector.load %arg7[%c0_17, %c0_18, %c0_19, %c0_20] : memref<1x16x16x128xf32, #tpu.memory_space<vmem>>, vector<1x16x16x128xf32>
    %67 = vector.shape_cast %66 : vector<1x16x16x128xf32> to vector<16x16x128xf32>
    %68 = vector.shape_cast %65 : vector<16x16x128xf32> to vector<1x16x16x128xf32>
    tpu.vector_store %arg7[%c0_17, %c0_18, %c0_19, %c0_20], %68 {strides = array<i32>} : memref<1x16x16x128xf32, #tpu.memory_space<vmem>>, vector<1x16x16x128xf32>,
    return
  }
  func.func @transform_0(%arg0: i32, %arg1: i32) -> (i32, i32, i32, i32) {
    %c0_i32 = arith.constant 0 : i32
    %c0_i32_0 = arith.constant 0 : i32
    %c0_i32_1 = arith.constant 0 : i32
    %c0_i32_2 = arith.constant 0 : i32
    return %arg0, %c0_i32, %c0_i32_0, %c0_i32_1 : i32, i32, i32, i32
  }
  func.func @transform_1(%arg0: i32, %arg1: i32) -> (i32, i32) {
    %c0_i32 = arith.constant 0 : i32
    %c0_i32_0 = arith.constant 0 : i32
    %c0_i32_1 = arith.constant 0 : i32
    return %c0_i32, %c0_i32_0 : i32, i32
  }
  func.func @transform_2(%arg0: i32, %arg1: i32) -> (i32, i32) {
    %c0_i32 = arith.constant 0 : i32
    %c0_i32_0 = arith.constant 0 : i32
    %c0_i32_1 = arith.constant 0 : i32
    return %c0_i32, %c0_i32_0 : i32, i32
  }
  func.func @transform_3(%arg0: i32, %arg1: i32) -> (i32, i32) {
    %c0_i32 = arith.constant 0 : i32
    %c0_i32_0 = arith.constant 0 : i32
    %c0_i32_1 = arith.constant 0 : i32
    return %c0_i32, %c0_i32_0 : i32, i32
  }
  func.func @transform_4(%arg0: i32, %arg1: i32) -> (i32, i32) {
    %c0_i32 = arith.constant 0 : i32
    %c0_i32_0 = arith.constant 0 : i32
    %c0_i32_1 = arith.constant 0 : i32
    return %c0_i32, %c0_i32_0 : i32, i32
  }
  func.func @transform_5(%arg0: i32, %arg1: i32) -> (i32, i32, i32, i32) {
    %c0_i32 = arith.constant 0 : i32
    %c0_i32_0 = arith.constant 0 : i32
    %c0_i32_1 = arith.constant 0 : i32
    return %arg0, %arg1, %c0_i32, %c0_i32_0 : i32, i32, i32, i32
  }
}

</mosaic_0001>

<llo_original>
// kernel: basic_block_forward.1
$region0: #{basic_block_forward.1}
  #allocation0 [shape = 'u32[]', space=smem, size = 0x4, offset = 0x4, fixed_abs, tag = 'smem constant byte address 0x4 - core index']
  #allocation1 [shape = 'u32[144,128]{1,0:T(1,128)}', space=vmem, size = 0x12000, scoped, tag = 'internal scratch']
  %s0 = inlined_call_operand.hbm [shape: bf16[2,20,18,128], index: 0, kind: input, shape index: {}]
  %s1 = inlined_call_operand.hbm [shape: bf16[1152,128], index: 1, kind: input, shape index: {}]
  %s2 = inlined_call_operand.hbm [shape: f32[1,128], index: 2, kind: input, shape index: {}]
  %s3 = inlined_call_operand.hbm [shape: bf16[1152,128], index: 3, kind: input, shape index: {}]
  %s4 = inlined_call_operand.hbm [shape: f32[1,128], index: 4, kind: input, shape index: {}]
  %s5 = inlined_call_operand.hbm [shape: f32[2,16,16,128], index: 5, kind: output, shape index: {}]
  %s6 = sld [smem:[#allocation0]]
  $region73: #{basic_block_forward.1} parent=0
    _
  %s8 = ssub.s32 1, %s6
  %s9 = scalar_select 0, %s8, %s6
  $region1: #{basic_block_forward.1} parent=0
    #allocation2 [shape = 'u8[245760]{0}', space=vmem, size = 0x3c000, scoped, tag = 'input window, operand 0']
    #allocation3 [shape = 's32[2]{0}', space=sflag, size = 0x8, scoped, tag = 'scoped memory for basic_block_forward.1']
    #allocation4 [shape = 's32[2]{0}', space=sflag, size = 0x8, scoped, tag = 'scoped memory for basic_block_forward.1']
    #allocation5 [shape = 'u8[294912]{0}', space=vmem, size = 0x48000, scoped, tag = 'input window, operand 1, single buffered']
    #allocation6 [shape = 's32[1]{0}', space=sflag, size = 0x4, scoped, tag = 'scoped memory for basic_block_forward.1']
    #allocation7 [shape = 'u8[512]{0}', space=vmem, size = 0x400, scoped, tag = 'input window, operand 2, single buffered']
    #allocation8 [shape = 'u8[294912]{0}', space=vmem, size = 0x48000, scoped, tag = 'input window, operand 3, single buffered']
    #allocation9 [shape = 's32[1]{0}', space=sflag, size = 0x4, scoped, tag = 'scoped memory for basic_block_forward.1']
    #allocation10 [shape = 'u8[512]{0}', space=vmem, size = 0x400, scoped, tag = 'input window, operand 4, single buffered']
    #allocation11 [shape = 'u8[262144]{0}', space=vmem, size = 0x40000, scoped, tag = 'output window, operand 0']
    %10 = vsyncpa [#allocation3], 0
    %s11 = scalar_lea.sflag [#allocation3], 1
    %12 = vsyncpa %s11, 0
    %13 = vsyncpa [#allocation6], 0
    %14 = vsyncpa [#allocation9], 0
    %15 = vsyncpa [#allocation4], 0
    %s16 = scalar_lea.sflag [#allocation4], 1
    %17 = vsyncpa %s16, 0
    loop: start=0, step=1, limit=4
    $region2: #{basic_block_forward.1} parent=1 // loop_pre_header
      _
    $region3: #{basic_block_forward.1} parent=1 // loop_header
      %s19 = sphi 0, %s23
      %p20 = scmp.ge.s32.totalorder %s19, 4
      %s26 = sphi 0, %s38
      %s27 = sphi 0, %s34
      %s28 = sphi 0, %s26
      %s29 = sphi 0, %s27
      %s30 = sphi 0, %s28
      %s31 = sphi 0, %s29
      %s41 = sphi 0, %s43
      %s44 = sphi 0, %s41
      %s45 = sphi 0, %s44
      %s61 = sphi 0, %s45
      %s65 = sphi 0, %s65
      %s67 = sphi 0, %s65
      %s68 = sphi 0, %s67
      %s82 = sphi 0, %s68
      %s86 = sphi 0, %s86
      %s88 = sphi 0, %s86
      %s89 = sphi 0, %s88
      %s103 = sphi 0, %s89
      %s107 = sphi 0, %s107
      %s109 = sphi 0, %s107
      %s110 = sphi 0, %s109
      %s124 = sphi 0, %s110
      %s128 = sphi 0, %s128
      %s130 = sphi 0, %s128
      %s131 = sphi 0, %s130
      %s145 = sphi 0, %s131
      %s153 = sphi 0, %s155
      %s156 = sphi 0, %s153
      %s157 = sphi 0, %s156
      %s173 = sphi 0, %s157
    $region4: #{basic_block_forward.1} parent=1 // loop_header_branch
      %22 = sbr.rel (%p20) target = $region8
    $region5: #{basic_block_forward.1} parent=1 // loop_body
      %s24 = ssub.s32 %s19, 1
      %s25 = ssub.s32 %s19, 2
      %s32 = sadd.s32 1, %s27
      %p33 = scmp.ge.s32.totalorder %s32, 1
      %s34 = scalar_select %p33, 0, %s32
      %s35 = sadd.s32 1, %s26
      %s36 = scalar_select %p33, %s35, %s26
      %p37 = scmp.ge.s32.totalorder %s36, 2
      %s38 = scalar_select %p37, 0, %s36
      %s39 = ssub.s32 %s26, %s38
      %p40 = scmp.eq.s32.totalorder %s39, 0
      %s42 = sadd.s32 %s41, 1
      %s43 = scalar_select %p40, %s41, %s42
      %p46 = pneg %p40
      %p47 = scmp.eq.s32.totalorder %s19, 1
      %p48 = por %p46, %p47
      %p49 = scmp.ne.s32.totalorder %s41, %s44
      %p50 = scmp.eq.s32.totalorder %s19, 0
      %p51 = por %p49, %p50
      %p52 = scmp.ne.s32.totalorder %s41, %s44
      %p53 = scmp.eq.s32.totalorder %s24, 1
      %p54 = por %p52, %p53
      %p55 = scmp.ne.s32.totalorder %s44, %s45
      %p56 = scmp.eq.s32.totalorder %s24, 0
      %p57 = por %p55, %p56
      %p58 = scmp.ne.s32.totalorder %s44, %s45
      %p59 = scmp.eq.s32.totalorder %s25, 1
      %p60 = por %p58, %p59
      %p62 = scmp.ne.s32.totalorder %s45, %s61
      %p63 = scmp.eq.s32.totalorder %s25, 0
      %p64 = por %p62, %p63
      %s66 = sadd.s32 %s65, 1
      %p69 = scmp.eq.s32.totalorder %s19, 1
      %p70 = scmp.ne.s32.totalorder %s65, %s67
      %p71 = scmp.eq.s32.totalorder %s19, 0
      %p72 = por %p70, %p71
      %p73 = scmp.ne.s32.totalorder %s65, %s67
      %p74 = scmp.eq.s32.totalorder %s24, 1
      %p75 = por %p73, %p74
      %p76 = scmp.ne.s32.totalorder %s67, %s68
      %p77 = scmp.eq.s32.totalorder %s24, 0
      %p78 = por %p76, %p77
      %p79 = scmp.ne.s32.totalorder %s67, %s68
      %p80 = scmp.eq.s32.totalorder %s25, 1
      %p81 = por %p79, %p80
      %p83 = scmp.ne.s32.totalorder %s68, %s82
      %p84 = scmp.eq.s32.totalorder %s25, 0
      %p85 = por %p83, %p84
      %s87 = sadd.s32 %s86, 1
      %p90 = scmp.eq.s32.totalorder %s19, 1
      %p91 = scmp.ne.s32.totalorder %s86, %s88
      %p92 = scmp.eq.s32.totalorder %s19, 0
      %p93 = por %p91, %p92
      %p94 = scmp.ne.s32.totalorder %s86, %s88
      %p95 = scmp.eq.s32.totalorder %s24, 1
      %p96 = por %p94, %p95
      %p97 = scmp.ne.s32.totalorder %s88, %s89
      %p98 = scmp.eq.s32.totalorder %s24, 0
      %p99 = por %p97, %p98
      %p100 = scmp.ne.s32.totalorder %s88, %s89
      %p101 = scmp.eq.s32.totalorder %s25, 1
      %p102 = por %p100, %p101
      %p104 = scmp.ne.s32.totalorder %s89, %s103
      %p105 = scmp.eq.s32.totalorder %s25, 0
      %p106 = por %p104, %p105
      %s108 = sadd.s32 %s107, 1
      %p111 = scmp.eq.s32.totalorder %s19, 1
      %p112 = scmp.ne.s32.totalorder %s107, %s109
      %p113 = scmp.eq.s32.totalorder %s19, 0
      %p114 = por %p112, %p113
      %p115 = scmp.ne.s32.totalorder %s107, %s109
      %p116 = scmp.eq.s32.totalorder %s24, 1
      %p117 = por %p115, %p116
      %p118 = scmp.ne.s32.totalorder %s109, %s110
      %p119 = scmp.eq.s32.totalorder %s24, 0
      %p120 = por %p118, %p119
      %p121 = scmp.ne.s32.totalorder %s109, %s110
      %p122 = scmp.eq.s32.totalorder %s25, 1
      %p123 = por %p121, %p122
      %p125 = scmp.ne.s32.totalorder %s110, %s124
      %p126 = scmp.eq.s32.totalorder %s25, 0
      %p127 = por %p125, %p126
      %s129 = sadd.s32 %s128, 1
      %p132 = scmp.eq.s32.totalorder %s19, 1
      %p133 = scmp.ne.s32.totalorder %s128, %s130
      %p134 = scmp.eq.s32.totalorder %s19, 0
      %p135 = por %p133, %p134
      %p136 = scmp.ne.s32.totalorder %s128, %s130
      %p137 = scmp.eq.s32.totalorder %s24, 1
      %p138 = por %p136, %p137
      %p139 = scmp.ne.s32.totalorder %s130, %s131
      %p140 = scmp.eq.s32.totalorder %s24, 0
      %p141 = por %p139, %p140
      %p142 = scmp.ne.s32.totalorder %s130, %s131
      %p143 = scmp.eq.s32.totalorder %s25, 1
      %p144 = por %p142, %p143
      %p146 = scmp.ne.s32.totalorder %s131, %s145
      %p147 = scmp.eq.s32.totalorder %s25, 0
      %p148 = por %p146, %p147
      %s149 = ssub.s32 %s26, %s38
      %s150 = ssub.s32 %s27, %s34
      %s151 = sor.u32 %s149, %s150
      %p152 = scmp.eq.s32.totalorder %s151, 0
      %s154 = sadd.s32 %s153, 1
      %s155 = scalar_select %p152, %s153, %s154
      %p158 = pneg %p152
      %p159 = scmp.eq.s32.totalorder %s19, 1
      %p160 = por %p158, %p159
      %p161 = scmp.ne.s32.totalorder %s153, %s156
      %p162 = scmp.eq.s32.totalorder %s19, 0
      %p163 = por %p161, %p162
      %p164 = scmp.ne.s32.totalorder %s153, %s156
      %p165 = scmp.eq.s32.totalorder %s24, 1
      %p166 = por %p164, %p165
      %p167 = scmp.ne.s32.totalorder %s156, %s157
      %p168 = scmp.eq.s32.totalorder %s24, 0
      %p169 = por %p167, %p168
      %p170 = scmp.ne.s32.totalorder %s156, %s157
      %p171 = scmp.eq.s32.totalorder %s25, 1
      %p172 = por %p170, %p171
      %p174 = scmp.ne.s32.totalorder %s157, %s173
      %p175 = scmp.eq.s32.totalorder %s25, 0
      %p176 = por %p174, %p175
      %p177 = scmp.le.s32.totalorder 1, %s19
      %p178 = scmp.lt.s32.totalorder %s19, 3
      %p179 = pnand %p177, %p178
      %p180 = pneg %p179
      // Predicated region
      $region9: #{basic_block_forward.1} parent=5 // pred_check
        _
      $region10: #{basic_block_forward.1} parent=5 // pred_check_branch
        %182 = sbr.rel (%p179) target = $region12
      $region11: #{basic_block_forward.1} parent=5 // pred_region
        %s183 = ssub.s32 %s19, 1
        // Predicated region
        $region13: #{basic_block_forward.1} parent=11 // pred_check
          %p184 = pneg %p78
        $region14: #{basic_block_forward.1} parent=11 // pred_check_branch
          %186 = sbr.rel (%p184) target = $region16
        $region15: #{basic_block_forward.1} parent=11 // pred_region
          %s188 = ssub.s32 9216, 9216
          %189 = vsyncadd [#allocation6], %s188
          %s190 = sshll.u32 [#allocation5], 4
          %s191 = int_to_ptr.vmem [resolvable:$true] %s190
          %196 = dma.hbm_to_vmem [thread:$0]  %s1, 9216, %s191, [#allocation6], 64, 64, 4
        $region16: #{basic_block_forward.1} parent=11 // pred_fallthru
          _
        // Predicated region
        $region17: #{basic_block_forward.1} parent=11 // pred_check
          %p197 = pneg %p99
        $region18: #{basic_block_forward.1} parent=11 // pred_check_branch
          %199 = sbr.rel (%p197) target = $region20
        $region19: #{basic_block_forward.1} parent=11 // pred_region
          %s201 = ssub.s32 16, 16
          %202 = vsyncadd [#allocation6], %s201
          %s204 = sshll.u32 [#allocation7], 4
          %s205 = int_to_ptr.vmem [resolvable:$true] %s204
          %207 = dma.hbm_to_vmem [thread:$0]  %s2, 16, %s205, [#allocation6]
        $region20: #{basic_block_forward.1} parent=11 // pred_fallthru
          _
        // Predicated region
        $region21: #{basic_block_forward.1} parent=11 // pred_check
          %p208 = pneg %p120
        $region22: #{basic_block_forward.1} parent=11 // pred_check_branch
          %210 = sbr.rel (%p208) target = $region24
        $region23: #{basic_block_forward.1} parent=11 // pred_region
          %s212 = ssub.s32 9216, 9216
          %213 = vsyncadd [#allocation9], %s212
          %s214 = sshll.u32 [#allocation8], 4
          %s215 = int_to_ptr.vmem [resolvable:$true] %s214
          %220 = dma.hbm_to_vmem [thread:$0]  %s3, 9216, %s215, [#allocation9], 64, 64, 4
        $region24: #{basic_block_forward.1} parent=11 // pred_fallthru
          _
        // Predicated region
        $region25: #{basic_block_forward.1} parent=11 // pred_check
          %p221 = pneg %p141
        $region26: #{basic_block_forward.1} parent=11 // pred_check_branch
          %223 = sbr.rel (%p221) target = $region28
        $region27: #{basic_block_forward.1} parent=11 // pred_region
          %s225 = ssub.s32 16, 16
          %226 = vsyncadd [#allocation9], %s225
          %s228 = sshll.u32 [#allocation10], 4
          %s229 = int_to_ptr.vmem [resolvable:$true] %s228
          %231 = dma.hbm_to_vmem [thread:$0]  %s4, 16, %s229, [#allocation9]
        $region28: #{basic_block_forward.1} parent=11 // pred_fallthru
          _
      $region12: #{basic_block_forward.1} parent=5 // pred_fallthru
        _
      %p232 = scmp.lt.s32.totalorder %s19, 2
      // Predicated region
      $region29: #{basic_block_forward.1} parent=5 // pred_check
        %p233 = pneg %p232
      $region30: #{basic_block_forward.1} parent=5 // pred_check_branch
        %235 = sbr.rel (%p233) target = $region32
      $region31: #{basic_block_forward.1} parent=5 // pred_region
        // Predicated region
        $region33: #{basic_block_forward.1} parent=31 // pred_check
          %p236 = pneg %p51
        $region34: #{basic_block_forward.1} parent=31 // pred_check_branch
          %238 = sbr.rel (%p236) target = $region36
        $region35: #{basic_block_forward.1} parent=31 // pred_region
          %s239 = sand.u32 %s41, 1
          %s240 = scalar_lea.sflag [#allocation3], %s239
          %s241 = sand.u32 %s41, 1
          %s242 = smul.addr %s241, 240
          %s243 = scalar_lea.vmem [#allocation2], %s242
          %s245 = ssub.s32 3840, 3840
          %246 = vsyncadd %s240, %s245
          %s247 = smul.addr %s26, 60
          %s248 = smul.addr %s247, 64
          %s249 = scalar_lea.hbm %s0, %s248
          %s250 = sshll.u32 %s243, 4
          %s251 = int_to_ptr.vmem [resolvable:$true] %s250
          %256 = dma.hbm_to_vmem [thread:$0]  %s249, 3840, %s251, %s240, 64, 64, 4
        $region36: #{basic_block_forward.1} parent=31 // pred_fallthru
          _
      $region32: #{basic_block_forward.1} parent=5 // pred_fallthru
        _
      %p257 = scmp.le.s32.totalorder 1, %s19
      %p258 = scmp.lt.s32.totalorder %s19, 3
      %p259 = pnand %p257, %p258
      %p260 = pneg %p259
      // Predicated region
      $region37: #{basic_block_forward.1} parent=5 // pred_check
        _
      $region38: #{basic_block_forward.1} parent=5 // pred_check_branch
        %262 = sbr.rel (%p259) target = $region40
      $region39: #{basic_block_forward.1} parent=5 // pred_region
        %s263 = ssub.s32 %s19, 1
        %s264 = sand.u32 %s44, 1
        %s265 = scalar_lea.sflag [#allocation3], %s264
        %s266 = sand.u32 %s44, 1
        %s267 = smul.addr %s266, 240
        %s268 = scalar_lea.vmem [#allocation2], %s267
        // Predicated region
        $region41: #{basic_block_forward.1} parent=39 // pred_check
          %p269 = pneg %p57
        $region42: #{basic_block_forward.1} parent=39 // pred_check_branch
          %271 = sbr.rel (%p269) target = $region44
        $region43: #{basic_block_forward.1} parent=39 // pred_region
          %272 = dma.done %s265, 3840
        $region44: #{basic_block_forward.1} parent=39 // pred_fallthru
          _
        // Predicated region
        $region45: #{basic_block_forward.1} parent=39 // pred_check
          %p273 = pneg %p78
        $region46: #{basic_block_forward.1} parent=39 // pred_check_branch
          %275 = sbr.rel (%p273) target = $region48
        $region47: #{basic_block_forward.1} parent=39 // pred_region
          %276 = dma.done [#allocation6], 9216
        $region48: #{basic_block_forward.1} parent=39 // pred_fallthru
          _
        // Predicated region
        $region49: #{basic_block_forward.1} parent=39 // pred_check
          %p277 = pneg %p99
        $region50: #{basic_block_forward.1} parent=39 // pred_check_branch
          %279 = sbr.rel (%p277) target = $region52
        $region51: #{basic_block_forward.1} parent=39 // pred_region
          %280 = dma.done [#allocation6], 16
        $region52: #{basic_block_forward.1} parent=39 // pred_fallthru
          _
        // Predicated region
        $region53: #{basic_block_forward.1} parent=39 // pred_check
          %p281 = pneg %p120
        $region54: #{basic_block_forward.1} parent=39 // pred_check_branch
          %283 = sbr.rel (%p281) target = $region56
        $region55: #{basic_block_forward.1} parent=39 // pred_region
          %284 = dma.done [#allocation9], 9216
        $region56: #{basic_block_forward.1} parent=39 // pred_fallthru
          _
        // Predicated region
        $region57: #{basic_block_forward.1} parent=39 // pred_check
          %p285 = pneg %p141
        $region58: #{basic_block_forward.1} parent=39 // pred_check_branch
          %287 = sbr.rel (%p285) target = $region60
        $region59: #{basic_block_forward.1} parent=39 // pred_region
          %288 = dma.done [#allocation9], 16
        $region60: #{basic_block_forward.1} parent=39 // pred_fallthru
          _
        %s289 = sand.u32 %s44, 1
        %s290 = scalar_lea.sflag [#allocation3], %s289
        %s291 = sand.u32 %s44, 1
        %s292 = smul.addr %s291, 240
        %s293 = scalar_lea.vmem [#allocation2], %s292
        %p294 = pneg %p57
        %p295 = pneg %p54
        %p296 = pneg %p78
        %p297 = pneg %p75
        %p298 = pneg %p99
        %p299 = pneg %p96
        %p300 = pneg %p120
        %p301 = pneg %p117
        %p302 = pneg %p141
        %p303 = pneg %p138
        %p304 = pneg %p169
        %p305 = pneg %p166
        %s306 = sand.u32 %s156, 1
        %s307 = scalar_lea.sflag [#allocation4], %s306
        %s308 = sand.u32 %s156, 1
        %s309 = smul.addr %s308, 256
        %s310 = scalar_lea.vmem [#allocation11], %s309
        %s311 = smul.u32 16, %s29
        %s313 = smul.u32 %s29, 16
        %s314 = smul.u32 %s313, 3
        %s315 = smul.addr %s314, 4
        %s316 = scalar_lea.vmem %s268, %s315 [#allocation2]
        %v317 = vld [vmem:[%s316] sm:$0xf]
        %v318 = vld [vmem:[%s316 + $0x4] sm:$0xf]
        %v319 = vld [vmem:[%s316 + $0x8] sm:$0x1]
        %v320 = vld [vmem:[%s316 + $0xc] sm:$0xf]
        %v321 = vld [vmem:[%s316 + $0x10] sm:$0xf]
        %v322 = vld [vmem:[%s316 + $0x14] sm:$0x1]
        %v323 = vld [vmem:[%s316 + $0x18] sm:$0xf]
        %v324 = vld [vmem:[%s316 + $0x1c] sm:$0xf]
        %v325 = vld [vmem:[%s316 + $0x20] sm:$0x1]
        %v326 = vld [vmem:[%s316 + $0x24] sm:$0xf]
        %v327 = vld [vmem:[%s316 + $0x28] sm:$0xf]
        %v328 = vld [vmem:[%s316 + $0x2c] sm:$0x1]
        %v329 = vld [vmem:[%s316 + $0x30] sm:$0xf]
        %v330 = vld [vmem:[%s316 + $0x34] sm:$0xf]
        %v331 = vld [vmem:[%s316 + $0x38] sm:$0x1]
        %v332 = vld [vmem:[%s316 + $0x3c] sm:$0xf]
        %v333 = vld [vmem:[%s316 + $0x40] sm:$0xf]
        %v334 = vld [vmem:[%s316 + $0x44] sm:$0x1]
        %v335 = vld [vmem:[%s316 + $0x48] sm:$0xf]
        %v336 = vld [vmem:[%s316 + $0x4c] sm:$0xf]
        %v337 = vld [vmem:[%s316 + $0x50] sm:$0x1]
        %v338 = vld [vmem:[%s316 + $0x54] sm:$0xf]
        %v339 = vld [vmem:[%s316 + $0x58] sm:$0xf]
        %v340 = vld [vmem:[%s316 + $0x5c] sm:$0x1]
        %v341 = vld [vmem:[%s316 + $0x60] sm:$0xf]
        %v342 = vld [vmem:[%s316 + $0x64] sm:$0xf]
        %v343 = vld [vmem:[%s316 + $0x68] sm:$0x1]
        %v344 = vld [vmem:[%s316 + $0x6c] sm:$0xf]
        %v345 = vld [vmem:[%s316 + $0x70] sm:$0xf]
        %v346 = vld [vmem:[%s316 + $0x74] sm:$0x1]
        %v347 = vld [vmem:[%s316 + $0x78] sm:$0xf]
        %v348 = vld [vmem:[%s316 + $0x7c] sm:$0xf]
        %v349 = vld [vmem:[%s316 + $0x80] sm:$0x1]
        %v350 = vld [vmem:[%s316 + $0x84] sm:$0xf]
        %v351 = vld [vmem:[%s316 + $0x88] sm:$0xf]
        %v352 = vld [vmem:[%s316 + $0x8c] sm:$0x1]
        %v353 = vld [vmem:[%s316 + $0x90] sm:$0xf]
        %v354 = vld [vmem:[%s316 + $0x94] sm:$0xf]
        %v355 = vld [vmem:[%s316 + $0x98] sm:$0x1]
        %v356 = vld [vmem:[%s316 + $0x9c] sm:$0xf]
        %v357 = vld [vmem:[%s316 + $0xa0] sm:$0xf]
        %v358 = vld [vmem:[%s316 + $0xa4] sm:$0x1]
        %v359 = vld [vmem:[%s316 + $0xa8] sm:$0xf]
        %v360 = vld [vmem:[%s316 + $0xac] sm:$0xf]
        %v361 = vld [vmem:[%s316 + $0xb0] sm:$0x1]
        %v362 = vld [vmem:[%s316 + $0xb4] sm:$0xf]
        %v363 = vld [vmem:[%s316 + $0xb8] sm:$0xf]
        %v364 = vld [vmem:[%s316 + $0xbc] sm:$0x1]
        %v365 = vld [vmem:[%s316 + $0xc0] sm:$0xf]
        %v366 = vld [vmem:[%s316 + $0xc4] sm:$0xf]
        %v367 = vld [vmem:[%s316 + $0xc8] sm:$0x1]
        %v368 = vld [vmem:[%s316 + $0xcc] sm:$0xf]
        %v369 = vld [vmem:[%s316 + $0xd0] sm:$0xf]
        %v370 = vld [vmem:[%s316 + $0xd4] sm:$0x1]
        %v371 = vld [vmem:[%s316 + $0xd8] sm:$0xf]
        %v372 = vld [vmem:[%s316 + $0xdc] sm:$0xf]
        %v373 = vld [vmem:[%s316 + $0xe0] sm:$0x1]
        %v374 = vld [vmem:[%s316 + $0xe4] sm:$0xf]
        %v375 = vld [vmem:[%s316 + $0xe8] sm:$0xf]
        %v376 = vld [vmem:[%s316 + $0xec] sm:$0x1]
        %v413 = vunpack.c.l.b16 %v317
        %v414 = vunpack.c.l.b16 %v318
        %v415 = vunpack.c.l.b16 %v320
        %v416 = vunpack.c.l.b16 %v321
        %v417 = vunpack.c.l.b16 %v323
        %v418 = vunpack.c.l.b16 %v324
        %v419 = vunpack.c.l.b16 %v326
        %v420 = vunpack.c.l.b16 %v327
        %v421 = vunpack.c.l.b16 %v329
        %v422 = vunpack.c.l.b16 %v330
        %v423 = vunpack.c.l.b16 %v332
        %v424 = vunpack.c.l.b16 %v333
        %v425 = vunpack.c.l.b16 %v335
        %v426 = vunpack.c.l.b16 %v336
        %v427 = vunpack.c.l.b16 %v338
        %v428 = vunpack.c.l.b16 %v339
        %v429 = vunpack.c.l.b16 %v341
        %v430 = vunpack.c.l.b16 %v342
        %v431 = vunpack.c.l.b16 %v344
        %v432 = vunpack.c.l.b16 %v345
        %v433 = vunpack.c.l.b16 %v347
        %v434 = vunpack.c.l.b16 %v348
        %v435 = vunpack.c.l.b16 %v350
        %v436 = vunpack.c.l.b16 %v351
        %v437 = vunpack.c.l.b16 %v353
        %v438 = vunpack.c.l.b16 %v354
        %v439 = vunpack.c.l.b16 %v356
        %v440 = vunpack.c.l.b16 %v357
        %v441 = vunpack.c.l.b16 %v359
        %v442 = vunpack.c.l.b16 %v360
        %v443 = vunpack.c.l.b16 %v362
        %v444 = vunpack.c.l.b16 %v363
        %v445 = vunpack.c.l.b16 %v365
        %v446 = vunpack.c.l.b16 %v366
        %v447 = vunpack.c.l.b16 %v368
        %v448 = vunpack.c.l.b16 %v369
        %v449 = vpack.c.b16 %v414, %v413
        %v450 = vpack.c.b16 %v416, %v415
        %v451 = vpack.c.b16 %v418, %v417
        %v452 = vpack.c.b16 %v420, %v419
        %v453 = vpack.c.b16 %v422, %v421
        %v454 = vpack.c.b16 %v424, %v423
        %v455 = vpack.c.b16 %v426, %v425
        %v456 = vpack.c.b16 %v428, %v427
        %v457 = vpack.c.b16 %v430, %v429
        %v458 = vpack.c.b16 %v432, %v431
        %v459 = vpack.c.b16 %v434, %v433
        %v460 = vpack.c.b16 %v436, %v435
        %v461 = vpack.c.b16 %v438, %v437
        %v462 = vpack.c.b16 %v440, %v439
        %v463 = vpack.c.b16 %v442, %v441
        %v464 = vpack.c.b16 %v444, %v443
        %v465 = vpack.c.b16 %v446, %v445
        %v466 = vpack.c.b16 %v448, %v447
        %v503 = vunpack.c.l.b16 %v319
        %v504 = vunpack.c.l.b16 %v322
        %v505 = vunpack.c.l.b16 %v325
        %v506 = vunpack.c.l.b16 %v328
        %v507 = vunpack.c.l.b16 %v331
        %v508 = vunpack.c.l.b16 %v334
        %v509 = vunpack.c.l.b16 %v337
        %v510 = vunpack.c.l.b16 %v340
        %v511 = vunpack.c.l.b16 %v343
        %v512 = vunpack.c.l.b16 %v346
        %v513 = vunpack.c.l.b16 %v349
        %v514 = vunpack.c.l.b16 %v352
        %v515 = vunpack.c.l.b16 %v355
        %v516 = vunpack.c.l.b16 %v358
        %v517 = vunpack.c.l.b16 %v361
        %v518 = vunpack.c.l.b16 %v364
        %v519 = vunpack.c.l.b16 %v367
        %v520 = vunpack.c.l.b16 %v370
        %v521 = vpack.c.b16 %v503, %v503
        %v522 = vpack.c.b16 %v504, %v504
        %v523 = vpack.c.b16 %v505, %v505
        %v524 = vpack.c.b16 %v506, %v506
        %v525 = vpack.c.b16 %v507, %v507
        %v526 = vpack.c.b16 %v508, %v508
        %v527 = vpack.c.b16 %v509, %v509
        %v528 = vpack.c.b16 %v510, %v510
        %v529 = vpack.c.b16 %v511, %v511
        %v530 = vpack.c.b16 %v512, %v512
        %v531 = vpack.c.b16 %v513, %v513
        %v532 = vpack.c.b16 %v514, %v514
        %v533 = vpack.c.b16 %v515, %v515
        %v534 = vpack.c.b16 %v516, %v516
        %v535 = vpack.c.b16 %v517, %v517
        %v536 = vpack.c.b16 %v518, %v518
        %v537 = vpack.c.b16 %v519, %v519
        %v538 = vpack.c.b16 %v520, %v520
        %vm539 = vsmask.f32 7424
        %v541 = vshrl.u32 %v449, 16
        %v543 = vshll.u32 %v449, 16
        %v545 = vrot.slane %v543, 1
        %v546 = vor.u32 %v541, %v545
        %v548 = vshll.u32 %v521, 16
        %v550 = vrot.slane %v548, 1
        %v551 = vsel %vm539, %v546, %v550
        %v553 = vshrl.u32 %v450, 16
        %v555 = vshll.u32 %v450, 16
        %v557 = vrot.slane %v555, 1
        %v558 = vor.u32 %v553, %v557
        %v560 = vshll.u32 %v522, 16
        %v562 = vrot.slane %v560, 1
        %v563 = vsel %vm539, %v558, %v562
        %v565 = vshrl.u32 %v451, 16
        %v567 = vshll.u32 %v451, 16
        %v569 = vrot.slane %v567, 1
        %v570 = vor.u32 %v565, %v569
        %v572 = vshll.u32 %v523, 16
        %v574 = vrot.slane %v572, 1
        %v575 = vsel %vm539, %v570, %v574
        %v577 = vshrl.u32 %v452, 16
        %v579 = vshll.u32 %v452, 16
        %v581 = vrot.slane %v579, 1
        %v582 = vor.u32 %v577, %v581
        %v584 = vshll.u32 %v524, 16
        %v586 = vrot.slane %v584, 1
        %v587 = vsel %vm539, %v582, %v586
        %v589 = vshrl.u32 %v453, 16
        %v591 = vshll.u32 %v453, 16
        %v593 = vrot.slane %v591, 1
        %v594 = vor.u32 %v589, %v593
        %v596 = vshll.u32 %v525, 16
        %v598 = vrot.slane %v596, 1
        %v599 = vsel %vm539, %v594, %v598
        %v601 = vshrl.u32 %v454, 16
        %v603 = vshll.u32 %v454, 16
        %v605 = vrot.slane %v603, 1
        %v606 = vor.u32 %v601, %v605
        %v608 = vshll.u32 %v526, 16
        %v610 = vrot.slane %v608, 1
        %v611 = vsel %vm539, %v606, %v610
        %v613 = vshrl.u32 %v455, 16
        %v615 = vshll.u32 %v455, 16
        %v617 = vrot.slane %v615, 1
        %v618 = vor.u32 %v613, %v617
        %v620 = vshll.u32 %v527, 16
        %v622 = vrot.slane %v620, 1
        %v623 = vsel %vm539, %v618, %v622
        %v625 = vshrl.u32 %v456, 16
        %v627 = vshll.u32 %v456, 16
        %v629 = vrot.slane %v627, 1
        %v630 = vor.u32 %v625, %v629
        %v632 = vshll.u32 %v528, 16
        %v634 = vrot.slane %v632, 1
        %v635 = vsel %vm539, %v630, %v634
        %v637 = vshrl.u32 %v457, 16
        %v639 = vshll.u32 %v457, 16
        %v641 = vrot.slane %v639, 1
        %v642 = vor.u32 %v637, %v641
        %v644 = vshll.u32 %v529, 16
        %v646 = vrot.slane %v644, 1
        %v647 = vsel %vm539, %v642, %v646
        %v649 = vshrl.u32 %v458, 16
        %v651 = vshll.u32 %v458, 16
        %v653 = vrot.slane %v651, 1
        %v654 = vor.u32 %v649, %v653
        %v656 = vshll.u32 %v530, 16
        %v658 = vrot.slane %v656, 1
        %v659 = vsel %vm539, %v654, %v658
        %v661 = vshrl.u32 %v459, 16
        %v663 = vshll.u32 %v459, 16
        %v665 = vrot.slane %v663, 1
        %v666 = vor.u32 %v661, %v665
        %v668 = vshll.u32 %v531, 16
        %v670 = vrot.slane %v668, 1
        %v671 = vsel %vm539, %v666, %v670
        %v673 = vshrl.u32 %v460, 16
        %v675 = vshll.u32 %v460, 16
        %v677 = vrot.slane %v675, 1
        %v678 = vor.u32 %v673, %v677
        %v680 = vshll.u32 %v532, 16
        %v682 = vrot.slane %v680, 1
        %v683 = vsel %vm539, %v678, %v682
        %v685 = vshrl.u32 %v461, 16
        %v687 = vshll.u32 %v461, 16
        %v689 = vrot.slane %v687, 1
        %v690 = vor.u32 %v685, %v689
        %v692 = vshll.u32 %v533, 16
        %v694 = vrot.slane %v692, 1
        %v695 = vsel %vm539, %v690, %v694
        %v697 = vshrl.u32 %v462, 16
        %v699 = vshll.u32 %v462, 16
        %v701 = vrot.slane %v699, 1
        %v702 = vor.u32 %v697, %v701
        %v704 = vshll.u32 %v534, 16
        %v706 = vrot.slane %v704, 1
        %v707 = vsel %vm539, %v702, %v706
        %v709 = vshrl.u32 %v463, 16
        %v711 = vshll.u32 %v463, 16
        %v713 = vrot.slane %v711, 1
        %v714 = vor.u32 %v709, %v713
        %v716 = vshll.u32 %v535, 16
        %v718 = vrot.slane %v716, 1
        %v719 = vsel %vm539, %v714, %v718
        %v721 = vshrl.u32 %v464, 16
        %v723 = vshll.u32 %v464, 16
        %v725 = vrot.slane %v723, 1
        %v726 = vor.u32 %v721, %v725
        %v728 = vshll.u32 %v536, 16
        %v730 = vrot.slane %v728, 1
        %v731 = vsel %vm539, %v726, %v730
        %v733 = vshrl.u32 %v465, 16
        %v735 = vshll.u32 %v465, 16
        %v737 = vrot.slane %v735, 1
        %v738 = vor.u32 %v733, %v737
        %v740 = vshll.u32 %v537, 16
        %v742 = vrot.slane %v740, 1
        %v743 = vsel %vm539, %v738, %v742
        %v745 = vshrl.u32 %v466, 16
        %v747 = vshll.u32 %v466, 16
        %v749 = vrot.slane %v747, 1
        %v750 = vor.u32 %v745, %v749
        %v752 = vshll.u32 %v538, 16
        %v754 = vrot.slane %v752, 1
        %v755 = vsel %vm539, %v750, %v754
        %vm774 = vcmask 1046528
        %v775 = vrot.slane %v449, 1
        %v776 = vrot.slane %v521, 1
        %v777 = vsel %vm774, %v775, %v776
        %v778 = vrot.slane %v450, 1
        %v779 = vrot.slane %v522, 1
        %v780 = vsel %vm774, %v778, %v779
        %v781 = vrot.slane %v451, 1
        %v782 = vrot.slane %v523, 1
        %v783 = vsel %vm774, %v781, %v782
        %v784 = vrot.slane %v452, 1
        %v785 = vrot.slane %v524, 1
        %v786 = vsel %vm774, %v784, %v785
        %v787 = vrot.slane %v453, 1
        %v788 = vrot.slane %v525, 1
        %v789 = vsel %vm774, %v787, %v788
        %v790 = vrot.slane %v454, 1
        %v791 = vrot.slane %v526, 1
        %v792 = vsel %vm774, %v790, %v791
        %v793 = vrot.slane %v455, 1
        %v794 = vrot.slane %v527, 1
        %v795 = vsel %vm774, %v793, %v794
        %v796 = vrot.slane %v456, 1
        %v797 = vrot.slane %v528, 1
        %v798 = vsel %vm774, %v796, %v797
        %v799 = vrot.slane %v457, 1
        %v800 = vrot.slane %v529, 1
        %v801 = vsel %vm774, %v799, %v800
        %v802 = vrot.slane %v458, 1
        %v803 = vrot.slane %v530, 1
        %v804 = vsel %vm774, %v802, %v803
        %v805 = vrot.slane %v459, 1
        %v806 = vrot.slane %v531, 1
        %v807 = vsel %vm774, %v805, %v806
        %v808 = vrot.slane %v460, 1
        %v809 = vrot.slane %v532, 1
        %v810 = vsel %vm774, %v808, %v809
        %v811 = vrot.slane %v461, 1
        %v812 = vrot.slane %v533, 1
        %v813 = vsel %vm774, %v811, %v812
        %v814 = vrot.slane %v462, 1
        %v815 = vrot.slane %v534, 1
        %v816 = vsel %vm774, %v814, %v815
        %v817 = vrot.slane %v463, 1
        %v818 = vrot.slane %v535, 1
        %v819 = vsel %vm774, %v817, %v818
        %v820 = vrot.slane %v464, 1
        %v821 = vrot.slane %v536, 1
        %v822 = vsel %vm774, %v820, %v821
        %v823 = vrot.slane %v465, 1
        %v824 = vrot.slane %v537, 1
        %v825 = vsel %vm774, %v823, %v824
        %v826 = vrot.slane %v466, 1
        %v827 = vrot.slane %v538, 1
        %v828 = vsel %vm774, %v826, %v827
        %v849 = vunpack.c.l.b16 %v371
        %v850 = vunpack.c.l.b16 %v372
        %v851 = vpack.c.b16 %v850, %v849
        %v854 = vunpack.c.l.b16 %v373
        %v855 = vpack.c.b16 %v854, %v854
        %v857 = vshrl.u32 %v851, 16
        %v859 = vshll.u32 %v851, 16
        %v861 = vrot.slane %v859, 1
        %v862 = vor.u32 %v857, %v861
        %v864 = vshll.u32 %v855, 16
        %v866 = vrot.slane %v864, 1
        %v867 = vsel %vm539, %v862, %v866
        %v869 = vrot.slane %v851, 1
        %v870 = vrot.slane %v855, 1
        %v871 = vsel %vm774, %v869, %v870
        %v875 = vunpack.c.l.b16 %v374
        %v876 = vunpack.c.l.b16 %v375
        %v877 = vpack.c.b16 %v876, %v875
        %v880 = vunpack.c.l.b16 %v376
        %v881 = vpack.c.b16 %v880, %v880
        %v883 = vshrl.u32 %v877, 16
        %v885 = vshll.u32 %v877, 16
        %v887 = vrot.slane %v885, 1
        %v888 = vor.u32 %v883, %v887
        %v890 = vshll.u32 %v881, 16
        %v892 = vrot.slane %v890, 1
        %v893 = vsel %vm539, %v888, %v892
        %v895 = vrot.slane %v877, 1
        %v896 = vrot.slane %v881, 1
        %v897 = vsel %vm774, %v895, %v896
        %v899 = vld [vmem:[#allocation5] sm:$0xf]
        %v900 = vld [vmem:[#allocation5 + $0x4] sm:$0xf]
        %v901 = vld [vmem:[#allocation5 + $0x8] sm:$0xf]
        %v902 = vld [vmem:[#allocation5 + $0xc] sm:$0xf]
        %v903 = vld [vmem:[#allocation5 + $0x10] sm:$0xf]
        %v904 = vld [vmem:[#allocation5 + $0x14] sm:$0xf]
        %v905 = vld [vmem:[#allocation5 + $0x18] sm:$0xf]
        %v906 = vld [vmem:[#allocation5 + $0x1c] sm:$0xf]
        %v907 = vld [vmem:[#allocation5 + $0x20] sm:$0xf]
        %v908 = vld [vmem:[#allocation5 + $0x24] sm:$0xf]
        %v909 = vld [vmem:[#allocation5 + $0x28] sm:$0xf]
        %v910 = vld [vmem:[#allocation5 + $0x2c] sm:$0xf]
        %v911 = vld [vmem:[#allocation5 + $0x30] sm:$0xf]
        %v912 = vld [vmem:[#allocation5 + $0x34] sm:$0xf]
        %v913 = vld [vmem:[#allocation5 + $0x38] sm:$0xf]
        %v914 = vld [vmem:[#allocation5 + $0x3c] sm:$0xf]
        %v915 = vld [vmem:[#allocation5 + $0x40] sm:$0xf]
        %v916 = vld [vmem:[#allocation5 + $0x44] sm:$0xf]
        %v917 = vld [vmem:[#allocation5 + $0x48] sm:$0xf]
        %v918 = vld [vmem:[#allocation5 + $0x4c] sm:$0xf]
        %v919 = vld [vmem:[#allocation5 + $0x50] sm:$0xf]
        %v920 = vld [vmem:[#allocation5 + $0x54] sm:$0xf]
        %v921 = vld [vmem:[#allocation5 + $0x58] sm:$0xf]
        %v922 = vld [vmem:[#allocation5 + $0x5c] sm:$0xf]
        %v923 = vld [vmem:[#allocation5 + $0x60] sm:$0xf]
        %v924 = vld [vmem:[#allocation5 + $0x64] sm:$0xf]
        %v925 = vld [vmem:[#allocation5 + $0x68] sm:$0xf]
        %v926 = vld [vmem:[#allocation5 + $0x6c] sm:$0xf]
        %v927 = vld [vmem:[#allocation5 + $0x70] sm:$0xf]
        %v928 = vld [vmem:[#allocation5 + $0x74] sm:$0xf]
        %v929 = vld [vmem:[#allocation5 + $0x78] sm:$0xf]
        %v930 = vld [vmem:[#allocation5 + $0x7c] sm:$0xf]
        %v931 = vld [vmem:[#allocation5 + $0x80] sm:$0xf]
        %v932 = vld [vmem:[#allocation5 + $0x84] sm:$0xf]
        %v933 = vld [vmem:[#allocation5 + $0x88] sm:$0xf]
        %v934 = vld [vmem:[#allocation5 + $0x8c] sm:$0xf]
        %v935 = vld [vmem:[#allocation5 + $0x90] sm:$0xf]
        %v936 = vld [vmem:[#allocation5 + $0x94] sm:$0xf]
        %v937 = vld [vmem:[#allocation5 + $0x98] sm:$0xf]
        %v938 = vld [vmem:[#allocation5 + $0x9c] sm:$0xf]
        %v939 = vld [vmem:[#allocation5 + $0xa0] sm:$0xf]
        %v940 = vld [vmem:[#allocation5 + $0xa4] sm:$0xf]
        %v941 = vld [vmem:[#allocation5 + $0xa8] sm:$0xf]
        %v942 = vld [vmem:[#allocation5 + $0xac] sm:$0xf]
        %v943 = vld [vmem:[#allocation5 + $0xb0] sm:$0xf]
        %v944 = vld [vmem:[#allocation5 + $0xb4] sm:$0xf]
        %v945 = vld [vmem:[#allocation5 + $0xb8] sm:$0xf]
        %v946 = vld [vmem:[#allocation5 + $0xbc] sm:$0xf]
        %v947 = vld [vmem:[#allocation5 + $0xc0] sm:$0xf]
        %v948 = vld [vmem:[#allocation5 + $0xc4] sm:$0xf]
        %v949 = vld [vmem:[#allocation5 + $0xc8] sm:$0xf]
        %v950 = vld [vmem:[#allocation5 + $0xcc] sm:$0xf]
        %v951 = vld [vmem:[#allocation5 + $0xd0] sm:$0xf]
        %v952 = vld [vmem:[#allocation5 + $0xd4] sm:$0xf]
        %v953 = vld [vmem:[#allocation5 + $0xd8] sm:$0xf]
        %v954 = vld [vmem:[#allocation5 + $0xdc] sm:$0xf]
        %v955 = vld [vmem:[#allocation5 + $0xe0] sm:$0xf]
        %v956 = vld [vmem:[#allocation5 + $0xe4] sm:$0xf]
        %v957 = vld [vmem:[#allocation5 + $0xe8] sm:$0xf]
        %v958 = vld [vmem:[#allocation5 + $0xec] sm:$0xf]
        %v959 = vld [vmem:[#allocation5 + $0xf0] sm:$0xf]
        %v960 = vld [vmem:[#allocation5 + $0xf4] sm:$0xf]
        %v961 = vld [vmem:[#allocation5 + $0xf8] sm:$0xf]
        %v962 = vld [vmem:[#allocation5 + $0xfc] sm:$0xf]
        %v963 = vld [vmem:[#allocation5 + $0x100] sm:$0xf]
        %v964 = vld [vmem:[#allocation5 + $0x104] sm:$0xf]
        %v965 = vld [vmem:[#allocation5 + $0x108] sm:$0xf]
        %v966 = vld [vmem:[#allocation5 + $0x10c] sm:$0xf]
        %v967 = vld [vmem:[#allocation5 + $0x110] sm:$0xf]
        %v968 = vld [vmem:[#allocation5 + $0x114] sm:$0xf]
        %v969 = vld [vmem:[#allocation5 + $0x118] sm:$0xf]
        %v970 = vld [vmem:[#allocation5 + $0x11c] sm:$0xf]
        %v971 = vld [vmem:[#allocation5 + $0x120] sm:$0xf]
        %v972 = vld [vmem:[#allocation5 + $0x124] sm:$0xf]
        %v973 = vld [vmem:[#allocation5 + $0x128] sm:$0xf]
        %v974 = vld [vmem:[#allocation5 + $0x12c] sm:$0xf]
        %v975 = vld [vmem:[#allocation5 + $0x130] sm:$0xf]
        %v976 = vld [vmem:[#allocation5 + $0x134] sm:$0xf]
        %v977 = vld [vmem:[#allocation5 + $0x138] sm:$0xf]
        %v978 = vld [vmem:[#allocation5 + $0x13c] sm:$0xf]
        %v979 = vld [vmem:[#allocation5 + $0x140] sm:$0xf]
        %v980 = vld [vmem:[#allocation5 + $0x144] sm:$0xf]
        %v981 = vld [vmem:[#allocation5 + $0x148] sm:$0xf]
        %v982 = vld [vmem:[#allocation5 + $0x14c] sm:$0xf]
        %v983 = vld [vmem:[#allocation5 + $0x150] sm:$0xf]
        %v984 = vld [vmem:[#allocation5 + $0x154] sm:$0xf]
        %v985 = vld [vmem:[#allocation5 + $0x158] sm:$0xf]
        %v986 = vld [vmem:[#allocation5 + $0x15c] sm:$0xf]
        %v987 = vld [vmem:[#allocation5 + $0x160] sm:$0xf]
        %v988 = vld [vmem:[#allocation5 + $0x164] sm:$0xf]
        %v989 = vld [vmem:[#allocation5 + $0x168] sm:$0xf]
        %v990 = vld [vmem:[#allocation5 + $0x16c] sm:$0xf]
        %v991 = vld [vmem:[#allocation5 + $0x170] sm:$0xf]
        %v992 = vld [vmem:[#allocation5 + $0x174] sm:$0xf]
        %v993 = vld [vmem:[#allocation5 + $0x178] sm:$0xf]
        %v994 = vld [vmem:[#allocation5 + $0x17c] sm:$0xf]
        %v995 = vld [vmem:[#allocation5 + $0x180] sm:$0xf]
        %v996 = vld [vmem:[#allocation5 + $0x184] sm:$0xf]
        %v997 = vld [vmem:[#allocation5 + $0x188] sm:$0xf]
        %v998 = vld [vmem:[#allocation5 + $0x18c] sm:$0xf]
        %v999 = vld [vmem:[#allocation5 + $0x190] sm:$0xf]
        %v1000 = vld [vmem:[#allocation5 + $0x194] sm:$0xf]
        %v1001 = vld [vmem:[#allocation5 + $0x198] sm:$0xf]
        %v1002 = vld [vmem:[#allocation5 + $0x19c] sm:$0xf]
        %v1003 = vld [vmem:[#allocation5 + $0x1a0] sm:$0xf]
        %v1004 = vld [vmem:[#allocation5 + $0x1a4] sm:$0xf]
        %v1005 = vld [vmem:[#allocation5 + $0x1a8] sm:$0xf]
        %v1006 = vld [vmem:[#allocation5 + $0x1ac] sm:$0xf]
        %v1007 = vld [vmem:[#allocation5 + $0x1b0] sm:$0xf]
        %v1008 = vld [vmem:[#allocation5 + $0x1b4] sm:$0xf]
        %v1009 = vld [vmem:[#allocation5 + $0x1b8] sm:$0xf]
        %v1010 = vld [vmem:[#allocation5 + $0x1bc] sm:$0xf]
        %v1011 = vld [vmem:[#allocation5 + $0x1c0] sm:$0xf]
        %v1012 = vld [vmem:[#allocation5 + $0x1c4] sm:$0xf]
        %v1013 = vld [vmem:[#allocation5 + $0x1c8] sm:$0xf]
        %v1014 = vld [vmem:[#allocation5 + $0x1cc] sm:$0xf]
        %v1015 = vld [vmem:[#allocation5 + $0x1d0] sm:$0xf]
        %v1016 = vld [vmem:[#allocation5 + $0x1d4] sm:$0xf]
        %v1017 = vld [vmem:[#allocation5 + $0x1d8] sm:$0xf]
        %v1018 = vld [vmem:[#allocation5 + $0x1dc] sm:$0xf]
        %v1019 = vld [vmem:[#allocation5 + $0x1e0] sm:$0xf]
        %v1020 = vld [vmem:[#allocation5 + $0x1e4] sm:$0xf]
        %v1021 = vld [vmem:[#allocation5 + $0x1e8] sm:$0xf]
        %v1022 = vld [vmem:[#allocation5 + $0x1ec] sm:$0xf]
        %v1023 = vld [vmem:[#allocation5 + $0x1f0] sm:$0xf]
        %v1024 = vld [vmem:[#allocation5 + $0x1f4] sm:$0xf]
        %v1025 = vld [vmem:[#allocation5 + $0x1f8] sm:$0xf]
        %v1026 = vld [vmem:[#allocation5 + $0x1fc] sm:$0xf]
        %v1027 = vld [vmem:[#allocation5 + $0x200] sm:$0xf]
        %v1028 = vld [vmem:[#allocation5 + $0x204] sm:$0xf]
        %v1029 = vld [vmem:[#allocation5 + $0x208] sm:$0xf]
        %v1030 = vld [vmem:[#allocation5 + $0x20c] sm:$0xf]
        %v1031 = vld [vmem:[#allocation5 + $0x210] sm:$0xf]
        %v1032 = vld [vmem:[#allocation5 + $0x214] sm:$0xf]
        %v1033 = vld [vmem:[#allocation5 + $0x218] sm:$0xf]
        %v1034 = vld [vmem:[#allocation5 + $0x21c] sm:$0xf]
        %v1035 = vld [vmem:[#allocation5 + $0x220] sm:$0xf]
        %v1036 = vld [vmem:[#allocation5 + $0x224] sm:$0xf]
        %v1037 = vld [vmem:[#allocation5 + $0x228] sm:$0xf]
        %v1038 = vld [vmem:[#allocation5 + $0x22c] sm:$0xf]
        %v1039 = vld [vmem:[#allocation5 + $0x230] sm:$0xf]
        %v1040 = vld [vmem:[#allocation5 + $0x234] sm:$0xf]
        %v1041 = vld [vmem:[#allocation5 + $0x238] sm:$0xf]
        %v1042 = vld [vmem:[#allocation5 + $0x23c] sm:$0xf]
        %v1043 = vld [vmem:[#allocation7] sm:$0x1]
        %v1045 = vlaneseq
        %v1046 = vshrl.u32 %v1045, 7
        %v1047 = vsub.s32 0, %v1046
        %v1048 = vrot.slane %v1043, %v1047
        %v1194 = vunpack.c.l.b16 %v899
        %v1195 = vunpack.c.l.b16 %v900
        %v1196 = vunpack.c.l.b16 %v901
        %v1197 = vunpack.c.l.b16 %v902
        %v1198 = vunpack.c.l.b16 %v903
        %v1199 = vunpack.c.l.b16 %v904
        %v1200 = vunpack.c.l.b16 %v905
        %v1201 = vunpack.c.l.b16 %v906
        %v1202 = vunpack.c.l.b16 %v907
        %v1203 = vunpack.c.l.b16 %v908
        %v1204 = vunpack.c.l.b16 %v909
        %v1205 = vunpack.c.l.b16 %v910
        %v1206 = vunpack.c.l.b16 %v911
        %v1207 = vunpack.c.l.b16 %v912
        %v1208 = vunpack.c.l.b16 %v913
        %v1209 = vunpack.c.l.b16 %v914
        %v1210 = vunpack.c.l.b16 %v915
        %v1211 = vunpack.c.l.b16 %v916
        %v1212 = vunpack.c.l.b16 %v917
        %v1213 = vunpack.c.l.b16 %v918
        %v1214 = vunpack.c.l.b16 %v919
        %v1215 = vunpack.c.l.b16 %v920
        %v1216 = vunpack.c.l.b16 %v921
        %v1217 = vunpack.c.l.b16 %v922
        %v1218 = vunpack.c.l.b16 %v923
        %v1219 = vunpack.c.l.b16 %v924
        %v1220 = vunpack.c.l.b16 %v925
        %v1221 = vunpack.c.l.b16 %v926
        %v1222 = vunpack.c.l.b16 %v927
        %v1223 = vunpack.c.l.b16 %v928
        %v1224 = vunpack.c.l.b16 %v929
        %v1225 = vunpack.c.l.b16 %v930
        %v1226 = vunpack.c.l.b16 %v931
        %v1227 = vunpack.c.l.b16 %v932
        %v1228 = vunpack.c.l.b16 %v933
        %v1229 = vunpack.c.l.b16 %v934
        %v1230 = vunpack.c.l.b16 %v935
        %v1231 = vunpack.c.l.b16 %v936
        %v1232 = vunpack.c.l.b16 %v937
        %v1233 = vunpack.c.l.b16 %v938
        %v1234 = vunpack.c.l.b16 %v939
        %v1235 = vunpack.c.l.b16 %v940
        %v1236 = vunpack.c.l.b16 %v941
        %v1237 = vunpack.c.l.b16 %v942
        %v1238 = vunpack.c.l.b16 %v943
        %v1239 = vunpack.c.l.b16 %v944
        %v1240 = vunpack.c.l.b16 %v945
        %v1241 = vunpack.c.l.b16 %v946
        %v1242 = vunpack.c.l.b16 %v947
        %v1243 = vunpack.c.l.b16 %v948
        %v1244 = vunpack.c.l.b16 %v949
        %v1245 = vunpack.c.l.b16 %v950
        %v1246 = vunpack.c.l.b16 %v951
        %v1247 = vunpack.c.l.b16 %v952
        %v1248 = vunpack.c.l.b16 %v953
        %v1249 = vunpack.c.l.b16 %v954
        %v1250 = vunpack.c.l.b16 %v955
        %v1251 = vunpack.c.l.b16 %v956
        %v1252 = vunpack.c.l.b16 %v957
        %v1253 = vunpack.c.l.b16 %v958
        %v1254 = vunpack.c.l.b16 %v959
        %v1255 = vunpack.c.l.b16 %v960
        %v1256 = vunpack.c.l.b16 %v961
        %v1257 = vunpack.c.l.b16 %v962
        %v1258 = vunpack.c.l.b16 %v963
        %v1259 = vunpack.c.l.b16 %v964
        %v1260 = vunpack.c.l.b16 %v965
        %v1261 = vunpack.c.l.b16 %v966
        %v1262 = vunpack.c.l.b16 %v967
        %v1263 = vunpack.c.l.b16 %v968
        %v1264 = vunpack.c.l.b16 %v969
        %v1265 = vunpack.c.l.b16 %v970
        %v1266 = vunpack.c.l.b16 %v971
        %v1267 = vunpack.c.l.b16 %v972
        %v1268 = vunpack.c.l.b16 %v973
        %v1269 = vunpack.c.l.b16 %v974
        %v1270 = vunpack.c.l.b16 %v975
        %v1271 = vunpack.c.l.b16 %v976
        %v1272 = vunpack.c.l.b16 %v977
        %v1273 = vunpack.c.l.b16 %v978
        %v1274 = vunpack.c.l.b16 %v979
        %v1275 = vunpack.c.l.b16 %v980
        %v1276 = vunpack.c.l.b16 %v981
        %v1277 = vunpack.c.l.b16 %v982
        %v1278 = vunpack.c.l.b16 %v983
        %v1279 = vunpack.c.l.b16 %v984
        %v1280 = vunpack.c.l.b16 %v985
        %v1281 = vunpack.c.l.b16 %v986
        %v1282 = vunpack.c.l.b16 %v987
        %v1283 = vunpack.c.l.b16 %v988
        %v1284 = vunpack.c.l.b16 %v989
        %v1285 = vunpack.c.l.b16 %v990
        %v1286 = vunpack.c.l.b16 %v991
        %v1287 = vunpack.c.l.b16 %v992
        %v1288 = vunpack.c.l.b16 %v993
        %v1289 = vunpack.c.l.b16 %v994
        %v1290 = vunpack.c.l.b16 %v995
        %v1291 = vunpack.c.l.b16 %v996
        %v1292 = vunpack.c.l.b16 %v997
        %v1293 = vunpack.c.l.b16 %v998
        %v1294 = vunpack.c.l.b16 %v999
        %v1295 = vunpack.c.l.b16 %v1000
        %v1296 = vunpack.c.l.b16 %v1001
        %v1297 = vunpack.c.l.b16 %v1002
        %v1298 = vunpack.c.l.b16 %v1003
        %v1299 = vunpack.c.l.b16 %v1004
        %v1300 = vunpack.c.l.b16 %v1005
        %v1301 = vunpack.c.l.b16 %v1006
        %v1302 = vunpack.c.l.b16 %v1007
        %v1303 = vunpack.c.l.b16 %v1008
        %v1304 = vunpack.c.l.b16 %v1009
        %v1305 = vunpack.c.l.b16 %v1010
        %v1306 = vunpack.c.l.b16 %v1011
        %v1307 = vunpack.c.l.b16 %v1012
        %v1308 = vunpack.c.l.b16 %v1013
        %v1309 = vunpack.c.l.b16 %v1014
        %v1310 = vunpack.c.l.b16 %v1015
        %v1311 = vunpack.c.l.b16 %v1016
        %v1312 = vunpack.c.l.b16 %v1017
        %v1313 = vunpack.c.l.b16 %v1018
        %v1314 = vunpack.c.l.b16 %v1019
        %v1315 = vunpack.c.l.b16 %v1020
        %v1316 = vunpack.c.l.b16 %v1021
        %v1317 = vunpack.c.l.b16 %v1022
        %v1318 = vunpack.c.l.b16 %v1023
        %v1319 = vunpack.c.l.b16 %v1024
        %v1320 = vunpack.c.l.b16 %v1025
        %v1321 = vunpack.c.l.b16 %v1026
        %v1322 = vunpack.c.l.b16 %v1027
        %v1323 = vunpack.c.l.b16 %v1028
        %v1324 = vunpack.c.l.b16 %v1029
        %v1325 = vunpack.c.l.b16 %v1030
        %v1326 = vunpack.c.l.b16 %v1031
        %v1327 = vunpack.c.l.b16 %v1032
        %v1328 = vunpack.c.l.b16 %v1033
        %v1329 = vunpack.c.l.b16 %v1034
        %v1330 = vunpack.c.l.b16 %v1035
        %v1331 = vunpack.c.l.b16 %v1036
        %v1332 = vunpack.c.l.b16 %v1037
        %v1333 = vunpack.c.l.b16 %v1038
        %v1334 = vunpack.c.l.b16 %v1039
        %v1335 = vunpack.c.l.b16 %v1040
        %v1336 = vunpack.c.l.b16 %v1041
        %v1337 = vunpack.c.l.b16 %v1042
        %v1338 = vpack.c.b16 %v1195, %v1194
        %v1339 = vpack.c.b16 %v1197, %v1196
        %v1340 = vpack.c.b16 %v1199, %v1198
        %v1341 = vpack.c.b16 %v1201, %v1200
        %v1342 = vpack.c.b16 %v1203, %v1202
        %v1343 = vpack.c.b16 %v1205, %v1204
        %v1344 = vpack.c.b16 %v1207, %v1206
        %v1345 = vpack.c.b16 %v1209, %v1208
        %v1346 = vpack.c.b16 %v1211, %v1210
        %v1347 = vpack.c.b16 %v1213, %v1212
        %v1348 = vpack.c.b16 %v1215, %v1214
        %v1349 = vpack.c.b16 %v1217, %v1216
        %v1350 = vpack.c.b16 %v1219, %v1218
        %v1351 = vpack.c.b16 %v1221, %v1220
        %v1352 = vpack.c.b16 %v1223, %v1222
        %v1353 = vpack.c.b16 %v1225, %v1224
        %v1354 = vpack.c.b16 %v1227, %v1226
        %v1355 = vpack.c.b16 %v1229, %v1228
        %v1356 = vpack.c.b16 %v1231, %v1230
        %v1357 = vpack.c.b16 %v1233, %v1232
        %v1358 = vpack.c.b16 %v1235, %v1234
        %v1359 = vpack.c.b16 %v1237, %v1236
        %v1360 = vpack.c.b16 %v1239, %v1238
        %v1361 = vpack.c.b16 %v1241, %v1240
        %v1362 = vpack.c.b16 %v1243, %v1242
        %v1363 = vpack.c.b16 %v1245, %v1244
        %v1364 = vpack.c.b16 %v1247, %v1246
        %v1365 = vpack.c.b16 %v1249, %v1248
        %v1366 = vpack.c.b16 %v1251, %v1250
        %v1367 = vpack.c.b16 %v1253, %v1252
        %v1368 = vpack.c.b16 %v1255, %v1254
        %v1369 = vpack.c.b16 %v1257, %v1256
        %v1370 = vpack.c.b16 %v1259, %v1258
        %v1371 = vpack.c.b16 %v1261, %v1260
        %v1372 = vpack.c.b16 %v1263, %v1262
        %v1373 = vpack.c.b16 %v1265, %v1264
        %v1374 = vpack.c.b16 %v1267, %v1266
        %v1375 = vpack.c.b16 %v1269, %v1268
        %v1376 = vpack.c.b16 %v1271, %v1270
        %v1377 = vpack.c.b16 %v1273, %v1272
        %v1378 = vpack.c.b16 %v1275, %v1274
        %v1379 = vpack.c.b16 %v1277, %v1276
        %v1380 = vpack.c.b16 %v1279, %v1278
        %v1381 = vpack.c.b16 %v1281, %v1280
        %v1382 = vpack.c.b16 %v1283, %v1282
        %v1383 = vpack.c.b16 %v1285, %v1284
        %v1384 = vpack.c.b16 %v1287, %v1286
        %v1385 = vpack.c.b16 %v1289, %v1288
        %v1386 = vpack.c.b16 %v1291, %v1290
        %v1387 = vpack.c.b16 %v1293, %v1292
        %v1388 = vpack.c.b16 %v1295, %v1294
        %v1389 = vpack.c.b16 %v1297, %v1296
        %v1390 = vpack.c.b16 %v1299, %v1298
        %v1391 = vpack.c.b16 %v1301, %v1300
        %v1392 = vpack.c.b16 %v1303, %v1302
        %v1393 = vpack.c.b16 %v1305, %v1304
        %v1394 = vpack.c.b16 %v1307, %v1306
        %v1395 = vpack.c.b16 %v1309, %v1308
        %v1396 = vpack.c.b16 %v1311, %v1310
        %v1397 = vpack.c.b16 %v1313, %v1312
        %v1398 = vpack.c.b16 %v1315, %v1314
        %v1399 = vpack.c.b16 %v1317, %v1316
        %v1400 = vpack.c.b16 %v1319, %v1318
        %v1401 = vpack.c.b16 %v1321, %v1320
        %v1402 = vpack.c.b16 %v1323, %v1322
        %v1403 = vpack.c.b16 %v1325, %v1324
        %v1404 = vpack.c.b16 %v1327, %v1326
        %v1405 = vpack.c.b16 %v1329, %v1328
        %v1406 = vpack.c.b16 %v1331, %v1330
        %v1407 = vpack.c.b16 %v1333, %v1332
        %v1408 = vpack.c.b16 %v1335, %v1334
        %v1409 = vpack.c.b16 %v1337, %v1336
        %1482 = vmatprep.subr.bf16.mxu0 0
        %1483 = vmatpush1.bf16.msra.mxu0 %v1338
        %1484 = vmatprep.subr.bf16.mxu0 0
        %1485 = vmatpush1.bf16.msra.mxu0 %v1339
        %1486 = vmatprep.subr.bf16.mxu0 0
        %1487 = vmatpush1.bf16.msra.mxu0 %v1340
        %1488 = vmatprep.subr.bf16.mxu0 0
        %1489 = vmatpush1.bf16.msra.mxu0 %v1341
        %1490 = vmatprep.subr.bf16.mxu0 0
        %1491 = vmatpush1.bf16.msra.mxu0 %v1342
        %1492 = vmatprep.subr.bf16.mxu0 0
        %1493 = vmatpush1.bf16.msra.mxu0 %v1343
        %1494 = vmatprep.subr.bf16.mxu0 0
        %1495 = vmatpush1.bf16.msra.mxu0 %v1344
        %1496 = vmatprep.subr.bf16.mxu0 0
        %1497 = vmatpush1.bf16.msra.mxu0 %v1345
        %1498 = vmatprep.subr.bf16.mxu0 0
        %1499 = vmatpush1.bf16.msra.mxu0 %v1346
        %1500 = vmatprep.subr.bf16.mxu0 0
        %1501 = vmatpush1.bf16.msra.mxu0 %v1347
        %1502 = vmatprep.subr.bf16.mxu0 0
        %1503 = vmatpush1.bf16.msra.mxu0 %v1348
        %1504 = vmatprep.subr.bf16.mxu0 0
        %1505 = vmatpush1.bf16.msra.mxu0 %v1349
        %1506 = vmatprep.subr.bf16.mxu0 0
        %1507 = vmatpush1.bf16.msra.mxu0 %v1350
        %1508 = vmatprep.subr.bf16.mxu0 0
        %1509 = vmatpush1.bf16.msra.mxu0 %v1351
        %1510 = vmatprep.subr.bf16.mxu0 0
        %1511 = vmatpush1.bf16.msra.mxu0 %v1352
        %1512 = vmatprep.subr.bf16.mxu0 0
        %1513 = vmatpush1.bf16.msra.mxu0 %v1353
        %1514 = vmatprep.mubr.bf16.mxu0 %v551
        %1515 = vmatmul.mubr.bf16.gmra.mrb[0].mxu0 %v449
        %v1516 = vpop.f32.mrb[0].mxu0
        %v1517 = vadd.f32 %v1048, %v1516
        %v1518 = vpop.f32.mrb[0].mxu0
        %v1519 = vpop.f32.mrb[0].mxu0
        %v1520 = vadd.f32 %v1048, %v1519
        %v1521 = vpop.f32.mrb[0].mxu0
        %1522 = vmatprep.mubr.bf16.mxu0 %v563
        %1523 = vmatmul.mubr.bf16.gmra.mrb[0].mxu0 %v450
        %v1524 = vpop.f32.mrb[0].mxu0
        %v1525 = vadd.f32 %v1048, %v1524
        %v1526 = vpop.f32.mrb[0].mxu0
        %v1527 = vpop.f32.mrb[0].mxu0
        %v1528 = vadd.f32 %v1048, %v1527
        %v1529 = vpop.f32.mrb[0].mxu0
        %1530 = vmatprep.mubr.bf16.mxu0 %v575
        %1531 = vmatmul.mubr.bf16.gmra.mrb[0].mxu0 %v451
        %v1532 = vpop.f32.mrb[0].mxu0
        %v1533 = vadd.f32 %v1048, %v1532
        %v1534 = vpop.f32.mrb[0].mxu0
        %v1535 = vpop.f32.mrb[0].mxu0
        %v1536 = vadd.f32 %v1048, %v1535
        %v1537 = vpop.f32.mrb[0].mxu0
        %1538 = vmatprep.mubr.bf16.mxu0 %v587
        %1539 = vmatmul.mubr.bf16.gmra.mrb[0].mxu0 %v452
        %v1540 = vpop.f32.mrb[0].mxu0
        %v1541 = vadd.f32 %v1048, %v1540
        %v1542 = vpop.f32.mrb[0].mxu0
        %v1543 = vpop.f32.mrb[0].mxu0
        %v1544 = vadd.f32 %v1048, %v1543
        %v1545 = vpop.f32.mrb[0].mxu0
        %1546 = vmatprep.mubr.bf16.mxu0 %v599
        %1547 = vmatmul.mubr.bf16.gmra.mrb[0].mxu0 %v453
        %v1548 = vpop.f32.mrb[0].mxu0
        %v1549 = vadd.f32 %v1048, %v1548
        %v1550 = vpop.f32.mrb[0].mxu0
        %v1551 = vpop.f32.mrb[0].mxu0
        %v1552 = vadd.f32 %v1048, %v1551
        %v1553 = vpop.f32.mrb[0].mxu0
        %1554 = vmatprep.mubr.bf16.mxu0 %v611
        %1555 = vmatmul.mubr.bf16.gmra.mrb[0].mxu0 %v454
        %v1556 = vpop.f32.mrb[0].mxu0
        %v1557 = vadd.f32 %v1048, %v1556
        %v1558 = vpop.f32.mrb[0].mxu0
        %v1559 = vpop.f32.mrb[0].mxu0
        %v1560 = vadd.f32 %v1048, %v1559
        %v1561 = vpop.f32.mrb[0].mxu0
        %1562 = vmatprep.mubr.bf16.mxu0 %v623
        %1563 = vmatmul.mubr.bf16.gmra.mrb[0].mxu0 %v455
        %v1564 = vpop.f32.mrb[0].mxu0
        %v1565 = vadd.f32 %v1048, %v1564
        %v1566 = vpop.f32.mrb[0].mxu0
        %v1567 = vpop.f32.mrb[0].mxu0
        %v1568 = vadd.f32 %v1048, %v1567
        %v1569 = vpop.f32.mrb[0].mxu0
        %1570 = vmatprep.mubr.bf16.mxu0 %v635
        %1571 = vmatmul.mubr.bf16.gmra.mrb[0].mxu0 %v456
        %v1572 = vpop.f32.mrb[0].mxu0
        %v1573 = vadd.f32 %v1048, %v1572
        %v1574 = vpop.f32.mrb[0].mxu0
        %v1575 = vpop.f32.mrb[0].mxu0
        %v1576 = vadd.f32 %v1048, %v1575
        %v1577 = vpop.f32.mrb[0].mxu0
        %1578 = vmatprep.mubr.bf16.mxu0 %v647
        %1579 = vmatmul.mubr.bf16.gmra.mrb[0].mxu0 %v457
        %v1580 = vpop.f32.mrb[0].mxu0
        %v1581 = vadd.f32 %v1048, %v1580
        %v1582 = vpop.f32.mrb[0].mxu0
        %v1583 = vpop.f32.mrb[0].mxu0
        %v1584 = vadd.f32 %v1048, %v1583
        %v1585 = vpop.f32.mrb[0].mxu0
        %1586 = vmatprep.mubr.bf16.mxu0 %v659
        %1587 = vmatmul.mubr.bf16.gmra.mrb[0].mxu0 %v458
        %v1588 = vpop.f32.mrb[0].mxu0
        %v1589 = vadd.f32 %v1048, %v1588
        %v1590 = vpop.f32.mrb[0].mxu0
        %v1591 = vpop.f32.mrb[0].mxu0
        %v1592 = vadd.f32 %v1048, %v1591
        %v1593 = vpop.f32.mrb[0].mxu0
        %1594 = vmatprep.mubr.bf16.mxu0 %v671
        %1595 = vmatmul.mubr.bf16.gmra.mrb[0].mxu0 %v459
        %v1596 = vpop.f32.mrb[0].mxu0
        %v1597 = vadd.f32 %v1048, %v1596
        %v1598 = vpop.f32.mrb[0].mxu0
        %v1599 = vpop.f32.mrb[0].mxu0
        %v1600 = vadd.f32 %v1048, %v1599
        %v1601 = vpop.f32.mrb[0].mxu0
        %1602 = vmatprep.mubr.bf16.mxu0 %v683
        %1603 = vmatmul.mubr.bf16.gmra.mrb[0].mxu0 %v460
        %v1604 = vpop.f32.mrb[0].mxu0
        %v1605 = vadd.f32 %v1048, %v1604
        %v1606 = vpop.f32.mrb[0].mxu0
        %v1607 = vpop.f32.mrb[0].mxu0
        %v1608 = vadd.f32 %v1048, %v1607
        %v1609 = vpop.f32.mrb[0].mxu0
        %1610 = vmatprep.mubr.bf16.mxu0 %v695
        %1611 = vmatmul.mubr.bf16.gmra.mrb[0].mxu0 %v461
        %v1612 = vpop.f32.mrb[0].mxu0
        %v1613 = vadd.f32 %v1048, %v1612
        %v1614 = vpop.f32.mrb[0].mxu0
        %v1615 = vpop.f32.mrb[0].mxu0
        %v1616 = vadd.f32 %v1048, %v1615
        %v1617 = vpop.f32.mrb[0].mxu0
        %1618 = vmatprep.mubr.bf16.mxu0 %v707
        %1619 = vmatmul.mubr.bf16.gmra.mrb[0].mxu0 %v462
        %v1620 = vpop.f32.mrb[0].mxu0
        %v1621 = vadd.f32 %v1048, %v1620
        %v1622 = vpop.f32.mrb[0].mxu0
        %v1623 = vpop.f32.mrb[0].mxu0
        %v1624 = vadd.f32 %v1048, %v1623
        %v1625 = vpop.f32.mrb[0].mxu0
        %1626 = vmatprep.mubr.bf16.mxu0 %v719
        %1627 = vmatmul.mubr.bf16.gmra.mrb[0].mxu0 %v463
        %v1628 = vpop.f32.mrb[0].mxu0
        %v1629 = vadd.f32 %v1048, %v1628
        %v1630 = vpop.f32.mrb[0].mxu0
        %v1631 = vpop.f32.mrb[0].mxu0
        %v1632 = vadd.f32 %v1048, %v1631
        %v1633 = vpop.f32.mrb[0].mxu0
        %1634 = vmatprep.mubr.bf16.mxu0 %v731
        %1635 = vmatmul.mubr.bf16.gmra.mrb[0].mxu0 %v464
        %v1636 = vpop.f32.mrb[0].mxu0
        %v1637 = vadd.f32 %v1048, %v1636
        %v1638 = vpop.f32.mrb[0].mxu0
        %v1639 = vpop.f32.mrb[0].mxu0
        %v1640 = vadd.f32 %v1048, %v1639
        %v1641 = vpop.f32.mrb[0].mxu0
        %1642 = vmatprep.mubr.bf16.mxu0 %v743
        %1643 = vmatmul.mubr.bf16.gmra.mrb[0].mxu0 %v465
        %v1644 = vpop.f32.mrb[0].mxu0
        %v1645 = vadd.f32 %v1048, %v1644
        %v1646 = vpop.f32.mrb[0].mxu0
        %v1647 = vpop.f32.mrb[0].mxu0
        %v1648 = vadd.f32 %v1048, %v1647
        %v1649 = vpop.f32.mrb[0].mxu0
        %1650 = vmatprep.mubr.bf16.mxu0 %v755
        %1651 = vmatmul.mubr.bf16.gmra.mrb[0].mxu0 %v466
        %v1652 = vpop.f32.mrb[0].mxu0
        %v1653 = vadd.f32 %v1048, %v1652
        %v1654 = vpop.f32.mrb[0].mxu0
        %v1655 = vpop.f32.mrb[0].mxu0
        %v1656 = vadd.f32 %v1048, %v1655
        %v1657 = vpop.f32.mrb[0].mxu0
        %1658 = vdwg.mxu0
        %1659 = vmatprep.subr.bf16.mxu0 0
        %1660 = vmatpush1.bf16.msra.mxu0 %v1354
        %1661 = vmatprep.subr.bf16.mxu0 0
        %1662 = vmatpush1.bf16.msra.mxu0 %v1355
        %1663 = vmatprep.subr.bf16.mxu0 0
        %1664 = vmatpush1.bf16.msra.mxu0 %v1356
        %1665 = vmatprep.subr.bf16.mxu0 0
        %1666 = vmatpush1.bf16.msra.mxu0 %v1357
        %1667 = vmatprep.subr.bf16.mxu0 0
        %1668 = vmatpush1.bf16.msra.mxu0 %v1358
        %1669 = vmatprep.subr.bf16.mxu0 0
        %1670 = vmatpush1.bf16.msra.mxu0 %v1359
        %1671 = vmatprep.subr.bf16.mxu0 0
        %1672 = vmatpush1.bf16.msra.mxu0 %v1360
        %1673 = vmatprep.subr.bf16.mxu0 0
        %1674 = vmatpush1.bf16.msra.mxu0 %v1361
        %1675 = vmatprep.subr.bf16.mxu0 0
        %1676 = vmatpush1.bf16.msra.mxu0 %v1362
        %1677 = vmatprep.subr.bf16.mxu0 0
        %1678 = vmatpush1.bf16.msra.mxu0 %v1363
        %1679 = vmatprep.subr.bf16.mxu0 0
        %1680 = vmatpush1.bf16.msra.mxu0 %v1364
        %1681 = vmatprep.subr.bf16.mxu0 0
        %1682 = vmatpush1.bf16.msra.mxu0 %v1365
        %1683 = vmatprep.subr.bf16.mxu0 0
        %1684 = vmatpush1.bf16.msra.mxu0 %v1366
        %1685 = vmatprep.subr.bf16.mxu0 0
        %1686 = vmatpush1.bf16.msra.mxu0 %v1367
        %1687 = vmatprep.subr.bf16.mxu0 0
        %1688 = vmatpush1.bf16.msra.mxu0 %v1368
        %1689 = vmatprep.subr.bf16.mxu0 0
        %1690 = vmatpush1.bf16.msra.mxu0 %v1369
        %1691 = vmatprep.mubr.bf16.mxu0 %v450
        %1692 = vmatmul.mubr.bf16.gmra.mrb[0].mxu0 %v777
        %v1693 = vpop.f32.mrb[0].mxu0
        %v1694 = vadd.f32 %v1517, %v1693
        %v1695 = vpop.f32.mrb[0].mxu0
        %v1696 = vpop.f32.mrb[0].mxu0
        %v1697 = vadd.f32 %v1520, %v1696
        %v1698 = vpop.f32.mrb[0].mxu0
        %1699 = vmatprep.mubr.bf16.mxu0 %v451
        %1700 = vmatmul.mubr.bf16.gmra.mrb[0].mxu0 %v780
        %v1701 = vpop.f32.mrb[0].mxu0
        %v1702 = vadd.f32 %v1525, %v1701
        %v1703 = vpop.f32.mrb[0].mxu0
        %v1704 = vpop.f32.mrb[0].mxu0
        %v1705 = vadd.f32 %v1528, %v1704
        %v1706 = vpop.f32.mrb[0].mxu0
        %1707 = vmatprep.mubr.bf16.mxu0 %v452
        %1708 = vmatmul.mubr.bf16.gmra.mrb[0].mxu0 %v783
        %v1709 = vpop.f32.mrb[0].mxu0
        %v1710 = vadd.f32 %v1533, %v1709
        %v1711 = vpop.f32.mrb[0].mxu0
        %v1712 = vpop.f32.mrb[0].mxu0
        %v1713 = vadd.f32 %v1536, %v1712
        %v1714 = vpop.f32.mrb[0].mxu0
        %1715 = vmatprep.mubr.bf16.mxu0 %v453
        %1716 = vmatmul.mubr.bf16.gmra.mrb[0].mxu0 %v786
        %v1717 = vpop.f32.mrb[0].mxu0
        %v1718 = vadd.f32 %v1541, %v1717
        %v1719 = vpop.f32.mrb[0].mxu0
        %v1720 = vpop.f32.mrb[0].mxu0
        %v1721 = vadd.f32 %v1544, %v1720
        %v1722 = vpop.f32.mrb[0].mxu0
        %1723 = vmatprep.mubr.bf16.mxu0 %v454
        %1724 = vmatmul.mubr.bf16.gmra.mrb[0].mxu0 %v789
        %v1725 = vpop.f32.mrb[0].mxu0
        %v1726 = vadd.f32 %v1549, %v1725
        %v1727 = vpop.f32.mrb[0].mxu0
        %v1728 = vpop.f32.mrb[0].mxu0
        %v1729 = vadd.f32 %v1552, %v1728
        %v1730 = vpop.f32.mrb[0].mxu0
        %1731 = vmatprep.mubr.bf16.mxu0 %v455
        %1732 = vmatmul.mubr.bf16.gmra.mrb[0].mxu0 %v792
        %v1733 = vpop.f32.mrb[0].mxu0
        %v1734 = vadd.f32 %v1557, %v1733
        %v1735 = vpop.f32.mrb[0].mxu0
        %v1736 = vpop.f32.mrb[0].mxu0
        %v1737 = vadd.f32 %v1560, %v1736
        %v1738 = vpop.f32.mrb[0].mxu0
        %1739 = vmatprep.mubr.bf16.mxu0 %v456
        %1740 = vmatmul.mubr.bf16.gmra.mrb[0].mxu0 %v795
        %v1741 = vpop.f32.mrb[0].mxu0
        %v1742 = vadd.f32 %v1565, %v1741
        %v1743 = vpop.f32.mrb[0].mxu0
        %v1744 = vpop.f32.mrb[0].mxu0
        %v1745 = vadd.f32 %v1568, %v1744
        %v1746 = vpop.f32.mrb[0].mxu0
        %1747 = vmatprep.mubr.bf16.mxu0 %v457
        %1748 = vmatmul.mubr.bf16.gmra.mrb[0].mxu0 %v798
        %v1749 = vpop.f32.mrb[0].mxu0
        %v1750 = vadd.f32 %v1573, %v1749
        %v1751 = vpop.f32.mrb[0].mxu0
        %v1752 = vpop.f32.mrb[0].mxu0
        %v1753 = vadd.f32 %v1576, %v1752
        %v1754 = vpop.f32.mrb[0].mxu0
        %1755 = vmatprep.mubr.bf16.mxu0 %v458
        %1756 = vmatmul.mubr.bf16.gmra.mrb[0].mxu0 %v801
        %v1757 = vpop.f32.mrb[0].mxu0
        %v1758 = vadd.f32 %v1581, %v1757
        %v1759 = vpop.f32.mrb[0].mxu0
        %v1760 = vpop.f32.mrb[0].mxu0
        %v1761 = vadd.f32 %v1584, %v1760
        %v1762 = vpop.f32.mrb[0].mxu0
        %1763 = vmatprep.mubr.bf16.mxu0 %v459
        %1764 = vmatmul.mubr.bf16.gmra.mrb[0].mxu0 %v804
        %v1765 = vpop.f32.mrb[0].mxu0
        %v1766 = vadd.f32 %v1589, %v1765
        %v1767 = vpop.f32.mrb[0].mxu0
        %v1768 = vpop.f32.mrb[0].mxu0
        %v1769 = vadd.f32 %v1592, %v1768
        %v1770 = vpop.f32.mrb[0].mxu0
        %1771 = vmatprep.mubr.bf16.mxu0 %v460
        %1772 = vmatmul.mubr.bf16.gmra.mrb[0].mxu0 %v807
        %v1773 = vpop.f32.mrb[0].mxu0
        %v1774 = vadd.f32 %v1597, %v1773
        %v1775 = vpop.f32.mrb[0].mxu0
        %v1776 = vpop.f32.mrb[0].mxu0
        %v1777 = vadd.f32 %v1600, %v1776
        %v1778 = vpop.f32.mrb[0].mxu0
        %1779 = vmatprep.mubr.bf16.mxu0 %v461
        %1780 = vmatmul.mubr.bf16.gmra.mrb[0].mxu0 %v810
        %v1781 = vpop.f32.mrb[0].mxu0
        %v1782 = vadd.f32 %v1605, %v1781
        %v1783 = vpop.f32.mrb[0].mxu0
        %v1784 = vpop.f32.mrb[0].mxu0
        %v1785 = vadd.f32 %v1608, %v1784
        %v1786 = vpop.f32.mrb[0].mxu0
        %1787 = vmatprep.mubr.bf16.mxu0 %v462
        %1788 = vmatmul.mubr.bf16.gmra.mrb[0].mxu0 %v813
        %v1789 = vpop.f32.mrb[0].mxu0
        %v1790 = vadd.f32 %v1613, %v1789
        %v1791 = vpop.f32.mrb[0].mxu0
        %v1792 = vpop.f32.mrb[0].mxu0
        %v1793 = vadd.f32 %v1616, %v1792
        %v1794 = vpop.f32.mrb[0].mxu0
        %1795 = vmatprep.mubr.bf16.mxu0 %v463
        %1796 = vmatmul.mubr.bf16.gmra.mrb[0].mxu0 %v816
        %v1797 = vpop.f32.mrb[0].mxu0
        %v1798 = vadd.f32 %v1621, %v1797
        %v1799 = vpop.f32.mrb[0].mxu0
        %v1800 = vpop.f32.mrb[0].mxu0
        %v1801 = vadd.f32 %v1624, %v1800
        %v1802 = vpop.f32.mrb[0].mxu0
        %1803 = vmatprep.mubr.bf16.mxu0 %v464
        %1804 = vmatmul.mubr.bf16.gmra.mrb[0].mxu0 %v819
        %v1805 = vpop.f32.mrb[0].mxu0
        %v1806 = vadd.f32 %v1629, %v1805
        %v1807 = vpop.f32.mrb[0].mxu0
        %v1808 = vpop.f32.mrb[0].mxu0
        %v1809 = vadd.f32 %v1632, %v1808
        %v1810 = vpop.f32.mrb[0].mxu0
        %1811 = vmatprep.mubr.bf16.mxu0 %v465
        %1812 = vmatmul.mubr.bf16.gmra.mrb[0].mxu0 %v822
        %v1813 = vpop.f32.mrb[0].mxu0
        %v1814 = vadd.f32 %v1637, %v1813
        %v1815 = vpop.f32.mrb[0].mxu0
        %v1816 = vpop.f32.mrb[0].mxu0
        %v1817 = vadd.f32 %v1640, %v1816
        %v1818 = vpop.f32.mrb[0].mxu0
        %1819 = vmatprep.mubr.bf16.mxu0 %v466
        %1820 = vmatmul.mubr.bf16.gmra.mrb[0].mxu0 %v825
        %v1821 = vpop.f32.mrb[0].mxu0
        %v1822 = vadd.f32 %v1645, %v1821
        %v1823 = vpop.f32.mrb[0].mxu0
        %v1824 = vpop.f32.mrb[0].mxu0
        %v1825 = vadd.f32 %v1648, %v1824
        %v1826 = vpop.f32.mrb[0].mxu0
        %1827 = vmatprep.mubr.bf16.mxu0 %v851
        %1828 = vmatmul.mubr.bf16.gmra.mrb[0].mxu0 %v828
        %v1829 = vpop.f32.mrb[0].mxu0
        %v1830 = vadd.f32 %v1653, %v1829
        %v1831 = vpop.f32.mrb[0].mxu0
        %v1832 = vpop.f32.mrb[0].mxu0
        %v1833 = vadd.f32 %v1656, %v1832
        %v1834 = vpop.f32.mrb[0].mxu0
        %1835 = vdwg.mxu0
        %1836 = vmatprep.subr.bf16.mxu0 0
        %1837 = vmatpush1.bf16.msra.mxu0 %v1370
        %1838 = vmatprep.subr.bf16.mxu0 0
        %1839 = vmatpush1.bf16.msra.mxu0 %v1371
        %1840 = vmatprep.subr.bf16.mxu0 0
        %1841 = vmatpush1.bf16.msra.mxu0 %v1372
        %1842 = vmatprep.subr.bf16.mxu0 0
        %1843 = vmatpush1.bf16.msra.mxu0 %v1373
        %1844 = vmatprep.subr.bf16.mxu0 0
        %1845 = vmatpush1.bf16.msra.mxu0 %v1374
        %1846 = vmatprep.subr.bf16.mxu0 0
        %1847 = vmatpush1.bf16.msra.mxu0 %v1375
        %1848 = vmatprep.subr.bf16.mxu0 0
        %1849 = vmatpush1.bf16.msra.mxu0 %v1376
        %1850 = vmatprep.subr.bf16.mxu0 0
        %1851 = vmatpush1.bf16.msra.mxu0 %v1377
        %1852 = vmatprep.subr.bf16.mxu0 0
        %1853 = vmatpush1.bf16.msra.mxu0 %v1378
        %1854 = vmatprep.subr.bf16.mxu0 0
        %1855 = vmatpush1.bf16.msra.mxu0 %v1379
        %1856 = vmatprep.subr.bf16.mxu0 0
        %1857 = vmatpush1.bf16.msra.mxu0 %v1380
        %1858 = vmatprep.subr.bf16.mxu0 0
        %1859 = vmatpush1.bf16.msra.mxu0 %v1381
        %1860 = vmatprep.subr.bf16.mxu0 0
        %1861 = vmatpush1.bf16.msra.mxu0 %v1382
        %1862 = vmatprep.subr.bf16.mxu0 0
        %1863 = vmatpush1.bf16.msra.mxu0 %v1383
        %1864 = vmatprep.subr.bf16.mxu0 0
        %1865 = vmatpush1.bf16.msra.mxu0 %v1384
        %1866 = vmatprep.subr.bf16.mxu0 0
        %1867 = vmatpush1.bf16.msra.mxu0 %v1385
        %1868 = vmatprep.mubr.bf16.mxu0 %v780
        %1869 = vmatmul.mubr.bf16.gmra.mrb[0].mxu0 %v563
        %v1870 = vpop.f32.mrb[0].mxu0
        %v1871 = vadd.f32 %v1694, %v1870
        %v1872 = vpop.f32.mrb[0].mxu0
        %v1873 = vpop.f32.mrb[0].mxu0
        %v1874 = vadd.f32 %v1697, %v1873
        %v1875 = vpop.f32.mrb[0].mxu0
        %1876 = vmatprep.mubr.bf16.mxu0 %v783
        %1877 = vmatmul.mubr.bf16.gmra.mrb[0].mxu0 %v575
        %v1878 = vpop.f32.mrb[0].mxu0
        %v1879 = vadd.f32 %v1702, %v1878
        %v1880 = vpop.f32.mrb[0].mxu0
        %v1881 = vpop.f32.mrb[0].mxu0
        %v1882 = vadd.f32 %v1705, %v1881
        %v1883 = vpop.f32.mrb[0].mxu0
        %1884 = vmatprep.mubr.bf16.mxu0 %v786
        %1885 = vmatmul.mubr.bf16.gmra.mrb[0].mxu0 %v587
        %v1886 = vpop.f32.mrb[0].mxu0
        %v1887 = vadd.f32 %v1710, %v1886
        %v1888 = vpop.f32.mrb[0].mxu0
        %v1889 = vpop.f32.mrb[0].mxu0
        %v1890 = vadd.f32 %v1713, %v1889
        %v1891 = vpop.f32.mrb[0].mxu0
        %1892 = vmatprep.mubr.bf16.mxu0 %v789
        %1893 = vmatmul.mubr.bf16.gmra.mrb[0].mxu0 %v599
        %v1894 = vpop.f32.mrb[0].mxu0
        %v1895 = vadd.f32 %v1718, %v1894
        %v1896 = vpop.f32.mrb[0].mxu0
        %v1897 = vpop.f32.mrb[0].mxu0
        %v1898 = vadd.f32 %v1721, %v1897
        %v1899 = vpop.f32.mrb[0].mxu0
        %1900 = vmatprep.mubr.bf16.mxu0 %v792
        %1901 = vmatmul.mubr.bf16.gmra.mrb[0].mxu0 %v611
        %v1902 = vpop.f32.mrb[0].mxu0
        %v1903 = vadd.f32 %v1726, %v1902
        %v1904 = vpop.f32.mrb[0].mxu0
        %v1905 = vpop.f32.mrb[0].mxu0
        %v1906 = vadd.f32 %v1729, %v1905
        %v1907 = vpop.f32.mrb[0].mxu0
        %1908 = vmatprep.mubr.bf16.mxu0 %v795
        %1909 = vmatmul.mubr.bf16.gmra.mrb[0].mxu0 %v623
        %v1910 = vpop.f32.mrb[0].mxu0
        %v1911 = vadd.f32 %v1734, %v1910
        %v1912 = vpop.f32.mrb[0].mxu0
        %v1913 = vpop.f32.mrb[0].mxu0
        %v1914 = vadd.f32 %v1737, %v1913
        %v1915 = vpop.f32.mrb[0].mxu0
        %1916 = vmatprep.mubr.bf16.mxu0 %v798
        %1917 = vmatmul.mubr.bf16.gmra.mrb[0].mxu0 %v635
        %v1918 = vpop.f32.mrb[0].mxu0
        %v1919 = vadd.f32 %v1742, %v1918
        %v1920 = vpop.f32.mrb[0].mxu0
        %v1921 = vpop.f32.mrb[0].mxu0
        %v1922 = vadd.f32 %v1745, %v1921
        %v1923 = vpop.f32.mrb[0].mxu0
        %1924 = vmatprep.mubr.bf16.mxu0 %v801
        %1925 = vmatmul.mubr.bf16.gmra.mrb[0].mxu0 %v647
        %v1926 = vpop.f32.mrb[0].mxu0
        %v1927 = vadd.f32 %v1750, %v1926
        %v1928 = vpop.f32.mrb[0].mxu0
        %v1929 = vpop.f32.mrb[0].mxu0
        %v1930 = vadd.f32 %v1753, %v1929
        %v1931 = vpop.f32.mrb[0].mxu0
        %1932 = vmatprep.mubr.bf16.mxu0 %v804
        %1933 = vmatmul.mubr.bf16.gmra.mrb[0].mxu0 %v659
        %v1934 = vpop.f32.mrb[0].mxu0
        %v1935 = vadd.f32 %v1758, %v1934
        %v1936 = vpop.f32.mrb[0].mxu0
        %v1937 = vpop.f32.mrb[0].mxu0
        %v1938 = vadd.f32 %v1761, %v1937
        %v1939 = vpop.f32.mrb[0].mxu0
        %1940 = vmatprep.mubr.bf16.mxu0 %v807
        %1941 = vmatmul.mubr.bf16.gmra.mrb[0].mxu0 %v671
        %v1942 = vpop.f32.mrb[0].mxu0
        %v1943 = vadd.f32 %v1766, %v1942
        %v1944 = vpop.f32.mrb[0].mxu0
        %v1945 = vpop.f32.mrb[0].mxu0
        %v1946 = vadd.f32 %v1769, %v1945
        %v1947 = vpop.f32.mrb[0].mxu0
        %1948 = vmatprep.mubr.bf16.mxu0 %v810
        %1949 = vmatmul.mubr.bf16.gmra.mrb[0].mxu0 %v683
        %v1950 = vpop.f32.mrb[0].mxu0
        %v1951 = vadd.f32 %v1774, %v1950
        %v1952 = vpop.f32.mrb[0].mxu0
        %v1953 = vpop.f32.mrb[0].mxu0
        %v1954 = vadd.f32 %v1777, %v1953
        %v1955 = vpop.f32.mrb[0].mxu0
        %1956 = vmatprep.mubr.bf16.mxu0 %v813
        %1957 = vmatmul.mubr.bf16.gmra.mrb[0].mxu0 %v695
        %v1958 = vpop.f32.mrb[0].mxu0
        %v1959 = vadd.f32 %v1782, %v1958
        %v1960 = vpop.f32.mrb[0].mxu0
        %v1961 = vpop.f32.mrb[0].mxu0
        %v1962 = vadd.f32 %v1785, %v1961
        %v1963 = vpop.f32.mrb[0].mxu0
        %1964 = vmatprep.mubr.bf16.mxu0 %v816
        %1965 = vmatmul.mubr.bf16.gmra.mrb[0].mxu0 %v707
        %v1966 = vpop.f32.mrb[0].mxu0
        %v1967 = vadd.f32 %v1790, %v1966
        %v1968 = vpop.f32.mrb[0].mxu0
        %v1969 = vpop.f32.mrb[0].mxu0
        %v1970 = vadd.f32 %v1793, %v1969
        %v1971 = vpop.f32.mrb[0].mxu0
        %1972 = vmatprep.mubr.bf16.mxu0 %v819
        %1973 = vmatmul.mubr.bf16.gmra.mrb[0].mxu0 %v719
        %v1974 = vpop.f32.mrb[0].mxu0
        %v1975 = vadd.f32 %v1798, %v1974
        %v1976 = vpop.f32.mrb[0].mxu0
        %v1977 = vpop.f32.mrb[0].mxu0
        %v1978 = vadd.f32 %v1801, %v1977
        %v1979 = vpop.f32.mrb[0].mxu0
        %1980 = vmatprep.mubr.bf16.mxu0 %v822
        %1981 = vmatmul.mubr.bf16.gmra.mrb[0].mxu0 %v731
        %v1982 = vpop.f32.mrb[0].mxu0
        %v1983 = vadd.f32 %v1806, %v1982
        %v1984 = vpop.f32.mrb[0].mxu0
        %v1985 = vpop.f32.mrb[0].mxu0
        %v1986 = vadd.f32 %v1809, %v1985
        %v1987 = vpop.f32.mrb[0].mxu0
        %1988 = vmatprep.mubr.bf16.mxu0 %v825
        %1989 = vmatmul.mubr.bf16.gmra.mrb[0].mxu0 %v743
        %v1990 = vpop.f32.mrb[0].mxu0
        %v1991 = vadd.f32 %v1814, %v1990
        %v1992 = vpop.f32.mrb[0].mxu0
        %v1993 = vpop.f32.mrb[0].mxu0
        %v1994 = vadd.f32 %v1817, %v1993
        %v1995 = vpop.f32.mrb[0].mxu0
        %1996 = vmatprep.mubr.bf16.mxu0 %v828
        %1997 = vmatmul.mubr.bf16.gmra.mrb[0].mxu0 %v755
        %v1998 = vpop.f32.mrb[0].mxu0
        %v1999 = vadd.f32 %v1822, %v1998
        %v2000 = vpop.f32.mrb[0].mxu0
        %v2001 = vpop.f32.mrb[0].mxu0
        %v2002 = vadd.f32 %v1825, %v2001
        %v2003 = vpop.f32.mrb[0].mxu0
        %2004 = vmatprep.mubr.bf16.mxu0 %v871
        %2005 = vmatmul.mubr.bf16.gmra.mrb[0].mxu0 %v867
        %v2006 = vpop.f32.mrb[0].mxu0
        %v2007 = vadd.f32 %v1830, %v2006
        %v2008 = vpop.f32.mrb[0].mxu0
        %v2009 = vpop.f32.mrb[0].mxu0
        %v2010 = vadd.f32 %v1833, %v2009
        %v2011 = vpop.f32.mrb[0].mxu0
        %2012 = vdwg.mxu0
        %2013 = vmatprep.subr.bf16.mxu0 0
        %2014 = vmatpush1.bf16.msra.mxu0 %v1386
        %2015 = vmatprep.subr.bf16.mxu0 0
        %2016 = vmatpush1.bf16.msra.mxu0 %v1387
        %2017 = vmatprep.subr.bf16.mxu0 0
        %2018 = vmatpush1.bf16.msra.mxu0 %v1388
        %2019 = vmatprep.subr.bf16.mxu0 0
        %2020 = vmatpush1.bf16.msra.mxu0 %v1389
        %2021 = vmatprep.subr.bf16.mxu0 0
        %2022 = vmatpush1.bf16.msra.mxu0 %v1390
        %2023 = vmatprep.subr.bf16.mxu0 0
        %2024 = vmatpush1.bf16.msra.mxu0 %v1391
        %2025 = vmatprep.subr.bf16.mxu0 0
        %2026 = vmatpush1.bf16.msra.mxu0 %v1392
        %2027 = vmatprep.subr.bf16.mxu0 0
        %2028 = vmatpush1.bf16.msra.mxu0 %v1393
        %2029 = vmatprep.subr.bf16.mxu0 0
        %2030 = vmatpush1.bf16.msra.mxu0 %v1394
        %2031 = vmatprep.subr.bf16.mxu0 0
        %2032 = vmatpush1.bf16.msra.mxu0 %v1395
        %2033 = vmatprep.subr.bf16.mxu0 0
        %2034 = vmatpush1.bf16.msra.mxu0 %v1396
        %2035 = vmatprep.subr.bf16.mxu0 0
        %2036 = vmatpush1.bf16.msra.mxu0 %v1397
        %2037 = vmatprep.subr.bf16.mxu0 0
        %2038 = vmatpush1.bf16.msra.mxu0 %v1398
        %2039 = vmatprep.subr.bf16.mxu0 0
        %2040 = vmatpush1.bf16.msra.mxu0 %v1399
        %2041 = vmatprep.subr.bf16.mxu0 0
        %2042 = vmatpush1.bf16.msra.mxu0 %v1400
        %2043 = vmatprep.subr.bf16.mxu0 0
        %2044 = vmatpush1.bf16.msra.mxu0 %v1401
        %2045 = vmatprep.mubr.bf16.mxu0 %v575
        %2046 = vmatmul.mubr.bf16.gmra.mrb[0].mxu0 %v451
        %v2047 = vpop.f32.mrb[0].mxu0
        %v2048 = vadd.f32 %v1871, %v2047
        %v2049 = vpop.f32.mrb[0].mxu0
        %v2050 = vpop.f32.mrb[0].mxu0
        %v2051 = vadd.f32 %v1874, %v2050
        %v2052 = vpop.f32.mrb[0].mxu0
        %2053 = vmatprep.mubr.bf16.mxu0 %v587
        %2054 = vmatmul.mubr.bf16.gmra.mrb[0].mxu0 %v452
        %v2055 = vpop.f32.mrb[0].mxu0
        %v2056 = vadd.f32 %v1879, %v2055
        %v2057 = vpop.f32.mrb[0].mxu0
        %v2058 = vpop.f32.mrb[0].mxu0
        %v2059 = vadd.f32 %v1882, %v2058
        %v2060 = vpop.f32.mrb[0].mxu0
        %2061 = vmatprep.mubr.bf16.mxu0 %v599
        %2062 = vmatmul.mubr.bf16.gmra.mrb[0].mxu0 %v453
        %v2063 = vpop.f32.mrb[0].mxu0
        %v2064 = vadd.f32 %v1887, %v2063
        %v2065 = vpop.f32.mrb[0].mxu0
        %v2066 = vpop.f32.mrb[0].mxu0
        %v2067 = vadd.f32 %v1890, %v2066
        %v2068 = vpop.f32.mrb[0].mxu0
        %2069 = vmatprep.mubr.bf16.mxu0 %v611
        %2070 = vmatmul.mubr.bf16.gmra.mrb[0].mxu0 %v454
        %v2071 = vpop.f32.mrb[0].mxu0
        %v2072 = vadd.f32 %v1895, %v2071
        %v2073 = vpop.f32.mrb[0].mxu0
        %v2074 = vpop.f32.mrb[0].mxu0
        %v2075 = vadd.f32 %v1898, %v2074
        %v2076 = vpop.f32.mrb[0].mxu0
        %2077 = vmatprep.mubr.bf16.mxu0 %v623
        %2078 = vmatmul.mubr.bf16.gmra.mrb[0].mxu0 %v455
        %v2079 = vpop.f32.mrb[0].mxu0
        %v2080 = vadd.f32 %v1903, %v2079
        %v2081 = vpop.f32.mrb[0].mxu0
        %v2082 = vpop.f32.mrb[0].mxu0
        %v2083 = vadd.f32 %v1906, %v2082
        %v2084 = vpop.f32.mrb[0].mxu0
        %2085 = vmatprep.mubr.bf16.mxu0 %v635
        %2086 = vmatmul.mubr.bf16.gmra.mrb[0].mxu0 %v456
        %v2087 = vpop.f32.mrb[0].mxu0
        %v2088 = vadd.f32 %v1911, %v2087
        %v2089 = vpop.f32.mrb[0].mxu0
        %v2090 = vpop.f32.mrb[0].mxu0
        %v2091 = vadd.f32 %v1914, %v2090
        %v2092 = vpop.f32.mrb[0].mxu0
        %2093 = vmatprep.mubr.bf16.mxu0 %v647
        %2094 = vmatmul.mubr.bf16.gmra.mrb[0].mxu0 %v457
        %v2095 = vpop.f32.mrb[0].mxu0
        %v2096 = vadd.f32 %v1919, %v2095
        %v2097 = vpop.f32.mrb[0].mxu0
        %v2098 = vpop.f32.mrb[0].mxu0
        %v2099 = vadd.f32 %v1922, %v2098
        %v2100 = vpop.f32.mrb[0].mxu0
        %2101 = vmatprep.mubr.bf16.mxu0 %v659
        %2102 = vmatmul.mubr.bf16.gmra.mrb[0].mxu0 %v458
        %v2103 = vpop.f32.mrb[0].mxu0
        %v2104 = vadd.f32 %v1927, %v2103
        %v2105 = vpop.f32.mrb[0].mxu0
        %v2106 = vpop.f32.mrb[0].mxu0
        %v2107 = vadd.f32 %v1930, %v2106
        %v2108 = vpop.f32.mrb[0].mxu0
        %2109 = vmatprep.mubr.bf16.mxu0 %v671
        %2110 = vmatmul.mubr.bf16.gmra.mrb[0].mxu0 %v459
        %v2111 = vpop.f32.mrb[0].mxu0
        %v2112 = vadd.f32 %v1935, %v2111
        %v2113 = vpop.f32.mrb[0].mxu0
        %v2114 = vpop.f32.mrb[0].mxu0
        %v2115 = vadd.f32 %v1938, %v2114
        %v2116 = vpop.f32.mrb[0].mxu0
        %2117 = vmatprep.mubr.bf16.mxu0 %v683
        %2118 = vmatmul.mubr.bf16.gmra.mrb[0].mxu0 %v460
        %v2119 = vpop.f32.mrb[0].mxu0
        %v2120 = vadd.f32 %v1943, %v2119
        %v2121 = vpop.f32.mrb[0].mxu0
        %v2122 = vpop.f32.mrb[0].mxu0
        %v2123 = vadd.f32 %v1946, %v2122
        %v2124 = vpop.f32.mrb[0].mxu0
        %2125 = vmatprep.mubr.bf16.mxu0 %v695
        %2126 = vmatmul.mubr.bf16.gmra.mrb[0].mxu0 %v461
        %v2127 = vpop.f32.mrb[0].mxu0
        %v2128 = vadd.f32 %v1951, %v2127
        %v2129 = vpop.f32.mrb[0].mxu0
        %v2130 = vpop.f32.mrb[0].mxu0
        %v2131 = vadd.f32 %v1954, %v2130
        %v2132 = vpop.f32.mrb[0].mxu0
        %2133 = vmatprep.mubr.bf16.mxu0 %v707
        %2134 = vmatmul.mubr.bf16.gmra.mrb[0].mxu0 %v462
        %v2135 = vpop.f32.mrb[0].mxu0
        %v2136 = vadd.f32 %v1959, %v2135
        %v2137 = vpop.f32.mrb[0].mxu0
        %v2138 = vpop.f32.mrb[0].mxu0
        %v2139 = vadd.f32 %v1962, %v2138
        %v2140 = vpop.f32.mrb[0].mxu0
        %2141 = vmatprep.mubr.bf16.mxu0 %v719
        %2142 = vmatmul.mubr.bf16.gmra.mrb[0].mxu0 %v463
        %v2143 = vpop.f32.mrb[0].mxu0
        %v2144 = vadd.f32 %v1967, %v2143
        %v2145 = vpop.f32.mrb[0].mxu0
        %v2146 = vpop.f32.mrb[0].mxu0
        %v2147 = vadd.f32 %v1970, %v2146
        %v2148 = vpop.f32.mrb[0].mxu0
        %2149 = vmatprep.mubr.bf16.mxu0 %v731
        %2150 = vmatmul.mubr.bf16.gmra.mrb[0].mxu0 %v464
        %v2151 = vpop.f32.mrb[0].mxu0
        %v2152 = vadd.f32 %v1975, %v2151
        %v2153 = vpop.f32.mrb[0].mxu0
        %v2154 = vpop.f32.mrb[0].mxu0
        %v2155 = vadd.f32 %v1978, %v2154
        %v2156 = vpop.f32.mrb[0].mxu0
        %2157 = vmatprep.mubr.bf16.mxu0 %v743
        %2158 = vmatmul.mubr.bf16.gmra.mrb[0].mxu0 %v465
        %v2159 = vpop.f32.mrb[0].mxu0
        %v2160 = vadd.f32 %v1983, %v2159
        %v2161 = vpop.f32.mrb[0].mxu0
        %v2162 = vpop.f32.mrb[0].mxu0
        %v2163 = vadd.f32 %v1986, %v2162
        %v2164 = vpop.f32.mrb[0].mxu0
        %2165 = vmatprep.mubr.bf16.mxu0 %v755
        %2166 = vmatmul.mubr.bf16.gmra.mrb[0].mxu0 %v466
        %v2167 = vpop.f32.mrb[0].mxu0
        %v2168 = vadd.f32 %v1991, %v2167
        %v2169 = vpop.f32.mrb[0].mxu0
        %v2170 = vpop.f32.mrb[0].mxu0
        %v2171 = vadd.f32 %v1994, %v2170
        %v2172 = vpop.f32.mrb[0].mxu0
        %2173 = vmatprep.mubr.bf16.mxu0 %v867
        %2174 = vmatmul.mubr.bf16.gmra.mrb[0].mxu0 %v851
        %v2175 = vpop.f32.mrb[0].mxu0
        %v2176 = vadd.f32 %v1999, %v2175
        %v2177 = vpop.f32.mrb[0].mxu0
        %v2178 = vpop.f32.mrb[0].mxu0
        %v2179 = vadd.f32 %v2002, %v2178
        %v2180 = vpop.f32.mrb[0].mxu0
        %2181 = vmatprep.mubr.bf16.mxu0 %v893
        %2182 = vmatmul.mubr.bf16.gmra.mrb[0].mxu0 %v877
        %v2183 = vpop.f32.mrb[0].mxu0
        %v2184 = vadd.f32 %v2007, %v2183
        %v2185 = vpop.f32.mrb[0].mxu0
        %v2186 = vpop.f32.mrb[0].mxu0
        %v2187 = vadd.f32 %v2010, %v2186
        %v2188 = vpop.f32.mrb[0].mxu0
        %2189 = vdwg.mxu0
        %2190 = vmatprep.subr.bf16.mxu0 0
        %2191 = vmatpush1.bf16.msra.mxu0 %v1402
        %2192 = vmatprep.subr.bf16.mxu0 0
        %2193 = vmatpush1.bf16.msra.mxu0 %v1403
        %2194 = vmatprep.subr.bf16.mxu0 0
        %2195 = vmatpush1.bf16.msra.mxu0 %v1404
        %2196 = vmatprep.subr.bf16.mxu0 0
        %2197 = vmatpush1.bf16.msra.mxu0 %v1405
        %2198 = vmatprep.subr.bf16.mxu0 0
        %2199 = vmatpush1.bf16.msra.mxu0 %v1406
        %2200 = vmatprep.subr.bf16.mxu0 0
        %2201 = vmatpush1.bf16.msra.mxu0 %v1407
        %2202 = vmatprep.subr.bf16.mxu0 0
        %2203 = vmatpush1.bf16.msra.mxu0 %v1408
        %2204 = vmatprep.subr.bf16.mxu0 0
        %2205 = vmatpush1.bf16.msra.mxu0 %v1409
        %2206 = vmatprep.subr.bf16.mxu0 0
        %2207 = vmatpush1.bf16.msra.mxu0 0
        %2208 = vmatprep.subr.bf16.mxu0 0
        %2209 = vmatpush1.bf16.msra.mxu0 0
        %2210 = vmatprep.subr.bf16.mxu0 0
        %2211 = vmatpush1.bf16.msra.mxu0 0
        %2212 = vmatprep.subr.bf16.mxu0 0
        %2213 = vmatpush1.bf16.msra.mxu0 0
        %2214 = vmatprep.subr.bf16.mxu0 0
        %2215 = vmatpush1.bf16.msra.mxu0 0
        %2216 = vmatprep.subr.bf16.mxu0 0
        %2217 = vmatpush1.bf16.msra.mxu0 0
        %2218 = vmatprep.subr.bf16.mxu0 0
        %2219 = vmatpush1.bf16.msra.mxu0 0
        %2220 = vmatprep.subr.bf16.mxu0 0
        %2221 = vmatpush1.bf16.msra.mxu0 0
        %2222 = vmatprep.mubr.bf16.mxu0 0
        %2223 = vmatmul.mubr.bf16.gmra.mrb[0].mxu0 %v783
        %v2224 = vpop.f32.mrb[0].mxu0
        %v2225 = vadd.f32 %v2048, %v2224
        %v2226 = vpop.f32.mrb[0].mxu0
        %v2227 = vpop.f32.mrb[0].mxu0
        %v2228 = vadd.f32 %v2051, %v2227
        %v2229 = vpop.f32.mrb[0].mxu0
        %2230 = vmatprep.mubr.bf16.mxu0 0
        %2231 = vmatmul.mubr.bf16.gmra.mrb[0].mxu0 %v786
        %v2232 = vpop.f32.mrb[0].mxu0
        %v2233 = vadd.f32 %v2056, %v2232
        %v2234 = vpop.f32.mrb[0].mxu0
        %v2235 = vpop.f32.mrb[0].mxu0
        %v2236 = vadd.f32 %v2059, %v2235
        %v2237 = vpop.f32.mrb[0].mxu0
        %2238 = vmatprep.mubr.bf16.mxu0 0
        %2239 = vmatmul.mubr.bf16.gmra.mrb[0].mxu0 %v789
        %v2240 = vpop.f32.mrb[0].mxu0
        %v2241 = vadd.f32 %v2064, %v2240
        %v2242 = vpop.f32.mrb[0].mxu0
        %v2243 = vpop.f32.mrb[0].mxu0
        %v2244 = vadd.f32 %v2067, %v2243
        %v2245 = vpop.f32.mrb[0].mxu0
        %2246 = vmatprep.mubr.bf16.mxu0 0
        %2247 = vmatmul.mubr.bf16.gmra.mrb[0].mxu0 %v792
        %v2248 = vpop.f32.mrb[0].mxu0
        %v2249 = vadd.f32 %v2072, %v2248
        %v2250 = vpop.f32.mrb[0].mxu0
        %v2251 = vpop.f32.mrb[0].mxu0
        %v2252 = vadd.f32 %v2075, %v2251
        %v2253 = vpop.f32.mrb[0].mxu0
        %2254 = vmatprep.mubr.bf16.mxu0 0
        %2255 = vmatmul.mubr.bf16.gmra.mrb[0].mxu0 %v795
        %v2256 = vpop.f32.mrb[0].mxu0
        %v2257 = vadd.f32 %v2080, %v2256
        %v2258 = vpop.f32.mrb[0].mxu0
        %v2259 = vpop.f32.mrb[0].mxu0
        %v2260 = vadd.f32 %v2083, %v2259
        %v2261 = vpop.f32.mrb[0].mxu0
        %2262 = vmatprep.mubr.bf16.mxu0 0
        %2263 = vmatmul.mubr.bf16.gmra.mrb[0].mxu0 %v798
        %v2264 = vpop.f32.mrb[0].mxu0
        %v2265 = vadd.f32 %v2088, %v2264
        %v2266 = vpop.f32.mrb[0].mxu0
        %v2267 = vpop.f32.mrb[0].mxu0
        %v2268 = vadd.f32 %v2091, %v2267
        %v2269 = vpop.f32.mrb[0].mxu0
        %2270 = vmatprep.mubr.bf16.mxu0 0
        %2271 = vmatmul.mubr.bf16.gmra.mrb[0].mxu0 %v801
        %v2272 = vpop.f32.mrb[0].mxu0
        %v2273 = vadd.f32 %v2096, %v2272
        %v2274 = vpop.f32.mrb[0].mxu0
        %v2275 = vpop.f32.mrb[0].mxu0
        %v2276 = vadd.f32 %v2099, %v2275
        %v2277 = vpop.f32.mrb[0].mxu0
        %2278 = vmatprep.mubr.bf16.mxu0 0
        %2279 = vmatmul.mubr.bf16.gmra.mrb[0].mxu0 %v804
        %v2280 = vpop.f32.mrb[0].mxu0
        %v2281 = vadd.f32 %v2104, %v2280
        %v2282 = vpop.f32.mrb[0].mxu0
        %v2283 = vpop.f32.mrb[0].mxu0
        %v2284 = vadd.f32 %v2107, %v2283
        %v2285 = vpop.f32.mrb[0].mxu0
        %2286 = vmatprep.mubr.bf16.mxu0 0
        %2287 = vmatmul.mubr.bf16.gmra.mrb[0].mxu0 %v807
        %v2288 = vpop.f32.mrb[0].mxu0
        %v2289 = vadd.f32 %v2112, %v2288
        %v2290 = vpop.f32.mrb[0].mxu0
        %v2291 = vpop.f32.mrb[0].mxu0
        %v2292 = vadd.f32 %v2115, %v2291
        %v2293 = vpop.f32.mrb[0].mxu0
        %2294 = vmatprep.mubr.bf16.mxu0 0
        %2295 = vmatmul.mubr.bf16.gmra.mrb[0].mxu0 %v810
        %v2296 = vpop.f32.mrb[0].mxu0
        %v2297 = vadd.f32 %v2120, %v2296
        %v2298 = vpop.f32.mrb[0].mxu0
        %v2299 = vpop.f32.mrb[0].mxu0
        %v2300 = vadd.f32 %v2123, %v2299
        %v2301 = vpop.f32.mrb[0].mxu0
        %2302 = vmatprep.mubr.bf16.mxu0 0
        %2303 = vmatmul.mubr.bf16.gmra.mrb[0].mxu0 %v813
        %v2304 = vpop.f32.mrb[0].mxu0
        %v2305 = vadd.f32 %v2128, %v2304
        %v2306 = vpop.f32.mrb[0].mxu0
        %v2307 = vpop.f32.mrb[0].mxu0
        %v2308 = vadd.f32 %v2131, %v2307
        %v2309 = vpop.f32.mrb[0].mxu0
        %2310 = vmatprep.mubr.bf16.mxu0 0
        %2311 = vmatmul.mubr.bf16.gmra.mrb[0].mxu0 %v816
        %v2312 = vpop.f32.mrb[0].mxu0
        %v2313 = vadd.f32 %v2136, %v2312
        %v2314 = vpop.f32.mrb[0].mxu0
        %v2315 = vpop.f32.mrb[0].mxu0
        %v2316 = vadd.f32 %v2139, %v2315
        %v2317 = vpop.f32.mrb[0].mxu0
        %2318 = vmatprep.mubr.bf16.mxu0 0
        %2319 = vmatmul.mubr.bf16.gmra.mrb[0].mxu0 %v819
        %v2320 = vpop.f32.mrb[0].mxu0
        %v2321 = vadd.f32 %v2144, %v2320
        %v2322 = vpop.f32.mrb[0].mxu0
        %v2323 = vpop.f32.mrb[0].mxu0
        %v2324 = vadd.f32 %v2147, %v2323
        %v2325 = vpop.f32.mrb[0].mxu0
        %2326 = vmatprep.mubr.bf16.mxu0 0
        %2327 = vmatmul.mubr.bf16.gmra.mrb[0].mxu0 %v822
        %v2328 = vpop.f32.mrb[0].mxu0
        %v2329 = vadd.f32 %v2152, %v2328
        %v2330 = vpop.f32.mrb[0].mxu0
        %v2331 = vpop.f32.mrb[0].mxu0
        %v2332 = vadd.f32 %v2155, %v2331
        %v2333 = vpop.f32.mrb[0].mxu0
        %2334 = vmatprep.mubr.bf16.mxu0 0
        %2335 = vmatmul.mubr.bf16.gmra.mrb[0].mxu0 %v825
        %v2336 = vpop.f32.mrb[0].mxu0
        %v2337 = vadd.f32 %v2160, %v2336
        %v2338 = vpop.f32.mrb[0].mxu0
        %v2339 = vpop.f32.mrb[0].mxu0
        %v2340 = vadd.f32 %v2163, %v2339
        %v2341 = vpop.f32.mrb[0].mxu0
        %2342 = vmatprep.mubr.bf16.mxu0 0
        %2343 = vmatmul.mubr.bf16.gmra.mrb[0].mxu0 %v828
        %v2344 = vpop.f32.mrb[0].mxu0
        %v2345 = vadd.f32 %v2168, %v2344
        %v2346 = vpop.f32.mrb[0].mxu0
        %v2347 = vpop.f32.mrb[0].mxu0
        %v2348 = vadd.f32 %v2171, %v2347
        %v2349 = vpop.f32.mrb[0].mxu0
        %2350 = vmatprep.mubr.bf16.mxu0 0
        %2351 = vmatmul.mubr.bf16.gmra.mrb[0].mxu0 %v871
        %v2352 = vpop.f32.mrb[0].mxu0
        %v2353 = vadd.f32 %v2176, %v2352
        %v2354 = vpop.f32.mrb[0].mxu0
        %v2355 = vpop.f32.mrb[0].mxu0
        %v2356 = vadd.f32 %v2179, %v2355
        %v2357 = vpop.f32.mrb[0].mxu0
        %2358 = vmatprep.mubr.bf16.mxu0 0
        %2359 = vmatmul.mubr.bf16.gmra.mrb[0].mxu0 %v897
        %v2360 = vpop.f32.mrb[0].mxu0
        %v2361 = vadd.f32 %v2184, %v2360
        %v2362 = vpop.f32.mrb[0].mxu0
        %v2363 = vpop.f32.mrb[0].mxu0
        %v2364 = vadd.f32 %v2187, %v2363
        %v2365 = vpop.f32.mrb[0].mxu0
        %2366 = vdwg.mxu0
        %v2367 = vmax.f32 %v2225, 0.0
        %v2368 = vmax.f32 %v2228, 0.0
        %v2369 = vmax.f32 %v2233, 0.0
        %v2370 = vmax.f32 %v2236, 0.0
        %v2371 = vmax.f32 %v2241, 0.0
        %v2372 = vmax.f32 %v2244, 0.0
        %v2373 = vmax.f32 %v2249, 0.0
        %v2374 = vmax.f32 %v2252, 0.0
        %v2375 = vmax.f32 %v2257, 0.0
        %v2376 = vmax.f32 %v2260, 0.0
        %v2377 = vmax.f32 %v2265, 0.0
        %v2378 = vmax.f32 %v2268, 0.0
        %v2379 = vmax.f32 %v2273, 0.0
        %v2380 = vmax.f32 %v2276, 0.0
        %v2381 = vmax.f32 %v2281, 0.0
        %v2382 = vmax.f32 %v2284, 0.0
        %v2383 = vmax.f32 %v2289, 0.0
        %v2384 = vmax.f32 %v2292, 0.0
        %v2385 = vmax.f32 %v2297, 0.0
        %v2386 = vmax.f32 %v2300, 0.0
        %v2387 = vmax.f32 %v2305, 0.0
        %v2388 = vmax.f32 %v2308, 0.0
        %v2389 = vmax.f32 %v2313, 0.0
        %v2390 = vmax.f32 %v2316, 0.0
        %v2391 = vmax.f32 %v2321, 0.0
        %v2392 = vmax.f32 %v2324, 0.0
        %v2393 = vmax.f32 %v2329, 0.0
        %v2394 = vmax.f32 %v2332, 0.0
        %v2395 = vmax.f32 %v2337, 0.0
        %v2396 = vmax.f32 %v2340, 0.0
        %v2397 = vmax.f32 %v2345, 0.0
        %v2398 = vmax.f32 %v2348, 0.0
        %v2399 = vmax.f32 %v2353, 0.0
        %v2400 = vmax.f32 %v2356, 0.0
        %v2401 = vmax.f32 %v2361, 0.0
        %v2402 = vmax.f32 %v2364, 0.0
        %p2403 = scmp.gt.s32.totalorder %s29, 0
        %s2404 = scalar_select %p2403, 1, 0
        %v2405 = vstv %s2404
        %vm2406 = vcmp.eq.s32.totalorder %v2405, 1
        %p2407 = scmp.lt.s32.totalorder %s29, 0
        %s2408 = scalar_select %p2407, 1, 0
        %v2409 = vstv %s2408
        %vm2410 = vcmp.eq.s32.totalorder %v2409, 1
        %v2411 = vsel %vm2406, 1, 0
        %v2412 = vsel %vm2410, 1, 0
        %vm2413 = vcmp.eq.s32.totalorder %v2411, 1
        %vm2414 = vcmp.eq.s32.totalorder %v2412, 1
        %v2415 = vsel %vm2413, %v2367, 0.0
        %v2416 = vsel %vm2413, %v2368, 0.0
        %v2417 = vsel 1, %v2369, 0.0
        %v2418 = vsel 1, %v2370, 0.0
        %v2419 = vsel 1, %v2371, 0.0
        %v2420 = vsel 1, %v2372, 0.0
        %v2421 = vsel 1, %v2373, 0.0
        %v2422 = vsel 1, %v2374, 0.0
        %v2423 = vsel 1, %v2375, 0.0
        %v2424 = vsel 1, %v2376, 0.0
        %v2425 = vsel 1, %v2377, 0.0
        %v2426 = vsel 1, %v2378, 0.0
        %v2427 = vsel 1, %v2379, 0.0
        %v2428 = vsel 1, %v2380, 0.0
        %v2429 = vsel 1, %v2381, 0.0
        %v2430 = vsel 1, %v2382, 0.0
        %v2431 = vsel 1, %v2383, 0.0
        %v2432 = vsel 1, %v2384, 0.0
        %v2433 = vsel 1, %v2385, 0.0
        %v2434 = vsel 1, %v2386, 0.0
        %v2435 = vsel 1, %v2387, 0.0
        %v2436 = vsel 1, %v2388, 0.0
        %v2437 = vsel 1, %v2389, 0.0
        %v2438 = vsel 1, %v2390, 0.0
        %v2439 = vsel 1, %v2391, 0.0
        %v2440 = vsel 1, %v2392, 0.0
        %v2441 = vsel 1, %v2393, 0.0
        %v2442 = vsel 1, %v2394, 0.0
        %v2443 = vsel 1, %v2395, 0.0
        %v2444 = vsel 1, %v2396, 0.0
        %v2445 = vsel 1, %v2397, 0.0
        %v2446 = vsel 1, %v2398, 0.0
        %v2447 = vsel 1, %v2399, 0.0
        %v2448 = vsel 1, %v2400, 0.0
        %v2449 = vsel %vm2414, %v2401, 0.0
        %v2450 = vsel %vm2414, %v2402, 0.0
        %v2451 = vpack.c.bf16 %v2416, %v2415
        %v2452 = vpack.c.bf16 %v2418, %v2417
        %v2453 = vpack.c.bf16 %v2420, %v2419
        %v2454 = vpack.c.bf16 %v2422, %v2421
        %v2455 = vpack.c.bf16 %v2424, %v2423
        %v2456 = vpack.c.bf16 %v2426, %v2425
        %v2457 = vpack.c.bf16 %v2428, %v2427
        %v2458 = vpack.c.bf16 %v2430, %v2429
        %v2459 = vpack.c.bf16 %v2432, %v2431
        %v2460 = vpack.c.bf16 %v2434, %v2433
        %v2461 = vpack.c.bf16 %v2436, %v2435
        %v2462 = vpack.c.bf16 %v2438, %v2437
        %v2463 = vpack.c.bf16 %v2440, %v2439
        %v2464 = vpack.c.bf16 %v2442, %v2441
        %v2465 = vpack.c.bf16 %v2444, %v2443
        %v2466 = vpack.c.bf16 %v2446, %v2445
        %v2467 = vpack.c.bf16 %v2448, %v2447
        %v2468 = vpack.c.bf16 %v2450, %v2449
        %v2470 = vshrl.u32 %v2451, 16
        %v2472 = vrot.slane %v2470, 7
        %v2473 = vshll.u32 %v2451, 16
        %v2475 = vor.u32 %v2472, %v2473
        %v2477 = vshrl.u32 %v2452, 16
        %v2479 = vrot.slane %v2477, 7
        %v2480 = vshll.u32 %v2452, 16
        %v2482 = vor.u32 %v2479, %v2480
        %v2484 = vshrl.u32 %v2453, 16
        %v2486 = vrot.slane %v2484, 7
        %v2487 = vshll.u32 %v2453, 16
        %v2489 = vor.u32 %v2486, %v2487
        %v2491 = vshrl.u32 %v2454, 16
        %v2493 = vrot.slane %v2491, 7
        %v2494 = vshll.u32 %v2454, 16
        %v2496 = vor.u32 %v2493, %v2494
        %v2498 = vshrl.u32 %v2455, 16
        %v2500 = vrot.slane %v2498, 7
        %v2501 = vshll.u32 %v2455, 16
        %v2503 = vor.u32 %v2500, %v2501
        %v2505 = vshrl.u32 %v2456, 16
        %v2507 = vrot.slane %v2505, 7
        %v2508 = vshll.u32 %v2456, 16
        %v2510 = vor.u32 %v2507, %v2508
        %v2512 = vshrl.u32 %v2457, 16
        %v2514 = vrot.slane %v2512, 7
        %v2515 = vshll.u32 %v2457, 16
        %v2517 = vor.u32 %v2514, %v2515
        %v2519 = vshrl.u32 %v2458, 16
        %v2521 = vrot.slane %v2519, 7
        %v2522 = vshll.u32 %v2458, 16
        %v2524 = vor.u32 %v2521, %v2522
        %v2526 = vshrl.u32 %v2459, 16
        %v2528 = vrot.slane %v2526, 7
        %v2529 = vshll.u32 %v2459, 16
        %v2531 = vor.u32 %v2528, %v2529
        %v2533 = vshrl.u32 %v2460, 16
        %v2535 = vrot.slane %v2533, 7
        %v2536 = vshll.u32 %v2460, 16
        %v2538 = vor.u32 %v2535, %v2536
        %v2540 = vshrl.u32 %v2461, 16
        %v2542 = vrot.slane %v2540, 7
        %v2543 = vshll.u32 %v2461, 16
        %v2545 = vor.u32 %v2542, %v2543
        %v2547 = vshrl.u32 %v2462, 16
        %v2549 = vrot.slane %v2547, 7
        %v2550 = vshll.u32 %v2462, 16
        %v2552 = vor.u32 %v2549, %v2550
        %v2554 = vshrl.u32 %v2463, 16
        %v2556 = vrot.slane %v2554, 7
        %v2557 = vshll.u32 %v2463, 16
        %v2559 = vor.u32 %v2556, %v2557
        %v2561 = vshrl.u32 %v2464, 16
        %v2563 = vrot.slane %v2561, 7
        %v2564 = vshll.u32 %v2464, 16
        %v2566 = vor.u32 %v2563, %v2564
        %v2568 = vshrl.u32 %v2465, 16
        %v2570 = vrot.slane %v2568, 7
        %v2571 = vshll.u32 %v2465, 16
        %v2573 = vor.u32 %v2570, %v2571
        %v2575 = vshrl.u32 %v2466, 16
        %v2577 = vrot.slane %v2575, 7
        %v2578 = vshll.u32 %v2466, 16
        %v2580 = vor.u32 %v2577, %v2578
        %v2582 = vshrl.u32 %v2467, 16
        %v2584 = vrot.slane %v2582, 7
        %v2585 = vshll.u32 %v2467, 16
        %v2587 = vor.u32 %v2584, %v2585
        %v2589 = vshrl.u32 %v2468, 16
        %v2591 = vrot.slane %v2589, 7
        %v2592 = vshll.u32 %v2468, 16
        %v2594 = vor.u32 %v2591, %v2592
        %vm2631 = vcmask 1040384
        %vm2632 = vsmask.f32 256
        %vm2633 = vmand %vm2631, %vm2632
        %v2634 = vsel %vm2633, 0, %v2475
        %v2635 = vsel %vm2633, 0, %v2482
        %v2636 = vsel %vm2633, 0, %v2489
        %v2637 = vsel %vm2633, 0, %v2496
        %v2638 = vsel %vm2633, 0, %v2503
        %v2639 = vsel %vm2633, 0, %v2510
        %v2640 = vsel %vm2633, 0, %v2517
        %v2641 = vsel %vm2633, 0, %v2524
        %v2642 = vsel %vm2633, 0, %v2531
        %v2643 = vsel %vm2633, 0, %v2538
        %v2644 = vsel %vm2633, 0, %v2545
        %v2645 = vsel %vm2633, 0, %v2552
        %v2646 = vsel %vm2633, 0, %v2559
        %v2647 = vsel %vm2633, 0, %v2566
        %v2648 = vsel %vm2633, 0, %v2573
        %v2649 = vsel %vm2633, 0, %v2580
        %v2650 = vsel %vm2633, 0, %v2587
        %v2651 = vsel %vm2633, 0, %v2594
        %v2652 = vsel %vm2633, %v2472, 0
        %v2653 = vsel %vm2633, %v2479, 0
        %v2654 = vsel %vm2633, %v2486, 0
        %v2655 = vsel %vm2633, %v2493, 0
        %v2656 = vsel %vm2633, %v2500, 0
        %v2657 = vsel %vm2633, %v2507, 0
        %v2658 = vsel %vm2633, %v2514, 0
        %v2659 = vsel %vm2633, %v2521, 0
        %v2660 = vsel %vm2633, %v2528, 0
        %v2661 = vsel %vm2633, %v2535, 0
        %v2662 = vsel %vm2633, %v2542, 0
        %v2663 = vsel %vm2633, %v2549, 0
        %v2664 = vsel %vm2633, %v2556, 0
        %v2665 = vsel %vm2633, %v2563, 0
        %v2666 = vsel %vm2633, %v2570, 0
        %v2667 = vsel %vm2633, %v2577, 0
        %v2668 = vsel %vm2633, %v2584, 0
        %v2669 = vsel %vm2633, %v2591, 0
        %v2671 = vshrl.u32 %v2634, 16
        %v2673 = vshll.u32 %v2634, 16
        %v2675 = vrot.slane %v2673, 1
        %v2676 = vor.u32 %v2671, %v2675
        %v2678 = vshll.u32 %v2652, 16
        %v2680 = vrot.slane %v2678, 1
        %v2681 = vsel %vm539, %v2676, %v2680
        %v2683 = vshrl.u32 %v2635, 16
        %v2685 = vshll.u32 %v2635, 16
        %v2687 = vrot.slane %v2685, 1
        %v2688 = vor.u32 %v2683, %v2687
        %v2690 = vshll.u32 %v2653, 16
        %v2692 = vrot.slane %v2690, 1
        %v2693 = vsel %vm539, %v2688, %v2692
        %v2695 = vshrl.u32 %v2636, 16
        %v2697 = vshll.u32 %v2636, 16
        %v2699 = vrot.slane %v2697, 1
        %v2700 = vor.u32 %v2695, %v2699
        %v2702 = vshll.u32 %v2654, 16
        %v2704 = vrot.slane %v2702, 1
        %v2705 = vsel %vm539, %v2700, %v2704
        %v2707 = vshrl.u32 %v2637, 16
        %v2709 = vshll.u32 %v2637, 16
        %v2711 = vrot.slane %v2709, 1
        %v2712 = vor.u32 %v2707, %v2711
        %v2714 = vshll.u32 %v2655, 16
        %v2716 = vrot.slane %v2714, 1
        %v2717 = vsel %vm539, %v2712, %v2716
        %v2719 = vshrl.u32 %v2638, 16
        %v2721 = vshll.u32 %v2638, 16
        %v2723 = vrot.slane %v2721, 1
        %v2724 = vor.u32 %v2719, %v2723
        %v2726 = vshll.u32 %v2656, 16
        %v2728 = vrot.slane %v2726, 1
        %v2729 = vsel %vm539, %v2724, %v2728
        %v2731 = vshrl.u32 %v2639, 16
        %v2733 = vshll.u32 %v2639, 16
        %v2735 = vrot.slane %v2733, 1
        %v2736 = vor.u32 %v2731, %v2735
        %v2738 = vshll.u32 %v2657, 16
        %v2740 = vrot.slane %v2738, 1
        %v2741 = vsel %vm539, %v2736, %v2740
        %v2743 = vshrl.u32 %v2640, 16
        %v2745 = vshll.u32 %v2640, 16
        %v2747 = vrot.slane %v2745, 1
        %v2748 = vor.u32 %v2743, %v2747
        %v2750 = vshll.u32 %v2658, 16
        %v2752 = vrot.slane %v2750, 1
        %v2753 = vsel %vm539, %v2748, %v2752
        %v2755 = vshrl.u32 %v2641, 16
        %v2757 = vshll.u32 %v2641, 16
        %v2759 = vrot.slane %v2757, 1
        %v2760 = vor.u32 %v2755, %v2759
        %v2762 = vshll.u32 %v2659, 16
        %v2764 = vrot.slane %v2762, 1
        %v2765 = vsel %vm539, %v2760, %v2764
        %v2767 = vshrl.u32 %v2642, 16
        %v2769 = vshll.u32 %v2642, 16
        %v2771 = vrot.slane %v2769, 1
        %v2772 = vor.u32 %v2767, %v2771
        %v2774 = vshll.u32 %v2660, 16
        %v2776 = vrot.slane %v2774, 1
        %v2777 = vsel %vm539, %v2772, %v2776
        %v2779 = vshrl.u32 %v2643, 16
        %v2781 = vshll.u32 %v2643, 16
        %v2783 = vrot.slane %v2781, 1
        %v2784 = vor.u32 %v2779, %v2783
        %v2786 = vshll.u32 %v2661, 16
        %v2788 = vrot.slane %v2786, 1
        %v2789 = vsel %vm539, %v2784, %v2788
        %v2791 = vshrl.u32 %v2644, 16
        %v2793 = vshll.u32 %v2644, 16
        %v2795 = vrot.slane %v2793, 1
        %v2796 = vor.u32 %v2791, %v2795
        %v2798 = vshll.u32 %v2662, 16
        %v2800 = vrot.slane %v2798, 1
        %v2801 = vsel %vm539, %v2796, %v2800
        %v2803 = vshrl.u32 %v2645, 16
        %v2805 = vshll.u32 %v2645, 16
        %v2807 = vrot.slane %v2805, 1
        %v2808 = vor.u32 %v2803, %v2807
        %v2810 = vshll.u32 %v2663, 16
        %v2812 = vrot.slane %v2810, 1
        %v2813 = vsel %vm539, %v2808, %v2812
        %v2815 = vshrl.u32 %v2646, 16
        %v2817 = vshll.u32 %v2646, 16
        %v2819 = vrot.slane %v2817, 1
        %v2820 = vor.u32 %v2815, %v2819
        %v2822 = vshll.u32 %v2664, 16
        %v2824 = vrot.slane %v2822, 1
        %v2825 = vsel %vm539, %v2820, %v2824
        %v2827 = vshrl.u32 %v2647, 16
        %v2829 = vshll.u32 %v2647, 16
        %v2831 = vrot.slane %v2829, 1
        %v2832 = vor.u32 %v2827, %v2831
        %v2834 = vshll.u32 %v2665, 16
        %v2836 = vrot.slane %v2834, 1
        %v2837 = vsel %vm539, %v2832, %v2836
        %v2839 = vshrl.u32 %v2648, 16
        %v2841 = vshll.u32 %v2648, 16
        %v2843 = vrot.slane %v2841, 1
        %v2844 = vor.u32 %v2839, %v2843
        %v2846 = vshll.u32 %v2666, 16
        %v2848 = vrot.slane %v2846, 1
        %v2849 = vsel %vm539, %v2844, %v2848
        %v2851 = vshrl.u32 %v2649, 16
        %v2853 = vshll.u32 %v2649, 16
        %v2855 = vrot.slane %v2853, 1
        %v2856 = vor.u32 %v2851, %v2855
        %v2858 = vshll.u32 %v2667, 16
        %v2860 = vrot.slane %v2858, 1
        %v2861 = vsel %vm539, %v2856, %v2860
        %v2910 = vrot.slane %v2634, 1
        %v2911 = vrot.slane %v2652, 1
        %v2912 = vsel %vm774, %v2910, %v2911
        %v2913 = vrot.slane %v2635, 1
        %v2914 = vrot.slane %v2653, 1
        %v2915 = vsel %vm774, %v2913, %v2914
        %v2916 = vrot.slane %v2636, 1
        %v2917 = vrot.slane %v2654, 1
        %v2918 = vsel %vm774, %v2916, %v2917
        %v2919 = vrot.slane %v2637, 1
        %v2920 = vrot.slane %v2655, 1
        %v2921 = vsel %vm774, %v2919, %v2920
        %v2922 = vrot.slane %v2638, 1
        %v2923 = vrot.slane %v2656, 1
        %v2924 = vsel %vm774, %v2922, %v2923
        %v2925 = vrot.slane %v2639, 1
        %v2926 = vrot.slane %v2657, 1
        %v2927 = vsel %vm774, %v2925, %v2926
        %v2928 = vrot.slane %v2640, 1
        %v2929 = vrot.slane %v2658, 1
        %v2930 = vsel %vm774, %v2928, %v2929
        %v2931 = vrot.slane %v2641, 1
        %v2932 = vrot.slane %v2659, 1
        %v2933 = vsel %vm774, %v2931, %v2932
        %v2934 = vrot.slane %v2642, 1
        %v2935 = vrot.slane %v2660, 1
        %v2936 = vsel %vm774, %v2934, %v2935
        %v2937 = vrot.slane %v2643, 1
        %v2938 = vrot.slane %v2661, 1
        %v2939 = vsel %vm774, %v2937, %v2938
        %v2940 = vrot.slane %v2644, 1
        %v2941 = vrot.slane %v2662, 1
        %v2942 = vsel %vm774, %v2940, %v2941
        %v2943 = vrot.slane %v2645, 1
        %v2944 = vrot.slane %v2663, 1
        %v2945 = vsel %vm774, %v2943, %v2944
        %v2946 = vrot.slane %v2646, 1
        %v2947 = vrot.slane %v2664, 1
        %v2948 = vsel %vm774, %v2946, %v2947
        %v2949 = vrot.slane %v2647, 1
        %v2950 = vrot.slane %v2665, 1
        %v2951 = vsel %vm774, %v2949, %v2950
        %v2952 = vrot.slane %v2648, 1
        %v2953 = vrot.slane %v2666, 1
        %v2954 = vsel %vm774, %v2952, %v2953
        %v2955 = vrot.slane %v2649, 1
        %v2956 = vrot.slane %v2667, 1
        %v2957 = vsel %vm774, %v2955, %v2956
        %v2975 = vshrl.u32 %v2650, 16
        %v2977 = vshll.u32 %v2650, 16
        %v2979 = vrot.slane %v2977, 1
        %v2980 = vor.u32 %v2975, %v2979
        %v2982 = vshll.u32 %v2668, 16
        %v2984 = vrot.slane %v2982, 1
        %v2985 = vsel %vm539, %v2980, %v2984
        %v2989 = vrot.slane %v2650, 1
        %v2990 = vrot.slane %v2668, 1
        %v2991 = vsel %vm774, %v2989, %v2990
        %v2994 = vshrl.u32 %v2651, 16
        %v2996 = vshll.u32 %v2651, 16
        %v2998 = vrot.slane %v2996, 1
        %v2999 = vor.u32 %v2994, %v2998
        %v3001 = vshll.u32 %v2669, 16
        %v3003 = vrot.slane %v3001, 1
        %v3004 = vsel %vm539, %v2999, %v3003
        %v3008 = vrot.slane %v2651, 1
        %v3009 = vrot.slane %v2669, 1
        %v3010 = vsel %vm774, %v3008, %v3009
        %v3012 = vld [vmem:[#allocation8] sm:$0xf]
        %v3013 = vld [vmem:[#allocation8 + $0x4] sm:$0xf]
        %v3014 = vld [vmem:[#allocation8 + $0x8] sm:$0xf]
        %v3015 = vld [vmem:[#allocation8 + $0xc] sm:$0xf]
        %v3016 = vld [vmem:[#allocation8 + $0x10] sm:$0xf]
        %v3017 = vld [vmem:[#allocation8 + $0x14] sm:$0xf]
        %v3018 = vld [vmem:[#allocation8 + $0x18] sm:$0xf]
        %v3019 = vld [vmem:[#allocation8 + $0x1c] sm:$0xf]
        %v3020 = vld [vmem:[#allocation8 + $0x20] sm:$0xf]
        %v3021 = vld [vmem:[#allocation8 + $0x24] sm:$0xf]
        %v3022 = vld [vmem:[#allocation8 + $0x28] sm:$0xf]
        %v3023 = vld [vmem:[#allocation8 + $0x2c] sm:$0xf]
        %v3024 = vld [vmem:[#allocation8 + $0x30] sm:$0xf]
        %v3025 = vld [vmem:[#allocation8 + $0x34] sm:$0xf]
        %v3026 = vld [vmem:[#allocation8 + $0x38] sm:$0xf]
        %v3027 = vld [vmem:[#allocation8 + $0x3c] sm:$0xf]
        %v3028 = vld [vmem:[#allocation8 + $0x40] sm:$0xf]
        %v3029 = vld [vmem:[#allocation8 + $0x44] sm:$0xf]
        %v3030 = vld [vmem:[#allocation8 + $0x48] sm:$0xf]
        %v3031 = vld [vmem:[#allocation8 + $0x4c] sm:$0xf]
        %v3032 = vld [vmem:[#allocation8 + $0x50] sm:$0xf]
        %v3033 = vld [vmem:[#allocation8 + $0x54] sm:$0xf]
        %v3034 = vld [vmem:[#allocation8 + $0x58] sm:$0xf]
        %v3035 = vld [vmem:[#allocation8 + $0x5c] sm:$0xf]
        %v3036 = vld [vmem:[#allocation8 + $0x60] sm:$0xf]
        %v3037 = vld [vmem:[#allocation8 + $0x64] sm:$0xf]
        %v3038 = vld [vmem:[#allocation8 + $0x68] sm:$0xf]
        %v3039 = vld [vmem:[#allocation8 + $0x6c] sm:$0xf]
        %v3040 = vld [vmem:[#allocation8 + $0x70] sm:$0xf]
        %v3041 = vld [vmem:[#allocation8 + $0x74] sm:$0xf]
        %v3042 = vld [vmem:[#allocation8 + $0x78] sm:$0xf]
        %v3043 = vld [vmem:[#allocation8 + $0x7c] sm:$0xf]
        %v3044 = vld [vmem:[#allocation8 + $0x80] sm:$0xf]
        %v3045 = vld [vmem:[#allocation8 + $0x84] sm:$0xf]
        %v3046 = vld [vmem:[#allocation8 + $0x88] sm:$0xf]
        %v3047 = vld [vmem:[#allocation8 + $0x8c] sm:$0xf]
        %v3048 = vld [vmem:[#allocation8 + $0x90] sm:$0xf]
        %v3049 = vld [vmem:[#allocation8 + $0x94] sm:$0xf]
        %v3050 = vld [vmem:[#allocation8 + $0x98] sm:$0xf]
        %v3051 = vld [vmem:[#allocation8 + $0x9c] sm:$0xf]
        %v3052 = vld [vmem:[#allocation8 + $0xa0] sm:$0xf]
        %v3053 = vld [vmem:[#allocation8 + $0xa4] sm:$0xf]
        %v3054 = vld [vmem:[#allocation8 + $0xa8] sm:$0xf]
        %v3055 = vld [vmem:[#allocation8 + $0xac] sm:$0xf]
        %v3056 = vld [vmem:[#allocation8 + $0xb0] sm:$0xf]
        %v3057 = vld [vmem:[#allocation8 + $0xb4] sm:$0xf]
        %v3058 = vld [vmem:[#allocation8 + $0xb8] sm:$0xf]
        %v3059 = vld [vmem:[#allocation8 + $0xbc] sm:$0xf]
        %v3060 = vld [vmem:[#allocation8 + $0xc0] sm:$0xf]
        %v3061 = vld [vmem:[#allocation8 + $0xc4] sm:$0xf]
        %v3062 = vld [vmem:[#allocation8 + $0xc8] sm:$0xf]
        %v3063 = vld [vmem:[#allocation8 + $0xcc] sm:$0xf]
        %v3064 = vld [vmem:[#allocation8 + $0xd0] sm:$0xf]
        %v3065 = vld [vmem:[#allocation8 + $0xd4] sm:$0xf]
        %v3066 = vld [vmem:[#allocation8 + $0xd8] sm:$0xf]
        %v3067 = vld [vmem:[#allocation8 + $0xdc] sm:$0xf]
        %v3068 = vld [vmem:[#allocation8 + $0xe0] sm:$0xf]
        %v3069 = vld [vmem:[#allocation8 + $0xe4] sm:$0xf]
        %v3070 = vld [vmem:[#allocation8 + $0xe8] sm:$0xf]
        %v3071 = vld [vmem:[#allocation8 + $0xec] sm:$0xf]
        %v3072 = vld [vmem:[#allocation8 + $0xf0] sm:$0xf]
        %v3073 = vld [vmem:[#allocation8 + $0xf4] sm:$0xf]
        %v3074 = vld [vmem:[#allocation8 + $0xf8] sm:$0xf]
        %v3075 = vld [vmem:[#allocation8 + $0xfc] sm:$0xf]
        %v3076 = vld [vmem:[#allocation8 + $0x100] sm:$0xf]
        %v3077 = vld [vmem:[#allocation8 + $0x104] sm:$0xf]
        %v3078 = vld [vmem:[#allocation8 + $0x108] sm:$0xf]
        %v3079 = vld [vmem:[#allocation8 + $0x10c] sm:$0xf]
        %v3080 = vld [vmem:[#allocation8 + $0x110] sm:$0xf]
        %v3081 = vld [vmem:[#allocation8 + $0x114] sm:$0xf]
        %v3082 = vld [vmem:[#allocation8 + $0x118] sm:$0xf]
        %v3083 = vld [vmem:[#allocation8 + $0x11c] sm:$0xf]
        %v3084 = vld [vmem:[#allocation8 + $0x120] sm:$0xf]
        %v3085 = vld [vmem:[#allocation8 + $0x124] sm:$0xf]
        %v3086 = vld [vmem:[#allocation8 + $0x128] sm:$0xf]
        %v3087 = vld [vmem:[#allocation8 + $0x12c] sm:$0xf]
        %v3088 = vld [vmem:[#allocation8 + $0x130] sm:$0xf]
        %v3089 = vld [vmem:[#allocation8 + $0x134] sm:$0xf]
        %v3090 = vld [vmem:[#allocation8 + $0x138] sm:$0xf]
        %v3091 = vld [vmem:[#allocation8 + $0x13c] sm:$0xf]
        %v3092 = vld [vmem:[#allocation8 + $0x140] sm:$0xf]
        %v3093 = vld [vmem:[#allocation8 + $0x144] sm:$0xf]
        %v3094 = vld [vmem:[#allocation8 + $0x148] sm:$0xf]
        %v3095 = vld [vmem:[#allocation8 + $0x14c] sm:$0xf]
        %v3096 = vld [vmem:[#allocation8 + $0x150] sm:$0xf]
        %v3097 = vld [vmem:[#allocation8 + $0x154] sm:$0xf]
        %v3098 = vld [vmem:[#allocation8 + $0x158] sm:$0xf]
        %v3099 = vld [vmem:[#allocation8 + $0x15c] sm:$0xf]
        %v3100 = vld [vmem:[#allocation8 + $0x160] sm:$0xf]
        %v3101 = vld [vmem:[#allocation8 + $0x164] sm:$0xf]
        %v3102 = vld [vmem:[#allocation8 + $0x168] sm:$0xf]
        %v3103 = vld [vmem:[#allocation8 + $0x16c] sm:$0xf]
        %v3104 = vld [vmem:[#allocation8 + $0x170] sm:$0xf]
        %v3105 = vld [vmem:[#allocation8 + $0x174] sm:$0xf]
        %v3106 = vld [vmem:[#allocation8 + $0x178] sm:$0xf]
        %v3107 = vld [vmem:[#allocation8 + $0x17c] sm:$0xf]
        %v3108 = vld [vmem:[#allocation8 + $0x180] sm:$0xf]
        %v3109 = vld [vmem:[#allocation8 + $0x184] sm:$0xf]
        %v3110 = vld [vmem:[#allocation8 + $0x188] sm:$0xf]
        %v3111 = vld [vmem:[#allocation8 + $0x18c] sm:$0xf]
        %v3112 = vld [vmem:[#allocation8 + $0x190] sm:$0xf]
        %v3113 = vld [vmem:[#allocation8 + $0x194] sm:$0xf]
        %v3114 = vld [vmem:[#allocation8 + $0x198] sm:$0xf]
        %v3115 = vld [vmem:[#allocation8 + $0x19c] sm:$0xf]
        %v3116 = vld [vmem:[#allocation8 + $0x1a0] sm:$0xf]
        %v3117 = vld [vmem:[#allocation8 + $0x1a4] sm:$0xf]
        %v3118 = vld [vmem:[#allocation8 + $0x1a8] sm:$0xf]
        %v3119 = vld [vmem:[#allocation8 + $0x1ac] sm:$0xf]
        %v3120 = vld [vmem:[#allocation8 + $0x1b0] sm:$0xf]
        %v3121 = vld [vmem:[#allocation8 + $0x1b4] sm:$0xf]
        %v3122 = vld [vmem:[#allocation8 + $0x1b8] sm:$0xf]
        %v3123 = vld [vmem:[#allocation8 + $0x1bc] sm:$0xf]
        %v3124 = vld [vmem:[#allocation8 + $0x1c0] sm:$0xf]
        %v3125 = vld [vmem:[#allocation8 + $0x1c4] sm:$0xf]
        %v3126 = vld [vmem:[#allocation8 + $0x1c8] sm:$0xf]
        %v3127 = vld [vmem:[#allocation8 + $0x1cc] sm:$0xf]
        %v3128 = vld [vmem:[#allocation8 + $0x1d0] sm:$0xf]
        %v3129 = vld [vmem:[#allocation8 + $0x1d4] sm:$0xf]
        %v3130 = vld [vmem:[#allocation8 + $0x1d8] sm:$0xf]
        %v3131 = vld [vmem:[#allocation8 + $0x1dc] sm:$0xf]
        %v3132 = vld [vmem:[#allocation8 + $0x1e0] sm:$0xf]
        %v3133 = vld [vmem:[#allocation8 + $0x1e4] sm:$0xf]
        %v3134 = vld [vmem:[#allocation8 + $0x1e8] sm:$0xf]
        %v3135 = vld [vmem:[#allocation8 + $0x1ec] sm:$0xf]
        %v3136 = vld [vmem:[#allocation8 + $0x1f0] sm:$0xf]
        %v3137 = vld [vmem:[#allocation8 + $0x1f4] sm:$0xf]
        %v3138 = vld [vmem:[#allocation8 + $0x1f8] sm:$0xf]
        %v3139 = vld [vmem:[#allocation8 + $0x1fc] sm:$0xf]
        %v3140 = vld [vmem:[#allocation8 + $0x200] sm:$0xf]
        %v3141 = vld [vmem:[#allocation8 + $0x204] sm:$0xf]
        %v3142 = vld [vmem:[#allocation8 + $0x208] sm:$0xf]
        %v3143 = vld [vmem:[#allocation8 + $0x20c] sm:$0xf]
        %v3144 = vld [vmem:[#allocation8 + $0x210] sm:$0xf]
        %v3145 = vld [vmem:[#allocation8 + $0x214] sm:$0xf]
        %v3146 = vld [vmem:[#allocation8 + $0x218] sm:$0xf]
        %v3147 = vld [vmem:[#allocation8 + $0x21c] sm:$0xf]
        %v3148 = vld [vmem:[#allocation8 + $0x220] sm:$0xf]
        %v3149 = vld [vmem:[#allocation8 + $0x224] sm:$0xf]
        %v3150 = vld [vmem:[#allocation8 + $0x228] sm:$0xf]
        %v3151 = vld [vmem:[#allocation8 + $0x22c] sm:$0xf]
        %v3152 = vld [vmem:[#allocation8 + $0x230] sm:$0xf]
        %v3153 = vld [vmem:[#allocation8 + $0x234] sm:$0xf]
        %v3154 = vld [vmem:[#allocation8 + $0x238] sm:$0xf]
        %v3155 = vld [vmem:[#allocation8 + $0x23c] sm:$0xf]
        %v3156 = vld [vmem:[#allocation10] sm:$0x1]
        %v3158 = vlaneseq
        %v3159 = vshrl.u32 %v3158, 7
        %v3160 = vsub.s32 0, %v3159
        %v3161 = vrot.slane %v3156, %v3160
        %v3307 = vunpack.c.l.b16 %v3012
        %v3308 = vunpack.c.l.b16 %v3013
        %v3309 = vunpack.c.l.b16 %v3014
        %v3310 = vunpack.c.l.b16 %v3015
        %v3311 = vunpack.c.l.b16 %v3016
        %v3312 = vunpack.c.l.b16 %v3017
        %v3313 = vunpack.c.l.b16 %v3018
        %v3314 = vunpack.c.l.b16 %v3019
        %v3315 = vunpack.c.l.b16 %v3020
        %v3316 = vunpack.c.l.b16 %v3021
        %v3317 = vunpack.c.l.b16 %v3022
        %v3318 = vunpack.c.l.b16 %v3023
        %v3319 = vunpack.c.l.b16 %v3024
        %v3320 = vunpack.c.l.b16 %v3025
        %v3321 = vunpack.c.l.b16 %v3026
        %v3322 = vunpack.c.l.b16 %v3027
        %v3323 = vunpack.c.l.b16 %v3028
        %v3324 = vunpack.c.l.b16 %v3029
        %v3325 = vunpack.c.l.b16 %v3030
        %v3326 = vunpack.c.l.b16 %v3031
        %v3327 = vunpack.c.l.b16 %v3032
        %v3328 = vunpack.c.l.b16 %v3033
        %v3329 = vunpack.c.l.b16 %v3034
        %v3330 = vunpack.c.l.b16 %v3035
        %v3331 = vunpack.c.l.b16 %v3036
        %v3332 = vunpack.c.l.b16 %v3037
        %v3333 = vunpack.c.l.b16 %v3038
        %v3334 = vunpack.c.l.b16 %v3039
        %v3335 = vunpack.c.l.b16 %v3040
        %v3336 = vunpack.c.l.b16 %v3041
        %v3337 = vunpack.c.l.b16 %v3042
        %v3338 = vunpack.c.l.b16 %v3043
        %v3339 = vunpack.c.l.b16 %v3044
        %v3340 = vunpack.c.l.b16 %v3045
        %v3341 = vunpack.c.l.b16 %v3046
        %v3342 = vunpack.c.l.b16 %v3047
        %v3343 = vunpack.c.l.b16 %v3048
        %v3344 = vunpack.c.l.b16 %v3049
        %v3345 = vunpack.c.l.b16 %v3050
        %v3346 = vunpack.c.l.b16 %v3051
        %v3347 = vunpack.c.l.b16 %v3052
        %v3348 = vunpack.c.l.b16 %v3053
        %v3349 = vunpack.c.l.b16 %v3054
        %v3350 = vunpack.c.l.b16 %v3055
        %v3351 = vunpack.c.l.b16 %v3056
        %v3352 = vunpack.c.l.b16 %v3057
        %v3353 = vunpack.c.l.b16 %v3058
        %v3354 = vunpack.c.l.b16 %v3059
        %v3355 = vunpack.c.l.b16 %v3060
        %v3356 = vunpack.c.l.b16 %v3061
        %v3357 = vunpack.c.l.b16 %v3062
        %v3358 = vunpack.c.l.b16 %v3063
        %v3359 = vunpack.c.l.b16 %v3064
        %v3360 = vunpack.c.l.b16 %v3065
        %v3361 = vunpack.c.l.b16 %v3066
        %v3362 = vunpack.c.l.b16 %v3067
        %v3363 = vunpack.c.l.b16 %v3068
        %v3364 = vunpack.c.l.b16 %v3069
        %v3365 = vunpack.c.l.b16 %v3070
        %v3366 = vunpack.c.l.b16 %v3071
        %v3367 = vunpack.c.l.b16 %v3072
        %v3368 = vunpack.c.l.b16 %v3073
        %v3369 = vunpack.c.l.b16 %v3074
        %v3370 = vunpack.c.l.b16 %v3075
        %v3371 = vunpack.c.l.b16 %v3076
        %v3372 = vunpack.c.l.b16 %v3077
        %v3373 = vunpack.c.l.b16 %v3078
        %v3374 = vunpack.c.l.b16 %v3079
        %v3375 = vunpack.c.l.b16 %v3080
        %v3376 = vunpack.c.l.b16 %v3081
        %v3377 = vunpack.c.l.b16 %v3082
        %v3378 = vunpack.c.l.b16 %v3083
        %v3379 = vunpack.c.l.b16 %v3084
        %v3380 = vunpack.c.l.b16 %v3085
        %v3381 = vunpack.c.l.b16 %v3086
        %v3382 = vunpack.c.l.b16 %v3087
        %v3383 = vunpack.c.l.b16 %v3088
        %v3384 = vunpack.c.l.b16 %v3089
        %v3385 = vunpack.c.l.b16 %v3090
        %v3386 = vunpack.c.l.b16 %v3091
        %v3387 = vunpack.c.l.b16 %v3092
        %v3388 = vunpack.c.l.b16 %v3093
        %v3389 = vunpack.c.l.b16 %v3094
        %v3390 = vunpack.c.l.b16 %v3095
        %v3391 = vunpack.c.l.b16 %v3096
        %v3392 = vunpack.c.l.b16 %v3097
        %v3393 = vunpack.c.l.b16 %v3098
        %v3394 = vunpack.c.l.b16 %v3099
        %v3395 = vunpack.c.l.b16 %v3100
        %v3396 = vunpack.c.l.b16 %v3101
        %v3397 = vunpack.c.l.b16 %v3102
        %v3398 = vunpack.c.l.b16 %v3103
        %v3399 = vunpack.c.l.b16 %v3104
        %v3400 = vunpack.c.l.b16 %v3105
        %v3401 = vunpack.c.l.b16 %v3106
        %v3402 = vunpack.c.l.b16 %v3107
        %v3403 = vunpack.c.l.b16 %v3108
        %v3404 = vunpack.c.l.b16 %v3109
        %v3405 = vunpack.c.l.b16 %v3110
        %v3406 = vunpack.c.l.b16 %v3111
        %v3407 = vunpack.c.l.b16 %v3112
        %v3408 = vunpack.c.l.b16 %v3113
        %v3409 = vunpack.c.l.b16 %v3114
        %v3410 = vunpack.c.l.b16 %v3115
        %v3411 = vunpack.c.l.b16 %v3116
        %v3412 = vunpack.c.l.b16 %v3117
        %v3413 = vunpack.c.l.b16 %v3118
        %v3414 = vunpack.c.l.b16 %v3119
        %v3415 = vunpack.c.l.b16 %v3120
        %v3416 = vunpack.c.l.b16 %v3121
        %v3417 = vunpack.c.l.b16 %v3122
        %v3418 = vunpack.c.l.b16 %v3123
        %v3419 = vunpack.c.l.b16 %v3124
        %v3420 = vunpack.c.l.b16 %v3125
        %v3421 = vunpack.c.l.b16 %v3126
        %v3422 = vunpack.c.l.b16 %v3127
        %v3423 = vunpack.c.l.b16 %v3128
        %v3424 = vunpack.c.l.b16 %v3129
        %v3425 = vunpack.c.l.b16 %v3130
        %v3426 = vunpack.c.l.b16 %v3131
        %v3427 = vunpack.c.l.b16 %v3132
        %v3428 = vunpack.c.l.b16 %v3133
        %v3429 = vunpack.c.l.b16 %v3134
        %v3430 = vunpack.c.l.b16 %v3135
        %v3431 = vunpack.c.l.b16 %v3136
        %v3432 = vunpack.c.l.b16 %v3137
        %v3433 = vunpack.c.l.b16 %v3138
        %v3434 = vunpack.c.l.b16 %v3139
        %v3435 = vunpack.c.l.b16 %v3140
        %v3436 = vunpack.c.l.b16 %v3141
        %v3437 = vunpack.c.l.b16 %v3142
        %v3438 = vunpack.c.l.b16 %v3143
        %v3439 = vunpack.c.l.b16 %v3144
        %v3440 = vunpack.c.l.b16 %v3145
        %v3441 = vunpack.c.l.b16 %v3146
        %v3442 = vunpack.c.l.b16 %v3147
        %v3443 = vunpack.c.l.b16 %v3148
        %v3444 = vunpack.c.l.b16 %v3149
        %v3445 = vunpack.c.l.b16 %v3150
        %v3446 = vunpack.c.l.b16 %v3151
        %v3447 = vunpack.c.l.b16 %v3152
        %v3448 = vunpack.c.l.b16 %v3153
        %v3449 = vunpack.c.l.b16 %v3154
        %v3450 = vunpack.c.l.b16 %v3155
        %v3451 = vpack.c.b16 %v3308, %v3307
        %v3452 = vpack.c.b16 %v3310, %v3309
        %v3453 = vpack.c.b16 %v3312, %v3311
        %v3454 = vpack.c.b16 %v3314, %v3313
        %v3455 = vpack.c.b16 %v3316, %v3315
        %v3456 = vpack.c.b16 %v3318, %v3317
        %v3457 = vpack.c.b16 %v3320, %v3319
        %v3458 = vpack.c.b16 %v3322, %v3321
        %v3459 = vpack.c.b16 %v3324, %v3323
        %v3460 = vpack.c.b16 %v3326, %v3325
        %v3461 = vpack.c.b16 %v3328, %v3327
        %v3462 = vpack.c.b16 %v3330, %v3329
        %v3463 = vpack.c.b16 %v3332, %v3331
        %v3464 = vpack.c.b16 %v3334, %v3333
        %v3465 = vpack.c.b16 %v3336, %v3335
        %v3466 = vpack.c.b16 %v3338, %v3337
        %v3467 = vpack.c.b16 %v3340, %v3339
        %v3468 = vpack.c.b16 %v3342, %v3341
        %v3469 = vpack.c.b16 %v3344, %v3343
        %v3470 = vpack.c.b16 %v3346, %v3345
        %v3471 = vpack.c.b16 %v3348, %v3347
        %v3472 = vpack.c.b16 %v3350, %v3349
        %v3473 = vpack.c.b16 %v3352, %v3351
        %v3474 = vpack.c.b16 %v3354, %v3353
        %v3475 = vpack.c.b16 %v3356, %v3355
        %v3476 = vpack.c.b16 %v3358, %v3357
        %v3477 = vpack.c.b16 %v3360, %v3359
        %v3478 = vpack.c.b16 %v3362, %v3361
        %v3479 = vpack.c.b16 %v3364, %v3363
        %v3480 = vpack.c.b16 %v3366, %v3365
        %v3481 = vpack.c.b16 %v3368, %v3367
        %v3482 = vpack.c.b16 %v3370, %v3369
        %v3483 = vpack.c.b16 %v3372, %v3371
        %v3484 = vpack.c.b16 %v3374, %v3373
        %v3485 = vpack.c.b16 %v3376, %v3375
        %v3486 = vpack.c.b16 %v3378, %v3377
        %v3487 = vpack.c.b16 %v3380, %v3379
        %v3488 = vpack.c.b16 %v3382, %v3381
        %v3489 = vpack.c.b16 %v3384, %v3383
        %v3490 = vpack.c.b16 %v3386, %v3385
        %v3491 = vpack.c.b16 %v3388, %v3387
        %v3492 = vpack.c.b16 %v3390, %v3389
        %v3493 = vpack.c.b16 %v3392, %v3391
        %v3494 = vpack.c.b16 %v3394, %v3393
        %v3495 = vpack.c.b16 %v3396, %v3395
        %v3496 = vpack.c.b16 %v3398, %v3397
        %v3497 = vpack.c.b16 %v3400, %v3399
        %v3498 = vpack.c.b16 %v3402, %v3401
        %v3499 = vpack.c.b16 %v3404, %v3403
        %v3500 = vpack.c.b16 %v3406, %v3405
        %v3501 = vpack.c.b16 %v3408, %v3407
        %v3502 = vpack.c.b16 %v3410, %v3409
        %v3503 = vpack.c.b16 %v3412, %v3411
        %v3504 = vpack.c.b16 %v3414, %v3413
        %v3505 = vpack.c.b16 %v3416, %v3415
        %v3506 = vpack.c.b16 %v3418, %v3417
        %v3507 = vpack.c.b16 %v3420, %v3419
        %v3508 = vpack.c.b16 %v3422, %v3421
        %v3509 = vpack.c.b16 %v3424, %v3423
        %v3510 = vpack.c.b16 %v3426, %v3425
        %v3511 = vpack.c.b16 %v3428, %v3427
        %v3512 = vpack.c.b16 %v3430, %v3429
        %v3513 = vpack.c.b16 %v3432, %v3431
        %v3514 = vpack.c.b16 %v3434, %v3433
        %v3515 = vpack.c.b16 %v3436, %v3435
        %v3516 = vpack.c.b16 %v3438, %v3437
        %v3517 = vpack.c.b16 %v3440, %v3439
        %v3518 = vpack.c.b16 %v3442, %v3441
        %v3519 = vpack.c.b16 %v3444, %v3443
        %v3520 = vpack.c.b16 %v3446, %v3445
        %v3521 = vpack.c.b16 %v3448, %v3447
        %v3522 = vpack.c.b16 %v3450, %v3449
        %3595 = vmatprep.subr.bf16.mxu0 0
        %3596 = vmatpush1.bf16.msra.mxu0 %v3451
        %3597 = vmatprep.subr.bf16.mxu0 0
        %3598 = vmatpush1.bf16.msra.mxu0 %v3452
        %3599 = vmatprep.subr.bf16.mxu0 0
        %3600 = vmatpush1.bf16.msra.mxu0 %v3453
        %3601 = vmatprep.subr.bf16.mxu0 0
        %3602 = vmatpush1.bf16.msra.mxu0 %v3454
        %3603 = vmatprep.subr.bf16.mxu0 0
        %3604 = vmatpush1.bf16.msra.mxu0 %v3455
        %3605 = vmatprep.subr.bf16.mxu0 0
        %3606 = vmatpush1.bf16.msra.mxu0 %v3456
        %3607 = vmatprep.subr.bf16.mxu0 0
        %3608 = vmatpush1.bf16.msra.mxu0 %v3457
        %3609 = vmatprep.subr.bf16.mxu0 0
        %3610 = vmatpush1.bf16.msra.mxu0 %v3458
        %3611 = vmatprep.subr.bf16.mxu0 0
        %3612 = vmatpush1.bf16.msra.mxu0 %v3459
        %3613 = vmatprep.subr.bf16.mxu0 0
        %3614 = vmatpush1.bf16.msra.mxu0 %v3460
        %3615 = vmatprep.subr.bf16.mxu0 0
        %3616 = vmatpush1.bf16.msra.mxu0 %v3461
        %3617 = vmatprep.subr.bf16.mxu0 0
        %3618 = vmatpush1.bf16.msra.mxu0 %v3462
        %3619 = vmatprep.subr.bf16.mxu0 0
        %3620 = vmatpush1.bf16.msra.mxu0 %v3463
        %3621 = vmatprep.subr.bf16.mxu0 0
        %3622 = vmatpush1.bf16.msra.mxu0 %v3464
        %3623 = vmatprep.subr.bf16.mxu0 0
        %3624 = vmatpush1.bf16.msra.mxu0 %v3465
        %3625 = vmatprep.subr.bf16.mxu0 0
        %3626 = vmatpush1.bf16.msra.mxu0 %v3466
        %3627 = vmatprep.mubr.bf16.mxu0 %v2681
        %3628 = vmatmul.mubr.bf16.gmra.mrb[0].mxu0 %v2634
        %v3629 = vpop.f32.mrb[0].mxu0
        %v3630 = vadd.f32 %v3161, %v3629
        %v3631 = vpop.f32.mrb[0].mxu0
        %v3632 = vpop.f32.mrb[0].mxu0
        %v3633 = vadd.f32 %v3161, %v3632
        %v3634 = vpop.f32.mrb[0].mxu0
        %3635 = vmatprep.mubr.bf16.mxu0 %v2693
        %3636 = vmatmul.mubr.bf16.gmra.mrb[0].mxu0 %v2635
        %v3637 = vpop.f32.mrb[0].mxu0
        %v3638 = vadd.f32 %v3161, %v3637
        %v3639 = vpop.f32.mrb[0].mxu0
        %v3640 = vpop.f32.mrb[0].mxu0
        %v3641 = vadd.f32 %v3161, %v3640
        %v3642 = vpop.f32.mrb[0].mxu0
        %3643 = vmatprep.mubr.bf16.mxu0 %v2705
        %3644 = vmatmul.mubr.bf16.gmra.mrb[0].mxu0 %v2636
        %v3645 = vpop.f32.mrb[0].mxu0
        %v3646 = vadd.f32 %v3161, %v3645
        %v3647 = vpop.f32.mrb[0].mxu0
        %v3648 = vpop.f32.mrb[0].mxu0
        %v3649 = vadd.f32 %v3161, %v3648
        %v3650 = vpop.f32.mrb[0].mxu0
        %3651 = vmatprep.mubr.bf16.mxu0 %v2717
        %3652 = vmatmul.mubr.bf16.gmra.mrb[0].mxu0 %v2637
        %v3653 = vpop.f32.mrb[0].mxu0
        %v3654 = vadd.f32 %v3161, %v3653
        %v3655 = vpop.f32.mrb[0].mxu0
        %v3656 = vpop.f32.mrb[0].mxu0
        %v3657 = vadd.f32 %v3161, %v3656
        %v3658 = vpop.f32.mrb[0].mxu0
        %3659 = vmatprep.mubr.bf16.mxu0 %v2729
        %3660 = vmatmul.mubr.bf16.gmra.mrb[0].mxu0 %v2638
        %v3661 = vpop.f32.mrb[0].mxu0
        %v3662 = vadd.f32 %v3161, %v3661
        %v3663 = vpop.f32.mrb[0].mxu0
        %v3664 = vpop.f32.mrb[0].mxu0
        %v3665 = vadd.f32 %v3161, %v3664
        %v3666 = vpop.f32.mrb[0].mxu0
        %3667 = vmatprep.mubr.bf16.mxu0 %v2741
        %3668 = vmatmul.mubr.bf16.gmra.mrb[0].mxu0 %v2639
        %v3669 = vpop.f32.mrb[0].mxu0
        %v3670 = vadd.f32 %v3161, %v3669
        %v3671 = vpop.f32.mrb[0].mxu0
        %v3672 = vpop.f32.mrb[0].mxu0
        %v3673 = vadd.f32 %v3161, %v3672
        %v3674 = vpop.f32.mrb[0].mxu0
        %3675 = vmatprep.mubr.bf16.mxu0 %v2753
        %3676 = vmatmul.mubr.bf16.gmra.mrb[0].mxu0 %v2640
        %v3677 = vpop.f32.mrb[0].mxu0
        %v3678 = vadd.f32 %v3161, %v3677
        %v3679 = vpop.f32.mrb[0].mxu0
        %v3680 = vpop.f32.mrb[0].mxu0
        %v3681 = vadd.f32 %v3161, %v3680
        %v3682 = vpop.f32.mrb[0].mxu0
        %3683 = vmatprep.mubr.bf16.mxu0 %v2765
        %3684 = vmatmul.mubr.bf16.gmra.mrb[0].mxu0 %v2641
        %v3685 = vpop.f32.mrb[0].mxu0
        %v3686 = vadd.f32 %v3161, %v3685
        %v3687 = vpop.f32.mrb[0].mxu0
        %v3688 = vpop.f32.mrb[0].mxu0
        %v3689 = vadd.f32 %v3161, %v3688
        %v3690 = vpop.f32.mrb[0].mxu0
        %3691 = vmatprep.mubr.bf16.mxu0 %v2777
        %3692 = vmatmul.mubr.bf16.gmra.mrb[0].mxu0 %v2642
        %v3693 = vpop.f32.mrb[0].mxu0
        %v3694 = vadd.f32 %v3161, %v3693
        %v3695 = vpop.f32.mrb[0].mxu0
        %v3696 = vpop.f32.mrb[0].mxu0
        %v3697 = vadd.f32 %v3161, %v3696
        %v3698 = vpop.f32.mrb[0].mxu0
        %3699 = vmatprep.mubr.bf16.mxu0 %v2789
        %3700 = vmatmul.mubr.bf16.gmra.mrb[0].mxu0 %v2643
        %v3701 = vpop.f32.mrb[0].mxu0
        %v3702 = vadd.f32 %v3161, %v3701
        %v3703 = vpop.f32.mrb[0].mxu0
        %v3704 = vpop.f32.mrb[0].mxu0
        %v3705 = vadd.f32 %v3161, %v3704
        %v3706 = vpop.f32.mrb[0].mxu0
        %3707 = vmatprep.mubr.bf16.mxu0 %v2801
        %3708 = vmatmul.mubr.bf16.gmra.mrb[0].mxu0 %v2644
        %v3709 = vpop.f32.mrb[0].mxu0
        %v3710 = vadd.f32 %v3161, %v3709
        %v3711 = vpop.f32.mrb[0].mxu0
        %v3712 = vpop.f32.mrb[0].mxu0
        %v3713 = vadd.f32 %v3161, %v3712
        %v3714 = vpop.f32.mrb[0].mxu0
        %3715 = vmatprep.mubr.bf16.mxu0 %v2813
        %3716 = vmatmul.mubr.bf16.gmra.mrb[0].mxu0 %v2645
        %v3717 = vpop.f32.mrb[0].mxu0
        %v3718 = vadd.f32 %v3161, %v3717
        %v3719 = vpop.f32.mrb[0].mxu0
        %v3720 = vpop.f32.mrb[0].mxu0
        %v3721 = vadd.f32 %v3161, %v3720
        %v3722 = vpop.f32.mrb[0].mxu0
        %3723 = vmatprep.mubr.bf16.mxu0 %v2825
        %3724 = vmatmul.mubr.bf16.gmra.mrb[0].mxu0 %v2646
        %v3725 = vpop.f32.mrb[0].mxu0
        %v3726 = vadd.f32 %v3161, %v3725
        %v3727 = vpop.f32.mrb[0].mxu0
        %v3728 = vpop.f32.mrb[0].mxu0
        %v3729 = vadd.f32 %v3161, %v3728
        %v3730 = vpop.f32.mrb[0].mxu0
        %3731 = vmatprep.mubr.bf16.mxu0 %v2837
        %3732 = vmatmul.mubr.bf16.gmra.mrb[0].mxu0 %v2647
        %v3733 = vpop.f32.mrb[0].mxu0
        %v3734 = vadd.f32 %v3161, %v3733
        %v3735 = vpop.f32.mrb[0].mxu0
        %v3736 = vpop.f32.mrb[0].mxu0
        %v3737 = vadd.f32 %v3161, %v3736
        %v3738 = vpop.f32.mrb[0].mxu0
        %3739 = vmatprep.mubr.bf16.mxu0 %v2849
        %3740 = vmatmul.mubr.bf16.gmra.mrb[0].mxu0 %v2648
        %v3741 = vpop.f32.mrb[0].mxu0
        %v3742 = vadd.f32 %v3161, %v3741
        %v3743 = vpop.f32.mrb[0].mxu0
        %v3744 = vpop.f32.mrb[0].mxu0
        %v3745 = vadd.f32 %v3161, %v3744
        %v3746 = vpop.f32.mrb[0].mxu0
        %3747 = vmatprep.mubr.bf16.mxu0 %v2861
        %3748 = vmatmul.mubr.bf16.gmra.mrb[0].mxu0 %v2649
        %v3749 = vpop.f32.mrb[0].mxu0
        %v3750 = vadd.f32 %v3161, %v3749
        %v3751 = vpop.f32.mrb[0].mxu0
        %v3752 = vpop.f32.mrb[0].mxu0
        %v3753 = vadd.f32 %v3161, %v3752
        %v3754 = vpop.f32.mrb[0].mxu0
        %3755 = vdwg.mxu0
        %3756 = vmatprep.subr.bf16.mxu0 0
        %3757 = vmatpush1.bf16.msra.mxu0 %v3467
        %3758 = vmatprep.subr.bf16.mxu0 0
        %3759 = vmatpush1.bf16.msra.mxu0 %v3468
        %3760 = vmatprep.subr.bf16.mxu0 0
        %3761 = vmatpush1.bf16.msra.mxu0 %v3469
        %3762 = vmatprep.subr.bf16.mxu0 0
        %3763 = vmatpush1.bf16.msra.mxu0 %v3470
        %3764 = vmatprep.subr.bf16.mxu0 0
        %3765 = vmatpush1.bf16.msra.mxu0 %v3471
        %3766 = vmatprep.subr.bf16.mxu0 0
        %3767 = vmatpush1.bf16.msra.mxu0 %v3472
        %3768 = vmatprep.subr.bf16.mxu0 0
        %3769 = vmatpush1.bf16.msra.mxu0 %v3473
        %3770 = vmatprep.subr.bf16.mxu0 0
        %3771 = vmatpush1.bf16.msra.mxu0 %v3474
        %3772 = vmatprep.subr.bf16.mxu0 0
        %3773 = vmatpush1.bf16.msra.mxu0 %v3475
        %3774 = vmatprep.subr.bf16.mxu0 0
        %3775 = vmatpush1.bf16.msra.mxu0 %v3476
        %3776 = vmatprep.subr.bf16.mxu0 0
        %3777 = vmatpush1.bf16.msra.mxu0 %v3477
        %3778 = vmatprep.subr.bf16.mxu0 0
        %3779 = vmatpush1.bf16.msra.mxu0 %v3478
        %3780 = vmatprep.subr.bf16.mxu0 0
        %3781 = vmatpush1.bf16.msra.mxu0 %v3479
        %3782 = vmatprep.subr.bf16.mxu0 0
        %3783 = vmatpush1.bf16.msra.mxu0 %v3480
        %3784 = vmatprep.subr.bf16.mxu0 0
        %3785 = vmatpush1.bf16.msra.mxu0 %v3481
        %3786 = vmatprep.subr.bf16.mxu0 0
        %3787 = vmatpush1.bf16.msra.mxu0 %v3482
        %3788 = vmatprep.mubr.bf16.mxu0 %v2635
        %3789 = vmatmul.mubr.bf16.gmra.mrb[0].mxu0 %v2912
        %v3790 = vpop.f32.mrb[0].mxu0
        %v3791 = vadd.f32 %v3630, %v3790
        %v3792 = vpop.f32.mrb[0].mxu0
        %v3793 = vpop.f32.mrb[0].mxu0
        %v3794 = vadd.f32 %v3633, %v3793
        %v3795 = vpop.f32.mrb[0].mxu0
        %3796 = vmatprep.mubr.bf16.mxu0 %v2636
        %3797 = vmatmul.mubr.bf16.gmra.mrb[0].mxu0 %v2915
        %v3798 = vpop.f32.mrb[0].mxu0
        %v3799 = vadd.f32 %v3638, %v3798
        %v3800 = vpop.f32.mrb[0].mxu0
        %v3801 = vpop.f32.mrb[0].mxu0
        %v3802 = vadd.f32 %v3641, %v3801
        %v3803 = vpop.f32.mrb[0].mxu0
        %3804 = vmatprep.mubr.bf16.mxu0 %v2637
        %3805 = vmatmul.mubr.bf16.gmra.mrb[0].mxu0 %v2918
        %v3806 = vpop.f32.mrb[0].mxu0
        %v3807 = vadd.f32 %v3646, %v3806
        %v3808 = vpop.f32.mrb[0].mxu0
        %v3809 = vpop.f32.mrb[0].mxu0
        %v3810 = vadd.f32 %v3649, %v3809
        %v3811 = vpop.f32.mrb[0].mxu0
        %3812 = vmatprep.mubr.bf16.mxu0 %v2638
        %3813 = vmatmul.mubr.bf16.gmra.mrb[0].mxu0 %v2921
        %v3814 = vpop.f32.mrb[0].mxu0
        %v3815 = vadd.f32 %v3654, %v3814
        %v3816 = vpop.f32.mrb[0].mxu0
        %v3817 = vpop.f32.mrb[0].mxu0
        %v3818 = vadd.f32 %v3657, %v3817
        %v3819 = vpop.f32.mrb[0].mxu0
        %3820 = vmatprep.mubr.bf16.mxu0 %v2639
        %3821 = vmatmul.mubr.bf16.gmra.mrb[0].mxu0 %v2924
        %v3822 = vpop.f32.mrb[0].mxu0
        %v3823 = vadd.f32 %v3662, %v3822
        %v3824 = vpop.f32.mrb[0].mxu0
        %v3825 = vpop.f32.mrb[0].mxu0
        %v3826 = vadd.f32 %v3665, %v3825
        %v3827 = vpop.f32.mrb[0].mxu0
        %3828 = vmatprep.mubr.bf16.mxu0 %v2640
        %3829 = vmatmul.mubr.bf16.gmra.mrb[0].mxu0 %v2927
        %v3830 = vpop.f32.mrb[0].mxu0
        %v3831 = vadd.f32 %v3670, %v3830
        %v3832 = vpop.f32.mrb[0].mxu0
        %v3833 = vpop.f32.mrb[0].mxu0
        %v3834 = vadd.f32 %v3673, %v3833
        %v3835 = vpop.f32.mrb[0].mxu0
        %3836 = vmatprep.mubr.bf16.mxu0 %v2641
        %3837 = vmatmul.mubr.bf16.gmra.mrb[0].mxu0 %v2930
        %v3838 = vpop.f32.mrb[0].mxu0
        %v3839 = vadd.f32 %v3678, %v3838
        %v3840 = vpop.f32.mrb[0].mxu0
        %v3841 = vpop.f32.mrb[0].mxu0
        %v3842 = vadd.f32 %v3681, %v3841
        %v3843 = vpop.f32.mrb[0].mxu0
        %3844 = vmatprep.mubr.bf16.mxu0 %v2642
        %3845 = vmatmul.mubr.bf16.gmra.mrb[0].mxu0 %v2933
        %v3846 = vpop.f32.mrb[0].mxu0
        %v3847 = vadd.f32 %v3686, %v3846
        %v3848 = vpop.f32.mrb[0].mxu0
        %v3849 = vpop.f32.mrb[0].mxu0
        %v3850 = vadd.f32 %v3689, %v3849
        %v3851 = vpop.f32.mrb[0].mxu0
        %3852 = vmatprep.mubr.bf16.mxu0 %v2643
        %3853 = vmatmul.mubr.bf16.gmra.mrb[0].mxu0 %v2936
        %v3854 = vpop.f32.mrb[0].mxu0
        %v3855 = vadd.f32 %v3694, %v3854
        %v3856 = vpop.f32.mrb[0].mxu0
        %v3857 = vpop.f32.mrb[0].mxu0
        %v3858 = vadd.f32 %v3697, %v3857
        %v3859 = vpop.f32.mrb[0].mxu0
        %3860 = vmatprep.mubr.bf16.mxu0 %v2644
        %3861 = vmatmul.mubr.bf16.gmra.mrb[0].mxu0 %v2939
        %v3862 = vpop.f32.mrb[0].mxu0
        %v3863 = vadd.f32 %v3702, %v3862
        %v3864 = vpop.f32.mrb[0].mxu0
        %v3865 = vpop.f32.mrb[0].mxu0
        %v3866 = vadd.f32 %v3705, %v3865
        %v3867 = vpop.f32.mrb[0].mxu0
        %3868 = vmatprep.mubr.bf16.mxu0 %v2645
        %3869 = vmatmul.mubr.bf16.gmra.mrb[0].mxu0 %v2942
        %v3870 = vpop.f32.mrb[0].mxu0
        %v3871 = vadd.f32 %v3710, %v3870
        %v3872 = vpop.f32.mrb[0].mxu0
        %v3873 = vpop.f32.mrb[0].mxu0
        %v3874 = vadd.f32 %v3713, %v3873
        %v3875 = vpop.f32.mrb[0].mxu0
        %3876 = vmatprep.mubr.bf16.mxu0 %v2646
        %3877 = vmatmul.mubr.bf16.gmra.mrb[0].mxu0 %v2945
        %v3878 = vpop.f32.mrb[0].mxu0
        %v3879 = vadd.f32 %v3718, %v3878
        %v3880 = vpop.f32.mrb[0].mxu0
        %v3881 = vpop.f32.mrb[0].mxu0
        %v3882 = vadd.f32 %v3721, %v3881
        %v3883 = vpop.f32.mrb[0].mxu0
        %3884 = vmatprep.mubr.bf16.mxu0 %v2647
        %3885 = vmatmul.mubr.bf16.gmra.mrb[0].mxu0 %v2948
        %v3886 = vpop.f32.mrb[0].mxu0
        %v3887 = vadd.f32 %v3726, %v3886
        %v3888 = vpop.f32.mrb[0].mxu0
        %v3889 = vpop.f32.mrb[0].mxu0
        %v3890 = vadd.f32 %v3729, %v3889
        %v3891 = vpop.f32.mrb[0].mxu0
        %3892 = vmatprep.mubr.bf16.mxu0 %v2648
        %3893 = vmatmul.mubr.bf16.gmra.mrb[0].mxu0 %v2951
        %v3894 = vpop.f32.mrb[0].mxu0
        %v3895 = vadd.f32 %v3734, %v3894
        %v3896 = vpop.f32.mrb[0].mxu0
        %v3897 = vpop.f32.mrb[0].mxu0
        %v3898 = vadd.f32 %v3737, %v3897
        %v3899 = vpop.f32.mrb[0].mxu0
        %3900 = vmatprep.mubr.bf16.mxu0 %v2649
        %3901 = vmatmul.mubr.bf16.gmra.mrb[0].mxu0 %v2954
        %v3902 = vpop.f32.mrb[0].mxu0
        %v3903 = vadd.f32 %v3742, %v3902
        %v3904 = vpop.f32.mrb[0].mxu0
        %v3905 = vpop.f32.mrb[0].mxu0
        %v3906 = vadd.f32 %v3745, %v3905
        %v3907 = vpop.f32.mrb[0].mxu0
        %3908 = vmatprep.mubr.bf16.mxu0 %v2650
        %3909 = vmatmul.mubr.bf16.gmra.mrb[0].mxu0 %v2957
        %v3910 = vpop.f32.mrb[0].mxu0
        %v3911 = vadd.f32 %v3750, %v3910
        %v3912 = vpop.f32.mrb[0].mxu0
        %v3913 = vpop.f32.mrb[0].mxu0
        %v3914 = vadd.f32 %v3753, %v3913
        %v3915 = vpop.f32.mrb[0].mxu0
        %3916 = vdwg.mxu0
        %3917 = vmatprep.subr.bf16.mxu0 0
        %3918 = vmatpush1.bf16.msra.mxu0 %v3483
        %3919 = vmatprep.subr.bf16.mxu0 0
        %3920 = vmatpush1.bf16.msra.mxu0 %v3484
        %3921 = vmatprep.subr.bf16.mxu0 0
        %3922 = vmatpush1.bf16.msra.mxu0 %v3485
        %3923 = vmatprep.subr.bf16.mxu0 0
        %3924 = vmatpush1.bf16.msra.mxu0 %v3486
        %3925 = vmatprep.subr.bf16.mxu0 0
        %3926 = vmatpush1.bf16.msra.mxu0 %v3487
        %3927 = vmatprep.subr.bf16.mxu0 0
        %3928 = vmatpush1.bf16.msra.mxu0 %v3488
        %3929 = vmatprep.subr.bf16.mxu0 0
        %3930 = vmatpush1.bf16.msra.mxu0 %v3489
        %3931 = vmatprep.subr.bf16.mxu0 0
        %3932 = vmatpush1.bf16.msra.mxu0 %v3490
        %3933 = vmatprep.subr.bf16.mxu0 0
        %3934 = vmatpush1.bf16.msra.mxu0 %v3491
        %3935 = vmatprep.subr.bf16.mxu0 0
        %3936 = vmatpush1.bf16.msra.mxu0 %v3492
        %3937 = vmatprep.subr.bf16.mxu0 0
        %3938 = vmatpush1.bf16.msra.mxu0 %v3493
        %3939 = vmatprep.subr.bf16.mxu0 0
        %3940 = vmatpush1.bf16.msra.mxu0 %v3494
        %3941 = vmatprep.subr.bf16.mxu0 0
        %3942 = vmatpush1.bf16.msra.mxu0 %v3495
        %3943 = vmatprep.subr.bf16.mxu0 0
        %3944 = vmatpush1.bf16.msra.mxu0 %v3496
        %3945 = vmatprep.subr.bf16.mxu0 0
        %3946 = vmatpush1.bf16.msra.mxu0 %v3497
        %3947 = vmatprep.subr.bf16.mxu0 0
        %3948 = vmatpush1.bf16.msra.mxu0 %v3498
        %3949 = vmatprep.mubr.bf16.mxu0 %v2915
        %3950 = vmatmul.mubr.bf16.gmra.mrb[0].mxu0 %v2693
        %v3951 = vpop.f32.mrb[0].mxu0
        %v3952 = vadd.f32 %v3791, %v3951
        %v3953 = vpop.f32.mrb[0].mxu0
        %v3954 = vpop.f32.mrb[0].mxu0
        %v3955 = vadd.f32 %v3794, %v3954
        %v3956 = vpop.f32.mrb[0].mxu0
        %3957 = vmatprep.mubr.bf16.mxu0 %v2918
        %3958 = vmatmul.mubr.bf16.gmra.mrb[0].mxu0 %v2705
        %v3959 = vpop.f32.mrb[0].mxu0
        %v3960 = vadd.f32 %v3799, %v3959
        %v3961 = vpop.f32.mrb[0].mxu0
        %v3962 = vpop.f32.mrb[0].mxu0
        %v3963 = vadd.f32 %v3802, %v3962
        %v3964 = vpop.f32.mrb[0].mxu0
        %3965 = vmatprep.mubr.bf16.mxu0 %v2921
        %3966 = vmatmul.mubr.bf16.gmra.mrb[0].mxu0 %v2717
        %v3967 = vpop.f32.mrb[0].mxu0
        %v3968 = vadd.f32 %v3807, %v3967
        %v3969 = vpop.f32.mrb[0].mxu0
        %v3970 = vpop.f32.mrb[0].mxu0
        %v3971 = vadd.f32 %v3810, %v3970
        %v3972 = vpop.f32.mrb[0].mxu0
        %3973 = vmatprep.mubr.bf16.mxu0 %v2924
        %3974 = vmatmul.mubr.bf16.gmra.mrb[0].mxu0 %v2729
        %v3975 = vpop.f32.mrb[0].mxu0
        %v3976 = vadd.f32 %v3815, %v3975
        %v3977 = vpop.f32.mrb[0].mxu0
        %v3978 = vpop.f32.mrb[0].mxu0
        %v3979 = vadd.f32 %v3818, %v3978
        %v3980 = vpop.f32.mrb[0].mxu0
        %3981 = vmatprep.mubr.bf16.mxu0 %v2927
        %3982 = vmatmul.mubr.bf16.gmra.mrb[0].mxu0 %v2741
        %v3983 = vpop.f32.mrb[0].mxu0
        %v3984 = vadd.f32 %v3823, %v3983
        %v3985 = vpop.f32.mrb[0].mxu0
        %v3986 = vpop.f32.mrb[0].mxu0
        %v3987 = vadd.f32 %v3826, %v3986
        %v3988 = vpop.f32.mrb[0].mxu0
        %3989 = vmatprep.mubr.bf16.mxu0 %v2930
        %3990 = vmatmul.mubr.bf16.gmra.mrb[0].mxu0 %v2753
        %v3991 = vpop.f32.mrb[0].mxu0
        %v3992 = vadd.f32 %v3831, %v3991
        %v3993 = vpop.f32.mrb[0].mxu0
        %v3994 = vpop.f32.mrb[0].mxu0
        %v3995 = vadd.f32 %v3834, %v3994
        %v3996 = vpop.f32.mrb[0].mxu0
        %3997 = vmatprep.mubr.bf16.mxu0 %v2933
        %3998 = vmatmul.mubr.bf16.gmra.mrb[0].mxu0 %v2765
        %v3999 = vpop.f32.mrb[0].mxu0
        %v4000 = vadd.f32 %v3839, %v3999
        %v4001 = vpop.f32.mrb[0].mxu0
        %v4002 = vpop.f32.mrb[0].mxu0
        %v4003 = vadd.f32 %v3842, %v4002
        %v4004 = vpop.f32.mrb[0].mxu0
        %4005 = vmatprep.mubr.bf16.mxu0 %v2936
        %4006 = vmatmul.mubr.bf16.gmra.mrb[0].mxu0 %v2777
        %v4007 = vpop.f32.mrb[0].mxu0
        %v4008 = vadd.f32 %v3847, %v4007
        %v4009 = vpop.f32.mrb[0].mxu0
        %v4010 = vpop.f32.mrb[0].mxu0
        %v4011 = vadd.f32 %v3850, %v4010
        %v4012 = vpop.f32.mrb[0].mxu0
        %4013 = vmatprep.mubr.bf16.mxu0 %v2939
        %4014 = vmatmul.mubr.bf16.gmra.mrb[0].mxu0 %v2789
        %v4015 = vpop.f32.mrb[0].mxu0
        %v4016 = vadd.f32 %v3855, %v4015
        %v4017 = vpop.f32.mrb[0].mxu0
        %v4018 = vpop.f32.mrb[0].mxu0
        %v4019 = vadd.f32 %v3858, %v4018
        %v4020 = vpop.f32.mrb[0].mxu0
        %4021 = vmatprep.mubr.bf16.mxu0 %v2942
        %4022 = vmatmul.mubr.bf16.gmra.mrb[0].mxu0 %v2801
        %v4023 = vpop.f32.mrb[0].mxu0
        %v4024 = vadd.f32 %v3863, %v4023
        %v4025 = vpop.f32.mrb[0].mxu0
        %v4026 = vpop.f32.mrb[0].mxu0
        %v4027 = vadd.f32 %v3866, %v4026
        %v4028 = vpop.f32.mrb[0].mxu0
        %4029 = vmatprep.mubr.bf16.mxu0 %v2945
        %4030 = vmatmul.mubr.bf16.gmra.mrb[0].mxu0 %v2813
        %v4031 = vpop.f32.mrb[0].mxu0
        %v4032 = vadd.f32 %v3871, %v4031
        %v4033 = vpop.f32.mrb[0].mxu0
        %v4034 = vpop.f32.mrb[0].mxu0
        %v4035 = vadd.f32 %v3874, %v4034
        %v4036 = vpop.f32.mrb[0].mxu0
        %4037 = vmatprep.mubr.bf16.mxu0 %v2948
        %4038 = vmatmul.mubr.bf16.gmra.mrb[0].mxu0 %v2825
        %v4039 = vpop.f32.mrb[0].mxu0
        %v4040 = vadd.f32 %v3879, %v4039
        %v4041 = vpop.f32.mrb[0].mxu0
        %v4042 = vpop.f32.mrb[0].mxu0
        %v4043 = vadd.f32 %v3882, %v4042
        %v4044 = vpop.f32.mrb[0].mxu0
        %4045 = vmatprep.mubr.bf16.mxu0 %v2951
        %4046 = vmatmul.mubr.bf16.gmra.mrb[0].mxu0 %v2837
        %v4047 = vpop.f32.mrb[0].mxu0
        %v4048 = vadd.f32 %v3887, %v4047
        %v4049 = vpop.f32.mrb[0].mxu0
        %v4050 = vpop.f32.mrb[0].mxu0
        %v4051 = vadd.f32 %v3890, %v4050
        %v4052 = vpop.f32.mrb[0].mxu0
        %4053 = vmatprep.mubr.bf16.mxu0 %v2954
        %4054 = vmatmul.mubr.bf16.gmra.mrb[0].mxu0 %v2849
        %v4055 = vpop.f32.mrb[0].mxu0
        %v4056 = vadd.f32 %v3895, %v4055
        %v4057 = vpop.f32.mrb[0].mxu0
        %v4058 = vpop.f32.mrb[0].mxu0
        %v4059 = vadd.f32 %v3898, %v4058
        %v4060 = vpop.f32.mrb[0].mxu0
        %4061 = vmatprep.mubr.bf16.mxu0 %v2957
        %4062 = vmatmul.mubr.bf16.gmra.mrb[0].mxu0 %v2861
        %v4063 = vpop.f32.mrb[0].mxu0
        %v4064 = vadd.f32 %v3903, %v4063
        %v4065 = vpop.f32.mrb[0].mxu0
        %v4066 = vpop.f32.mrb[0].mxu0
        %v4067 = vadd.f32 %v3906, %v4066
        %v4068 = vpop.f32.mrb[0].mxu0
        %4069 = vmatprep.mubr.bf16.mxu0 %v2991
        %4070 = vmatmul.mubr.bf16.gmra.mrb[0].mxu0 %v2985
        %v4071 = vpop.f32.mrb[0].mxu0
        %v4072 = vadd.f32 %v3911, %v4071
        %v4073 = vpop.f32.mrb[0].mxu0
        %v4074 = vpop.f32.mrb[0].mxu0
        %v4075 = vadd.f32 %v3914, %v4074
        %v4076 = vpop.f32.mrb[0].mxu0
        %4077 = vdwg.mxu0
        %4078 = vmatprep.subr.bf16.mxu0 0
        %4079 = vmatpush1.bf16.msra.mxu0 %v3499
        %4080 = vmatprep.subr.bf16.mxu0 0
        %4081 = vmatpush1.bf16.msra.mxu0 %v3500
        %4082 = vmatprep.subr.bf16.mxu0 0
        %4083 = vmatpush1.bf16.msra.mxu0 %v3501
        %4084 = vmatprep.subr.bf16.mxu0 0
        %4085 = vmatpush1.bf16.msra.mxu0 %v3502
        %4086 = vmatprep.subr.bf16.mxu0 0
        %4087 = vmatpush1.bf16.msra.mxu0 %v3503
        %4088 = vmatprep.subr.bf16.mxu0 0
        %4089 = vmatpush1.bf16.msra.mxu0 %v3504
        %4090 = vmatprep.subr.bf16.mxu0 0
        %4091 = vmatpush1.bf16.msra.mxu0 %v3505
        %4092 = vmatprep.subr.bf16.mxu0 0
        %4093 = vmatpush1.bf16.msra.mxu0 %v3506
        %4094 = vmatprep.subr.bf16.mxu0 0
        %4095 = vmatpush1.bf16.msra.mxu0 %v3507
        %4096 = vmatprep.subr.bf16.mxu0 0
        %4097 = vmatpush1.bf16.msra.mxu0 %v3508
        %4098 = vmatprep.subr.bf16.mxu0 0
        %4099 = vmatpush1.bf16.msra.mxu0 %v3509
        %4100 = vmatprep.subr.bf16.mxu0 0
        %4101 = vmatpush1.bf16.msra.mxu0 %v3510
        %4102 = vmatprep.subr.bf16.mxu0 0
        %4103 = vmatpush1.bf16.msra.mxu0 %v3511
        %4104 = vmatprep.subr.bf16.mxu0 0
        %4105 = vmatpush1.bf16.msra.mxu0 %v3512
        %4106 = vmatprep.subr.bf16.mxu0 0
        %4107 = vmatpush1.bf16.msra.mxu0 %v3513
        %4108 = vmatprep.subr.bf16.mxu0 0
        %4109 = vmatpush1.bf16.msra.mxu0 %v3514
        %4110 = vmatprep.mubr.bf16.mxu0 %v2705
        %4111 = vmatmul.mubr.bf16.gmra.mrb[0].mxu0 %v2636
        %v4112 = vpop.f32.mrb[0].mxu0
        %v4113 = vadd.f32 %v3952, %v4112
        %v4114 = vpop.f32.mrb[0].mxu0
        %v4115 = vpop.f32.mrb[0].mxu0
        %v4116 = vadd.f32 %v3955, %v4115
        %v4117 = vpop.f32.mrb[0].mxu0
        %4118 = vmatprep.mubr.bf16.mxu0 %v2717
        %4119 = vmatmul.mubr.bf16.gmra.mrb[0].mxu0 %v2637
        %v4120 = vpop.f32.mrb[0].mxu0
        %v4121 = vadd.f32 %v3960, %v4120
        %v4122 = vpop.f32.mrb[0].mxu0
        %v4123 = vpop.f32.mrb[0].mxu0
        %v4124 = vadd.f32 %v3963, %v4123
        %v4125 = vpop.f32.mrb[0].mxu0
        %4126 = vmatprep.mubr.bf16.mxu0 %v2729
        %4127 = vmatmul.mubr.bf16.gmra.mrb[0].mxu0 %v2638
        %v4128 = vpop.f32.mrb[0].mxu0
        %v4129 = vadd.f32 %v3968, %v4128
        %v4130 = vpop.f32.mrb[0].mxu0
        %v4131 = vpop.f32.mrb[0].mxu0
        %v4132 = vadd.f32 %v3971, %v4131
        %v4133 = vpop.f32.mrb[0].mxu0
        %4134 = vmatprep.mubr.bf16.mxu0 %v2741
        %4135 = vmatmul.mubr.bf16.gmra.mrb[0].mxu0 %v2639
        %v4136 = vpop.f32.mrb[0].mxu0
        %v4137 = vadd.f32 %v3976, %v4136
        %v4138 = vpop.f32.mrb[0].mxu0
        %v4139 = vpop.f32.mrb[0].mxu0
        %v4140 = vadd.f32 %v3979, %v4139
        %v4141 = vpop.f32.mrb[0].mxu0
        %4142 = vmatprep.mubr.bf16.mxu0 %v2753
        %4143 = vmatmul.mubr.bf16.gmra.mrb[0].mxu0 %v2640
        %v4144 = vpop.f32.mrb[0].mxu0
        %v4145 = vadd.f32 %v3984, %v4144
        %v4146 = vpop.f32.mrb[0].mxu0
        %v4147 = vpop.f32.mrb[0].mxu0
        %v4148 = vadd.f32 %v3987, %v4147
        %v4149 = vpop.f32.mrb[0].mxu0
        %4150 = vmatprep.mubr.bf16.mxu0 %v2765
        %4151 = vmatmul.mubr.bf16.gmra.mrb[0].mxu0 %v2641
        %v4152 = vpop.f32.mrb[0].mxu0
        %v4153 = vadd.f32 %v3992, %v4152
        %v4154 = vpop.f32.mrb[0].mxu0
        %v4155 = vpop.f32.mrb[0].mxu0
        %v4156 = vadd.f32 %v3995, %v4155
        %v4157 = vpop.f32.mrb[0].mxu0
        %4158 = vmatprep.mubr.bf16.mxu0 %v2777
        %4159 = vmatmul.mubr.bf16.gmra.mrb[0].mxu0 %v2642
        %v4160 = vpop.f32.mrb[0].mxu0
        %v4161 = vadd.f32 %v4000, %v4160
        %v4162 = vpop.f32.mrb[0].mxu0
        %v4163 = vpop.f32.mrb[0].mxu0
        %v4164 = vadd.f32 %v4003, %v4163
        %v4165 = vpop.f32.mrb[0].mxu0
        %4166 = vmatprep.mubr.bf16.mxu0 %v2789
        %4167 = vmatmul.mubr.bf16.gmra.mrb[0].mxu0 %v2643
        %v4168 = vpop.f32.mrb[0].mxu0
        %v4169 = vadd.f32 %v4008, %v4168
        %v4170 = vpop.f32.mrb[0].mxu0
        %v4171 = vpop.f32.mrb[0].mxu0
        %v4172 = vadd.f32 %v4011, %v4171
        %v4173 = vpop.f32.mrb[0].mxu0
        %4174 = vmatprep.mubr.bf16.mxu0 %v2801
        %4175 = vmatmul.mubr.bf16.gmra.mrb[0].mxu0 %v2644
        %v4176 = vpop.f32.mrb[0].mxu0
        %v4177 = vadd.f32 %v4016, %v4176
        %v4178 = vpop.f32.mrb[0].mxu0
        %v4179 = vpop.f32.mrb[0].mxu0
        %v4180 = vadd.f32 %v4019, %v4179
        %v4181 = vpop.f32.mrb[0].mxu0
        %4182 = vmatprep.mubr.bf16.mxu0 %v2813
        %4183 = vmatmul.mubr.bf16.gmra.mrb[0].mxu0 %v2645
        %v4184 = vpop.f32.mrb[0].mxu0
        %v4185 = vadd.f32 %v4024, %v4184
        %v4186 = vpop.f32.mrb[0].mxu0
        %v4187 = vpop.f32.mrb[0].mxu0
        %v4188 = vadd.f32 %v4027, %v4187
        %v4189 = vpop.f32.mrb[0].mxu0
        %4190 = vmatprep.mubr.bf16.mxu0 %v2825
        %4191 = vmatmul.mubr.bf16.gmra.mrb[0].mxu0 %v2646
        %v4192 = vpop.f32.mrb[0].mxu0
        %v4193 = vadd.f32 %v4032, %v4192
        %v4194 = vpop.f32.mrb[0].mxu0
        %v4195 = vpop.f32.mrb[0].mxu0
        %v4196 = vadd.f32 %v4035, %v4195
        %v4197 = vpop.f32.mrb[0].mxu0
        %4198 = vmatprep.mubr.bf16.mxu0 %v2837
        %4199 = vmatmul.mubr.bf16.gmra.mrb[0].mxu0 %v2647
        %v4200 = vpop.f32.mrb[0].mxu0
        %v4201 = vadd.f32 %v4040, %v4200
        %v4202 = vpop.f32.mrb[0].mxu0
        %v4203 = vpop.f32.mrb[0].mxu0
        %v4204 = vadd.f32 %v4043, %v4203
        %v4205 = vpop.f32.mrb[0].mxu0
        %4206 = vmatprep.mubr.bf16.mxu0 %v2849
        %4207 = vmatmul.mubr.bf16.gmra.mrb[0].mxu0 %v2648
        %v4208 = vpop.f32.mrb[0].mxu0
        %v4209 = vadd.f32 %v4048, %v4208
        %v4210 = vpop.f32.mrb[0].mxu0
        %v4211 = vpop.f32.mrb[0].mxu0
        %v4212 = vadd.f32 %v4051, %v4211
        %v4213 = vpop.f32.mrb[0].mxu0
        %4214 = vmatprep.mubr.bf16.mxu0 %v2861
        %4215 = vmatmul.mubr.bf16.gmra.mrb[0].mxu0 %v2649
        %v4216 = vpop.f32.mrb[0].mxu0
        %v4217 = vadd.f32 %v4056, %v4216
        %v4218 = vpop.f32.mrb[0].mxu0
        %v4219 = vpop.f32.mrb[0].mxu0
        %v4220 = vadd.f32 %v4059, %v4219
        %v4221 = vpop.f32.mrb[0].mxu0
        %4222 = vmatprep.mubr.bf16.mxu0 %v2985
        %4223 = vmatmul.mubr.bf16.gmra.mrb[0].mxu0 %v2650
        %v4224 = vpop.f32.mrb[0].mxu0
        %v4225 = vadd.f32 %v4064, %v4224
        %v4226 = vpop.f32.mrb[0].mxu0
        %v4227 = vpop.f32.mrb[0].mxu0
        %v4228 = vadd.f32 %v4067, %v4227
        %v4229 = vpop.f32.mrb[0].mxu0
        %4230 = vmatprep.mubr.bf16.mxu0 %v3004
        %4231 = vmatmul.mubr.bf16.gmra.mrb[0].mxu0 %v2651
        %v4232 = vpop.f32.mrb[0].mxu0
        %v4233 = vadd.f32 %v4072, %v4232
        %v4234 = vpop.f32.mrb[0].mxu0
        %v4235 = vpop.f32.mrb[0].mxu0
        %v4236 = vadd.f32 %v4075, %v4235
        %v4237 = vpop.f32.mrb[0].mxu0
        %4238 = vdwg.mxu0
        %4239 = vmatprep.subr.bf16.mxu0 0
        %4240 = vmatpush1.bf16.msra.mxu0 %v3515
        %4241 = vmatprep.subr.bf16.mxu0 0
        %4242 = vmatpush1.bf16.msra.mxu0 %v3516
        %4243 = vmatprep.subr.bf16.mxu0 0
        %4244 = vmatpush1.bf16.msra.mxu0 %v3517
        %4245 = vmatprep.subr.bf16.mxu0 0
        %4246 = vmatpush1.bf16.msra.mxu0 %v3518
        %4247 = vmatprep.subr.bf16.mxu0 0
        %4248 = vmatpush1.bf16.msra.mxu0 %v3519
        %4249 = vmatprep.subr.bf16.mxu0 0
        %4250 = vmatpush1.bf16.msra.mxu0 %v3520
        %4251 = vmatprep.subr.bf16.mxu0 0
        %4252 = vmatpush1.bf16.msra.mxu0 %v3521
        %4253 = vmatprep.subr.bf16.mxu0 0
        %4254 = vmatpush1.bf16.msra.mxu0 %v3522
        %4255 = vmatprep.subr.bf16.mxu0 0
        %4256 = vmatpush1.bf16.msra.mxu0 0
        %4257 = vmatprep.subr.bf16.mxu0 0
        %4258 = vmatpush1.bf16.msra.mxu0 0
        %4259 = vmatprep.subr.bf16.mxu0 0
        %4260 = vmatpush1.bf16.msra.mxu0 0
        %4261 = vmatprep.subr.bf16.mxu0 0
        %4262 = vmatpush1.bf16.msra.mxu0 0
        %4263 = vmatprep.subr.bf16.mxu0 0
        %4264 = vmatpush1.bf16.msra.mxu0 0
        %4265 = vmatprep.subr.bf16.mxu0 0
        %4266 = vmatpush1.bf16.msra.mxu0 0
        %4267 = vmatprep.subr.bf16.mxu0 0
        %4268 = vmatpush1.bf16.msra.mxu0 0
        %4269 = vmatprep.subr.bf16.mxu0 0
        %4270 = vmatpush1.bf16.msra.mxu0 0
        %4271 = vmatprep.mubr.bf16.mxu0 0
        %4272 = vmatmul.mubr.bf16.gmra.mrb[0].mxu0 %v2918
        %v4273 = vpop.f32.mrb[0].mxu0
        %v4274 = vadd.f32 %v4113, %v4273
        %v4275 = vpop.f32.mrb[0].mxu0
        %v4276 = vpop.f32.mrb[0].mxu0
        %v4277 = vadd.f32 %v4116, %v4276
        %v4278 = vpop.f32.mrb[0].mxu0
        %4279 = vmatprep.mubr.bf16.mxu0 0
        %4280 = vmatmul.mubr.bf16.gmra.mrb[0].mxu0 %v2921
        %v4281 = vpop.f32.mrb[0].mxu0
        %v4282 = vadd.f32 %v4121, %v4281
        %v4283 = vpop.f32.mrb[0].mxu0
        %v4284 = vpop.f32.mrb[0].mxu0
        %v4285 = vadd.f32 %v4124, %v4284
        %v4286 = vpop.f32.mrb[0].mxu0
        %4287 = vmatprep.mubr.bf16.mxu0 0
        %4288 = vmatmul.mubr.bf16.gmra.mrb[0].mxu0 %v2924
        %v4289 = vpop.f32.mrb[0].mxu0
        %v4290 = vadd.f32 %v4129, %v4289
        %v4291 = vpop.f32.mrb[0].mxu0
        %v4292 = vpop.f32.mrb[0].mxu0
        %v4293 = vadd.f32 %v4132, %v4292
        %v4294 = vpop.f32.mrb[0].mxu0
        %4295 = vmatprep.mubr.bf16.mxu0 0
        %4296 = vmatmul.mubr.bf16.gmra.mrb[0].mxu0 %v2927
        %v4297 = vpop.f32.mrb[0].mxu0
        %v4298 = vadd.f32 %v4137, %v4297
        %v4299 = vpop.f32.mrb[0].mxu0
        %v4300 = vpop.f32.mrb[0].mxu0
        %v4301 = vadd.f32 %v4140, %v4300
        %v4302 = vpop.f32.mrb[0].mxu0
        %4303 = vmatprep.mubr.bf16.mxu0 0
        %4304 = vmatmul.mubr.bf16.gmra.mrb[0].mxu0 %v2930
        %v4305 = vpop.f32.mrb[0].mxu0
        %v4306 = vadd.f32 %v4145, %v4305
        %v4307 = vpop.f32.mrb[0].mxu0
        %v4308 = vpop.f32.mrb[0].mxu0
        %v4309 = vadd.f32 %v4148, %v4308
        %v4310 = vpop.f32.mrb[0].mxu0
        %4311 = vmatprep.mubr.bf16.mxu0 0
        %4312 = vmatmul.mubr.bf16.gmra.mrb[0].mxu0 %v2933
        %v4313 = vpop.f32.mrb[0].mxu0
        %v4314 = vadd.f32 %v4153, %v4313
        %v4315 = vpop.f32.mrb[0].mxu0
        %v4316 = vpop.f32.mrb[0].mxu0
        %v4317 = vadd.f32 %v4156, %v4316
        %v4318 = vpop.f32.mrb[0].mxu0
        %4319 = vmatprep.mubr.bf16.mxu0 0
        %4320 = vmatmul.mubr.bf16.gmra.mrb[0].mxu0 %v2936
        %v4321 = vpop.f32.mrb[0].mxu0
        %v4322 = vadd.f32 %v4161, %v4321
        %v4323 = vpop.f32.mrb[0].mxu0
        %v4324 = vpop.f32.mrb[0].mxu0
        %v4325 = vadd.f32 %v4164, %v4324
        %v4326 = vpop.f32.mrb[0].mxu0
        %4327 = vmatprep.mubr.bf16.mxu0 0
        %4328 = vmatmul.mubr.bf16.gmra.mrb[0].mxu0 %v2939
        %v4329 = vpop.f32.mrb[0].mxu0
        %v4330 = vadd.f32 %v4169, %v4329
        %v4331 = vpop.f32.mrb[0].mxu0
        %v4332 = vpop.f32.mrb[0].mxu0
        %v4333 = vadd.f32 %v4172, %v4332
        %v4334 = vpop.f32.mrb[0].mxu0
        %4335 = vmatprep.mubr.bf16.mxu0 0
        %4336 = vmatmul.mubr.bf16.gmra.mrb[0].mxu0 %v2942
        %v4337 = vpop.f32.mrb[0].mxu0
        %v4338 = vadd.f32 %v4177, %v4337
        %v4339 = vpop.f32.mrb[0].mxu0
        %v4340 = vpop.f32.mrb[0].mxu0
        %v4341 = vadd.f32 %v4180, %v4340
        %v4342 = vpop.f32.mrb[0].mxu0
        %4343 = vmatprep.mubr.bf16.mxu0 0
        %4344 = vmatmul.mubr.bf16.gmra.mrb[0].mxu0 %v2945
        %v4345 = vpop.f32.mrb[0].mxu0
        %v4346 = vadd.f32 %v4185, %v4345
        %v4347 = vpop.f32.mrb[0].mxu0
        %v4348 = vpop.f32.mrb[0].mxu0
        %v4349 = vadd.f32 %v4188, %v4348
        %v4350 = vpop.f32.mrb[0].mxu0
        %4351 = vmatprep.mubr.bf16.mxu0 0
        %4352 = vmatmul.mubr.bf16.gmra.mrb[0].mxu0 %v2948
        %v4353 = vpop.f32.mrb[0].mxu0
        %v4354 = vadd.f32 %v4193, %v4353
        %v4355 = vpop.f32.mrb[0].mxu0
        %v4356 = vpop.f32.mrb[0].mxu0
        %v4357 = vadd.f32 %v4196, %v4356
        %v4358 = vpop.f32.mrb[0].mxu0
        %4359 = vmatprep.mubr.bf16.mxu0 0
        %4360 = vmatmul.mubr.bf16.gmra.mrb[0].mxu0 %v2951
        %v4361 = vpop.f32.mrb[0].mxu0
        %v4362 = vadd.f32 %v4201, %v4361
        %v4363 = vpop.f32.mrb[0].mxu0
        %v4364 = vpop.f32.mrb[0].mxu0
        %v4365 = vadd.f32 %v4204, %v4364
        %v4366 = vpop.f32.mrb[0].mxu0
        %4367 = vmatprep.mubr.bf16.mxu0 0
        %4368 = vmatmul.mubr.bf16.gmra.mrb[0].mxu0 %v2954
        %v4369 = vpop.f32.mrb[0].mxu0
        %v4370 = vadd.f32 %v4209, %v4369
        %v4371 = vpop.f32.mrb[0].mxu0
        %v4372 = vpop.f32.mrb[0].mxu0
        %v4373 = vadd.f32 %v4212, %v4372
        %v4374 = vpop.f32.mrb[0].mxu0
        %4375 = vmatprep.mubr.bf16.mxu0 0
        %4376 = vmatmul.mubr.bf16.gmra.mrb[0].mxu0 %v2957
        %v4377 = vpop.f32.mrb[0].mxu0
        %v4378 = vadd.f32 %v4217, %v4377
        %v4379 = vpop.f32.mrb[0].mxu0
        %v4380 = vpop.f32.mrb[0].mxu0
        %v4381 = vadd.f32 %v4220, %v4380
        %v4382 = vpop.f32.mrb[0].mxu0
        %4383 = vmatprep.mubr.bf16.mxu0 0
        %4384 = vmatmul.mubr.bf16.gmra.mrb[0].mxu0 %v2991
        %v4385 = vpop.f32.mrb[0].mxu0
        %v4386 = vadd.f32 %v4225, %v4385
        %v4387 = vpop.f32.mrb[0].mxu0
        %v4388 = vpop.f32.mrb[0].mxu0
        %v4389 = vadd.f32 %v4228, %v4388
        %v4390 = vpop.f32.mrb[0].mxu0
        %4391 = vmatprep.mubr.bf16.mxu0 0
        %4392 = vmatmul.mubr.bf16.gmra.mrb[0].mxu0 %v3010
        %v4393 = vpop.f32.mrb[0].mxu0
        %v4394 = vadd.f32 %v4233, %v4393
        %v4395 = vpop.f32.mrb[0].mxu0
        %v4396 = vpop.f32.mrb[0].mxu0
        %v4397 = vadd.f32 %v4236, %v4396
        %v4398 = vpop.f32.mrb[0].mxu0
        %4399 = vdwg.mxu0
        %v4400 = vunpack.c.l.bf16 %v323
        %v4401 = vunpack.c.l.bf16 %v324
        %v4402 = vunpack.c.l.bf16 %v325
        %v4403 = vunpack.c.l.bf16 %v326
        %v4404 = vunpack.c.l.bf16 %v327
        %v4405 = vunpack.c.l.bf16 %v328
        %v4406 = vunpack.c.l.bf16 %v329
        %v4407 = vunpack.c.l.bf16 %v330
        %v4408 = vunpack.c.l.bf16 %v331
        %v4409 = vunpack.c.l.bf16 %v332
        %v4410 = vunpack.c.l.bf16 %v333
        %v4411 = vunpack.c.l.bf16 %v334
        %v4412 = vunpack.c.l.bf16 %v335
        %v4413 = vunpack.c.l.bf16 %v336
        %v4414 = vunpack.c.l.bf16 %v337
        %v4415 = vunpack.c.l.bf16 %v338
        %v4416 = vunpack.c.l.bf16 %v339
        %v4417 = vunpack.c.l.bf16 %v340
        %v4418 = vunpack.c.l.bf16 %v341
        %v4419 = vunpack.c.l.bf16 %v342
        %v4420 = vunpack.c.l.bf16 %v343
        %v4421 = vunpack.c.l.bf16 %v344
        %v4422 = vunpack.c.l.bf16 %v345
        %v4423 = vunpack.c.l.bf16 %v346
        %v4424 = vunpack.c.l.bf16 %v347
        %v4425 = vunpack.c.l.bf16 %v348
        %v4426 = vunpack.c.l.bf16 %v349
        %v4427 = vunpack.c.l.bf16 %v350
        %v4428 = vunpack.c.l.bf16 %v351
        %v4429 = vunpack.c.l.bf16 %v352
        %v4430 = vunpack.c.l.bf16 %v353
        %v4431 = vunpack.c.l.bf16 %v354
        %v4432 = vunpack.c.l.bf16 %v355
        %v4433 = vunpack.c.l.bf16 %v356
        %v4434 = vunpack.c.l.bf16 %v357
        %v4435 = vunpack.c.l.bf16 %v358
        %v4436 = vunpack.c.l.bf16 %v359
        %v4437 = vunpack.c.l.bf16 %v360
        %v4438 = vunpack.c.l.bf16 %v361
        %v4439 = vunpack.c.l.bf16 %v362
        %v4440 = vunpack.c.l.bf16 %v363
        %v4441 = vunpack.c.l.bf16 %v364
        %v4442 = vunpack.c.l.bf16 %v365
        %v4443 = vunpack.c.l.bf16 %v366
        %v4444 = vunpack.c.l.bf16 %v367
        %v4445 = vunpack.c.l.bf16 %v368
        %v4446 = vunpack.c.l.bf16 %v369
        %v4447 = vunpack.c.l.bf16 %v370
        %vm4496 = vcmask 1046528
        %v4497 = vrot.slane %v4400, 1
        %v4498 = vrot.slane %v4401, 1
        %v4499 = vsel %vm4496, %v4497, %v4498
        %v4500 = vrot.slane %v4402, 1
        %v4501 = vsel %vm4496, %v4498, %v4500
        %v4502 = vrot.slane %v4403, 1
        %v4503 = vrot.slane %v4404, 1
        %v4504 = vsel %vm4496, %v4502, %v4503
        %v4505 = vrot.slane %v4405, 1
        %v4506 = vsel %vm4496, %v4503, %v4505
        %v4507 = vrot.slane %v4406, 1
        %v4508 = vrot.slane %v4407, 1
        %v4509 = vsel %vm4496, %v4507, %v4508
        %v4510 = vrot.slane %v4408, 1
        %v4511 = vsel %vm4496, %v4508, %v4510
        %v4512 = vrot.slane %v4409, 1
        %v4513 = vrot.slane %v4410, 1
        %v4514 = vsel %vm4496, %v4512, %v4513
        %v4515 = vrot.slane %v4411, 1
        %v4516 = vsel %vm4496, %v4513, %v4515
        %v4517 = vrot.slane %v4412, 1
        %v4518 = vrot.slane %v4413, 1
        %v4519 = vsel %vm4496, %v4517, %v4518
        %v4520 = vrot.slane %v4414, 1
        %v4521 = vsel %vm4496, %v4518, %v4520
        %v4522 = vrot.slane %v4415, 1
        %v4523 = vrot.slane %v4416, 1
        %v4524 = vsel %vm4496, %v4522, %v4523
        %v4525 = vrot.slane %v4417, 1
        %v4526 = vsel %vm4496, %v4523, %v4525
        %v4527 = vrot.slane %v4418, 1
        %v4528 = vrot.slane %v4419, 1
        %v4529 = vsel %vm4496, %v4527, %v4528
        %v4530 = vrot.slane %v4420, 1
        %v4531 = vsel %vm4496, %v4528, %v4530
        %v4532 = vrot.slane %v4421, 1
        %v4533 = vrot.slane %v4422, 1
        %v4534 = vsel %vm4496, %v4532, %v4533
        %v4535 = vrot.slane %v4423, 1
        %v4536 = vsel %vm4496, %v4533, %v4535
        %v4537 = vrot.slane %v4424, 1
        %v4538 = vrot.slane %v4425, 1
        %v4539 = vsel %vm4496, %v4537, %v4538
        %v4540 = vrot.slane %v4426, 1
        %v4541 = vsel %vm4496, %v4538, %v4540
        %v4542 = vrot.slane %v4427, 1
        %v4543 = vrot.slane %v4428, 1
        %v4544 = vsel %vm4496, %v4542, %v4543
        %v4545 = vrot.slane %v4429, 1
        %v4546 = vsel %vm4496, %v4543, %v4545
        %v4547 = vrot.slane %v4430, 1
        %v4548 = vrot.slane %v4431, 1
        %v4549 = vsel %vm4496, %v4547, %v4548
        %v4550 = vrot.slane %v4432, 1
        %v4551 = vsel %vm4496, %v4548, %v4550
        %v4552 = vrot.slane %v4433, 1
        %v4553 = vrot.slane %v4434, 1
        %v4554 = vsel %vm4496, %v4552, %v4553
        %v4555 = vrot.slane %v4435, 1
        %v4556 = vsel %vm4496, %v4553, %v4555
        %v4557 = vrot.slane %v4436, 1
        %v4558 = vrot.slane %v4437, 1
        %v4559 = vsel %vm4496, %v4557, %v4558
        %v4560 = vrot.slane %v4438, 1
        %v4561 = vsel %vm4496, %v4558, %v4560
        %v4562 = vrot.slane %v4439, 1
        %v4563 = vrot.slane %v4440, 1
        %v4564 = vsel %vm4496, %v4562, %v4563
        %v4565 = vrot.slane %v4441, 1
        %v4566 = vsel %vm4496, %v4563, %v4565
        %v4567 = vrot.slane %v4442, 1
        %v4568 = vrot.slane %v4443, 1
        %v4569 = vsel %vm4496, %v4567, %v4568
        %v4570 = vrot.slane %v4444, 1
        %v4571 = vsel %vm4496, %v4568, %v4570
        %v4572 = vrot.slane %v4445, 1
        %v4573 = vrot.slane %v4446, 1
        %v4574 = vsel %vm4496, %v4572, %v4573
        %v4575 = vrot.slane %v4447, 1
        %v4576 = vsel %vm4496, %v4573, %v4575
        %v4609 = vadd.f32 %v4274, %v4499
        %v4610 = vadd.f32 %v4277, %v4501
        %v4611 = vadd.f32 %v4282, %v4504
        %v4612 = vadd.f32 %v4285, %v4506
        %v4613 = vadd.f32 %v4290, %v4509
        %v4614 = vadd.f32 %v4293, %v4511
        %v4615 = vadd.f32 %v4298, %v4514
        %v4616 = vadd.f32 %v4301, %v4516
        %v4617 = vadd.f32 %v4306, %v4519
        %v4618 = vadd.f32 %v4309, %v4521
        %v4619 = vadd.f32 %v4314, %v4524
        %v4620 = vadd.f32 %v4317, %v4526
        %v4621 = vadd.f32 %v4322, %v4529
        %v4622 = vadd.f32 %v4325, %v4531
        %v4623 = vadd.f32 %v4330, %v4534
        %v4624 = vadd.f32 %v4333, %v4536
        %v4625 = vadd.f32 %v4338, %v4539
        %v4626 = vadd.f32 %v4341, %v4541
        %v4627 = vadd.f32 %v4346, %v4544
        %v4628 = vadd.f32 %v4349, %v4546
        %v4629 = vadd.f32 %v4354, %v4549
        %v4630 = vadd.f32 %v4357, %v4551
        %v4631 = vadd.f32 %v4362, %v4554
        %v4632 = vadd.f32 %v4365, %v4556
        %v4633 = vadd.f32 %v4370, %v4559
        %v4634 = vadd.f32 %v4373, %v4561
        %v4635 = vadd.f32 %v4378, %v4564
        %v4636 = vadd.f32 %v4381, %v4566
        %v4637 = vadd.f32 %v4386, %v4569
        %v4638 = vadd.f32 %v4389, %v4571
        %v4639 = vadd.f32 %v4394, %v4574
        %v4640 = vadd.f32 %v4397, %v4576
        %v4641 = vmax.f32 %v4609, 0.0
        %v4642 = vmax.f32 %v4610, 0.0
        %v4643 = vmax.f32 %v4611, 0.0
        %v4644 = vmax.f32 %v4612, 0.0
        %v4645 = vmax.f32 %v4613, 0.0
        %v4646 = vmax.f32 %v4614, 0.0
        %v4647 = vmax.f32 %v4615, 0.0
        %v4648 = vmax.f32 %v4616, 0.0
        %v4649 = vmax.f32 %v4617, 0.0
        %v4650 = vmax.f32 %v4618, 0.0
        %v4651 = vmax.f32 %v4619, 0.0
        %v4652 = vmax.f32 %v4620, 0.0
        %v4653 = vmax.f32 %v4621, 0.0
        %v4654 = vmax.f32 %v4622, 0.0
        %v4655 = vmax.f32 %v4623, 0.0
        %v4656 = vmax.f32 %v4624, 0.0
        %v4657 = vmax.f32 %v4625, 0.0
        %v4658 = vmax.f32 %v4626, 0.0
        %v4659 = vmax.f32 %v4627, 0.0
        %v4660 = vmax.f32 %v4628, 0.0
        %v4661 = vmax.f32 %v4629, 0.0
        %v4662 = vmax.f32 %v4630, 0.0
        %v4663 = vmax.f32 %v4631, 0.0
        %v4664 = vmax.f32 %v4632, 0.0
        %v4665 = vmax.f32 %v4633, 0.0
        %v4666 = vmax.f32 %v4634, 0.0
        %v4667 = vmax.f32 %v4635, 0.0
        %v4668 = vmax.f32 %v4636, 0.0
        %v4669 = vmax.f32 %v4637, 0.0
        %v4670 = vmax.f32 %v4638, 0.0
        %v4671 = vmax.f32 %v4639, 0.0
        %v4672 = vmax.f32 %v4640, 0.0
        %4673 = vst [vmem:[%s310] sm:$0xff] %v4641
        %4674 = vst [vmem:[%s310 + $0x8] sm:$0xff] %v4642
        %4675 = vst [vmem:[%s310 + $0x10] sm:$0xff] %v4643
        %4676 = vst [vmem:[%s310 + $0x18] sm:$0xff] %v4644
        %4677 = vst [vmem:[%s310 + $0x20] sm:$0xff] %v4645
        %4678 = vst [vmem:[%s310 + $0x28] sm:$0xff] %v4646
        %4679 = vst [vmem:[%s310 + $0x30] sm:$0xff] %v4647
        %4680 = vst [vmem:[%s310 + $0x38] sm:$0xff] %v4648
        %4681 = vst [vmem:[%s310 + $0x40] sm:$0xff] %v4649
        %4682 = vst [vmem:[%s310 + $0x48] sm:$0xff] %v4650
        %4683 = vst [vmem:[%s310 + $0x50] sm:$0xff] %v4651
        %4684 = vst [vmem:[%s310 + $0x58] sm:$0xff] %v4652
        %4685 = vst [vmem:[%s310 + $0x60] sm:$0xff] %v4653
        %4686 = vst [vmem:[%s310 + $0x68] sm:$0xff] %v4654
        %4687 = vst [vmem:[%s310 + $0x70] sm:$0xff] %v4655
        %4688 = vst [vmem:[%s310 + $0x78] sm:$0xff] %v4656
        %4689 = vst [vmem:[%s310 + $0x80] sm:$0xff] %v4657
        %4690 = vst [vmem:[%s310 + $0x88] sm:$0xff] %v4658
        %4691 = vst [vmem:[%s310 + $0x90] sm:$0xff] %v4659
        %4692 = vst [vmem:[%s310 + $0x98] sm:$0xff] %v4660
        %4693 = vst [vmem:[%s310 + $0xa0] sm:$0xff] %v4661
        %4694 = vst [vmem:[%s310 + $0xa8] sm:$0xff] %v4662
        %4695 = vst [vmem:[%s310 + $0xb0] sm:$0xff] %v4663
        %4696 = vst [vmem:[%s310 + $0xb8] sm:$0xff] %v4664
        %4697 = vst [vmem:[%s310 + $0xc0] sm:$0xff] %v4665
        %4698 = vst [vmem:[%s310 + $0xc8] sm:$0xff] %v4666
        %4699 = vst [vmem:[%s310 + $0xd0] sm:$0xff] %v4667
        %4700 = vst [vmem:[%s310 + $0xd8] sm:$0xff] %v4668
        %4701 = vst [vmem:[%s310 + $0xe0] sm:$0xff] %v4669
        %4702 = vst [vmem:[%s310 + $0xe8] sm:$0xff] %v4670
        %4703 = vst [vmem:[%s310 + $0xf0] sm:$0xff] %v4671
        %4704 = vst [vmem:[%s310 + $0xf8] sm:$0xff] %v4672
        %s4705 = sand.u32 %s156, 1
        %s4706 = scalar_lea.sflag [#allocation4], %s4705
        %s4707 = sand.u32 %s156, 1
        %s4708 = smul.addr %s4707, 256
        %s4709 = scalar_lea.vmem [#allocation11], %s4708
        // Predicated region
        $region61: #{basic_block_forward.1} parent=39 // pred_check
          %p4710 = pneg %p166
        $region62: #{basic_block_forward.1} parent=39 // pred_check_branch
          %4712 = sbr.rel (%p4710) target = $region64
        $region63: #{basic_block_forward.1} parent=39 // pred_region
          %s4713 = smul.u32 16, %s29
          %s4715 = ssub.s32 4096, 4096
          %4716 = vsyncadd %s4706, %s4715
          %s4717 = smul.addr %s4713, 2
          %s4718 = smul.addr %s28, 32
          %s4719 = sadd.s32 %s4717, %s4718
          %s4720 = smul.addr %s4719, 128
          %s4721 = scalar_lea.hbm %s5, %s4720
          %s4722 = sshll.u32 %s4709, 4
          %s4723 = int_to_ptr.vmem [resolvable:$true] %s4722
          %4728 = dma.vmem_to_hbm [thread:$0]  %s4723, 4096, %s4721, %s4706, 128, 128, 8
        $region64: #{basic_block_forward.1} parent=39 // pred_fallthru
          _
      $region40: #{basic_block_forward.1} parent=5 // pred_fallthru
        _
      %p4729 = scmp.le.s32.totalorder 2, %s19
      // Predicated region
      $region65: #{basic_block_forward.1} parent=5 // pred_check
        %p4730 = pneg %p4729
      $region66: #{basic_block_forward.1} parent=5 // pred_check_branch
        %4732 = sbr.rel (%p4730) target = $region68
      $region67: #{basic_block_forward.1} parent=5 // pred_region
        %s4733 = ssub.s32 %s19, 2
        // Predicated region
        $region69: #{basic_block_forward.1} parent=67 // pred_check
          %p4734 = pneg %p172
        $region70: #{basic_block_forward.1} parent=67 // pred_check_branch
          %4736 = sbr.rel (%p4734) target = $region72
        $region71: #{basic_block_forward.1} parent=67 // pred_region
          %s4737 = sand.u32 %s157, 1
          %s4738 = scalar_lea.sflag [#allocation4], %s4737
          %s4739 = sand.u32 %s157, 1
          %s4740 = smul.addr %s4739, 256
          %s4741 = scalar_lea.vmem [#allocation11], %s4740
          %4742 = dma.done %s4738, 4096
        $region72: #{basic_block_forward.1} parent=67 // pred_fallthru
          _
      $region68: #{basic_block_forward.1} parent=5 // pred_fallthru
        _
    $region6: #{basic_block_forward.1} parent=1 // loop_footer
      %s23 = sadd.s32 1, %s19
    $region7: #{basic_block_forward.1} parent=1 // loop_footer_branch
      %18 = sbr.rel target = $region3
    $region8: #{basic_block_forward.1} parent=1 // loop_exit
      _
    %4743 = vsyncpa [#allocation3], 1
    %s4744 = scalar_lea.sflag [#allocation3], 1
    %4745 = vsyncpa %s4744, 1
    %4746 = vsyncpa [#allocation6], 1
    %4747 = vsyncpa [#allocation9], 1
    %4748 = vsyncpa [#allocation4], 1
    %s4749 = scalar_lea.sflag [#allocation4], 1
    %4750 = vsyncpa %s4749, 1

</llo_original>
